<compile_context>
chip_gen: v7x
topology: tpu7x:2x2x1
jax: 0.10.0
libtpu: 0.0.40
codegen_flags: <defaults>
</compile_context>

<pallas_src>
import jax
import jax.numpy as jnp
from jax.experimental import pallas as pl
from jax.experimental.pallas import tpu as pltpu


def decoder_kernel(z_ref, w1_ref, b1_ref, w2_ref, b2_ref, out_ref):
    # hidden = relu(z @ W1 + b1): bf16 MXU inputs, f32 accumulation.
    z = z_ref[...].astype(jnp.bfloat16)            # cast on VPU, avoids wrapper op
    h = jnp.dot(z, w1_ref[...], preferred_element_type=jnp.float32)
    h = jnp.maximum(h + b1_ref[...], 0.0)          # bias/ReLU in f32 on the VPU

    # mean = sigmoid(hidden @ W2 + b2): cast hidden back to bf16 for the MXU.
    logits = jnp.dot(h.astype(jnp.bfloat16), w2_ref[...],
                     preferred_element_type=jnp.float32)
    logits = logits + b2_ref[...]

    # Exact sigmoid via a single EUP tanh: sigmoid(x) = 0.5*(tanh(x/2)+1).
    out_ref[...] = (0.5 * (jnp.tanh(0.5 * logits) + 1.0)).astype(out_ref.dtype)


def _round_up(x, m):
    return ((x + m - 1) // m) * m


def prepare_decoder_params(w1, b1, w2, b2):
    """One-time weight prep: lane-align hidden dim, cast MXU operands to bf16.

    w1: [z_dim, H]  b1: [1, H]  w2: [H, 784]  b2: [1, 784]  (W = nn.Linear.weight.T)
    Padded hidden columns are exact: relu(0)=0 rows multiply zero rows of W2.
    """
    z_dim, hidden = w1.shape
    out_dim = w2.shape[1]
    h_pad = _round_up(hidden, 128)                  # 500 -> 512

    w1_p = jnp.zeros((z_dim, h_pad), jnp.bfloat16).at[:, :hidden].set(
        w1.astype(jnp.bfloat16))
    b1_p = jnp.zeros((1, h_pad), jnp.float32).at[:, :hidden].set(
        b1.astype(jnp.float32).reshape(1, hidden))
    w2_p = jnp.zeros((h_pad, out_dim), jnp.bfloat16).at[:hidden, :].set(
        w2.astype(jnp.bfloat16))
    b2_p = b2.astype(jnp.float32).reshape(1, out_dim)
    return w1_p, b1_p, w2_p, b2_p


def decoder_forward(z, params, *, tile_b=128, out_dtype=jnp.float32):
    """z: [B, z_dim] f32; params from prepare_decoder_params().

    Returns [B, 784] == sigmoid(relu(z @ w1 + b1) @ w2 + b2).
    tile_b=128 keeps >=2 grid steps at batch>=256 (v7x megacore); raise to
    256-512 on single-TC v5e/v6e to amortize per-step overhead.
    """
    w1_p, b1_p, w2_p, b2_p = params
    batch, z_dim = z.shape
    h_pad = w1_p.shape[1]
    out_dim = w2_p.shape[1]

    # Batch tiling: tile divides the 8-aligned padded batch.
    b_al = _round_up(batch, 8)
    tb = min(tile_b, b_al)
    b_pad = _round_up(b_al, tb)

    z_in = z.astype(jnp.float32)
    if b_pad != batch:                              # only pad ragged batches
        z_in = jnp.zeros((b_pad, z_dim), jnp.float32).at[:batch].set(z_in)

    out = pl.pallas_call(
        decoder_kernel,
        out_shape=jax.ShapeDtypeStruct((b_pad, out_dim), out_dtype),
        grid_spec=pltpu.PrefetchScalarGridSpec(
            num_scalar_prefetch=0,
            grid=(b_pad // tb,),
            in_specs=[
                pl.BlockSpec((tb, z_dim), lambda i: (i, 0)),     # z: tiled over batch
                pl.BlockSpec((z_dim, h_pad), lambda i: (0, 0)),  # W1: VMEM-resident
                pl.BlockSpec((1, h_pad), lambda i: (0, 0)),      # b1: VMEM-resident
                pl.BlockSpec((h_pad, out_dim), lambda i: (0, 0)),  # W2: VMEM-resident
                pl.BlockSpec((1, out_dim), lambda i: (0, 0)),      # b2: VMEM-resident
            ],
            out_specs=pl.BlockSpec((tb, out_dim), lambda i: (i, 0)),
        ),
        compiler_params=pltpu.CompilerParams(
            dimension_semantics=("parallel",),      # batch axis -> megacore on v7x
        ),
    )(z_in, w1_p, b1_p, w2_p, b2_p)

    if b_pad != batch:                              # only slice ragged batches
        out = out[:batch]
    return out


def init_decoder_params(key, z_dim=20, hidden_dim=500, out_dim=784):
    """Deterministic init matching nn.Linear's default U(-1/sqrt(fan_in), +1/sqrt(fan_in))."""
    k1, k2, k3, k4 = jax.random.split(key, 4)
    bound1 = 1.0 / jnp.sqrt(z_dim)
    bound2 = 1.0 / jnp.sqrt(hidden_dim)
    w1 = jax.random.uniform(k1, (z_dim, hidden_dim), jnp.float32, -bound1, bound1)
    b1 = jax.random.uniform(k2, (1, hidden_dim), jnp.float32, -bound1, bound1)
    w2 = jax.random.uniform(k3, (hidden_dim, out_dim), jnp.float32, -bound2, bound2)
    b2 = jax.random.uniform(k4, (1, out_dim), jnp.float32, -bound2, bound2)
    return w1, b1, w2, b2


def _ref_f32(z, w1, b1, w2, b2):
    return jax.nn.sigmoid(jnp.maximum(z @ w1 + b1, 0.0) @ w2 + b2)


def _ref_bf16(z, w1, b1, w2, b2):
    # Same bf16-input / f32-accumulate numerics as the kernel (exact sigmoid).
    h = jnp.dot(z.astype(jnp.bfloat16), w1.astype(jnp.bfloat16),
                preferred_element_type=jnp.float32) + b1
    h = jnp.maximum(h, 0.0)
    logits = jnp.dot(h.astype(jnp.bfloat16), w2.astype(jnp.bfloat16),
                     preferred_element_type=jnp.float32) + b2
    return jax.nn.sigmoid(logits)


if __name__ == "__main__":
    key = jax.random.PRNGKey(0)
    k_params, k_z = jax.random.split(key)

    z_dim, hidden_dim, out_dim = 20, 500, 784
    w1, b1, w2, b2 = init_decoder_params(k_params, z_dim, hidden_dim, out_dim)

    # Weight prep happens ONCE (pad + bf16 cast), reused across every forward.
    params = jax.tree_util.tree_map(jax.block_until_ready,
                                    prepare_decoder_params(w1, b1, w2, b2))

    fwd = jax.jit(decoder_forward, static_argnames=("tile_b", "out_dtype"))

    # Batched case: 2-step batch grid (tile_b=128, weights VMEM-resident).
    batch = 256
    z = jax.random.normal(k_z, (batch, z_dim), jnp.float32)
    mean = jax.block_until_ready(fwd(z, params))
    assert mean.shape == (batch, out_dim)
    assert mean.dtype == jnp.float32
    assert jnp.allclose(mean, _ref_bf16(z, w1, b1, w2, b2), atol=5e-3), "bf16 ref mismatch"
    assert jnp.allclose(mean, _ref_f32(z, w1, b1, w2, b2), atol=3e-2), "f32 ref mismatch"
    assert bool(jnp.all((mean >= 0.0) & (mean <= 1.0)))

    # Small-batch case: single grid step, tile shrinks to the (8-aligned) batch.
    z_small = jax.random.normal(jax.random.PRNGKey(1), (8, z_dim), jnp.float32)
    mean_small = jax.block_until_ready(fwd(z_small, params))
    assert mean_small.shape == (8, out_dim)
    assert jnp.allclose(mean_small, _ref_bf16(z_small, w1, b1, w2, b2), atol=5e-3)
    assert jnp.allclose(mean_small, _ref_f32(z_small, w1, b1, w2, b2), atol=3e-2)

    # Ragged batch: exercises row padding + row slice path.
    z_rag = jax.random.normal(jax.random.PRNGKey(2), (13, z_dim), jnp.float32)
    mean_rag = jax.block_until_ready(fwd(z_rag, params))
    assert mean_rag.shape == (13, out_dim)
    assert jnp.allclose(mean_rag, _ref_bf16(z_rag, w1, b1, w2, b2), atol=5e-3)

    print("KERNEL_OK")
</pallas_src>

<mosaic_0001>
module attributes {stable_mosaic.version = 11 : i64} {
  func.func @decoder_kernel(%arg0: i32, %arg1: memref<128x20xf32, #tpu.memory_space<vmem>>, %arg2: memref<20x512xbf16, #tpu.memory_space<vmem>>, %arg3: memref<1x512xf32, #tpu.memory_space<vmem>>, %arg4: memref<512x784xbf16, #tpu.memory_space<vmem>>, %arg5: memref<1x784xf32, #tpu.memory_space<vmem>>, %arg6: memref<128x784xf32, #tpu.memory_space<vmem>>) attributes {dimension_semantics = [#tpu.dimension_semantics<parallel>], iteration_bounds = array<i64: 2>, scalar_prefetch = 0 : i64, scratch_operands = 0 : i64, tpu.core_type = #tpu.core_type<tc>, window_params = [{transform_indices = @transform_0, window_bounds = array<i64: 128, 20>}, {pipeline_mode = #tpu.pipeline_mode<synchronous>, transform_indices = @transform_1, window_bounds = array<i64: 20, 512>}, {pipeline_mode = #tpu.pipeline_mode<synchronous>, transform_indices = @transform_2, window_bounds = array<i64: 1, 512>}, {pipeline_mode = #tpu.pipeline_mode<synchronous>, transform_indices = @transform_3, window_bounds = array<i64: 512, 784>}, {pipeline_mode = #tpu.pipeline_mode<synchronous>, transform_indices = @transform_4, window_bounds = array<i64: 1, 784>}, {transform_indices = @transform_5, window_bounds = array<i64: 128, 784>}]} {
    %c0 = arith.constant 0 : index
    %c0_0 = arith.constant 0 : index
    %0 = vector.load %arg1[%c0, %c0_0] : memref<128x20xf32, #tpu.memory_space<vmem>>, vector<128x20xf32>
    %1 = arith.truncf %0 : vector<128x20xf32> to vector<128x20xbf16>
    %c0_1 = arith.constant 0 : index
    %c0_2 = arith.constant 0 : index
    %2 = vector.load %arg2[%c0_1, %c0_2] : memref<20x512xbf16, #tpu.memory_space<vmem>>, vector<20x512xbf16>
    %cst = arith.constant dense<0.000000e+00> : vector<128x512xf32>
    %3 = tpu.matmul %1, %2, %cst {dimension_numbers = #tpu.dot_dimension_numbers<[1], [0], [0], [1], [0, 0, 1, 1], [], []>} : vector<128x20xbf16>, vector<20x512xbf16>, vector<128x512xf32> -> vector<128x512xf32>
    %c0_3 = arith.constant 0 : index
    %c0_4 = arith.constant 0 : index
    %4 = vector.load %arg3[%c0_3, %c0_4] : memref<1x512xf32, #tpu.memory_space<vmem>>, vector<1x512xf32>
    %5 = vector.broadcast %4 : vector<1x512xf32> to vector<128x512xf32>
    %6 = arith.addf %3, %5 : vector<128x512xf32>
    %cst_5 = arith.constant 0.000000e+00 : f32
    %7 = vector.broadcast %cst_5 : f32 to vector<128x512xf32>
    %8 = arith.maximumf %6, %7 : vector<128x512xf32>
    %9 = arith.truncf %8 : vector<128x512xf32> to vector<128x512xbf16>
    %c0_6 = arith.constant 0 : index
    %c0_7 = arith.constant 0 : index
    %10 = vector.load %arg4[%c0_6, %c0_7] : memref<512x784xbf16, #tpu.memory_space<vmem>>, vector<512x784xbf16>
    %cst_8 = arith.constant dense<0.000000e+00> : vector<128x784xf32>
    %11 = tpu.matmul %9, %10, %cst_8 {dimension_numbers = #tpu.dot_dimension_numbers<[1], [0], [0], [1], [0, 0, 1, 1], [], []>} : vector<128x512xbf16>, vector<512x784xbf16>, vector<128x784xf32> -> vector<128x784xf32>
    %c0_9 = arith.constant 0 : index
    %c0_10 = arith.constant 0 : index
    %12 = vector.load %arg5[%c0_9, %c0_10] : memref<1x784xf32, #tpu.memory_space<vmem>>, vector<1x784xf32>
    %13 = vector.broadcast %12 : vector<1x784xf32> to vector<128x784xf32>
    %14 = arith.addf %11, %13 : vector<128x784xf32>
    %cst_11 = arith.constant 5.000000e-01 : f32
    %15 = vector.broadcast %cst_11 : f32 to vector<128x784xf32>
    %16 = arith.mulf %15, %14 : vector<128x784xf32>
    %17 = math.tanh %16 : vector<128x784xf32>
    %cst_12 = arith.constant 1.000000e+00 : f32
    %18 = vector.broadcast %cst_12 : f32 to vector<128x784xf32>
    %19 = arith.addf %17, %18 : vector<128x784xf32>
    %cst_13 = arith.constant 5.000000e-01 : f32
    %20 = vector.broadcast %cst_13 : f32 to vector<128x784xf32>
    %21 = arith.mulf %20, %19 : vector<128x784xf32>
    %c0_14 = arith.constant 0 : index
    %c0_15 = arith.constant 0 : index
    %22 = vector.load %arg6[%c0_14, %c0_15] : memref<128x784xf32, #tpu.memory_space<vmem>>, vector<128x784xf32>
    tpu.vector_store %arg6[%c0_14, %c0_15], %21 {strides = array<i32>} : memref<128x784xf32, #tpu.memory_space<vmem>>, vector<128x784xf32>,
    return
  }
  func.func @transform_0(%arg0: i32) -> (i32, i32) {
    %c0_i32 = arith.constant 0 : i32
    %c0_i32_0 = arith.constant 0 : i32
    return %arg0, %c0_i32 : i32, i32
  }
  func.func @transform_1(%arg0: i32) -> (i32, i32) {
    %c0_i32 = arith.constant 0 : i32
    %c0_i32_0 = arith.constant 0 : i32
    %c0_i32_1 = arith.constant 0 : i32
    return %c0_i32, %c0_i32_0 : i32, i32
  }
  func.func @transform_2(%arg0: i32) -> (i32, i32) {
    %c0_i32 = arith.constant 0 : i32
    %c0_i32_0 = arith.constant 0 : i32
    %c0_i32_1 = arith.constant 0 : i32
    return %c0_i32, %c0_i32_0 : i32, i32
  }
  func.func @transform_3(%arg0: i32) -> (i32, i32) {
    %c0_i32 = arith.constant 0 : i32
    %c0_i32_0 = arith.constant 0 : i32
    %c0_i32_1 = arith.constant 0 : i32
    return %c0_i32, %c0_i32_0 : i32, i32
  }
  func.func @transform_4(%arg0: i32) -> (i32, i32) {
    %c0_i32 = arith.constant 0 : i32
    %c0_i32_0 = arith.constant 0 : i32
    %c0_i32_1 = arith.constant 0 : i32
    return %c0_i32, %c0_i32_0 : i32, i32
  }
  func.func @transform_5(%arg0: i32) -> (i32, i32) {
    %c0_i32 = arith.constant 0 : i32
    %c0_i32_0 = arith.constant 0 : i32
    return %arg0, %c0_i32 : i32, i32
  }
}

</mosaic_0001>

<llo_original>
// kernel: decoder_forward.1
$region0: #{decoder_forward.1}
  #allocation0 [shape = 'u32[]', space=smem, size = 0x4, offset = 0x4, fixed_abs, tag = 'smem constant byte address 0x4 - core index']
  #allocation1 [shape = 'u32[144,128]{1,0:T(1,128)}', space=vmem, size = 0x12000, scoped, tag = 'internal scratch']
  %s0 = inlined_call_operand.vmem [shape: f32[256,20], index: 0, kind: input, shape index: {}]
  %s1 = inlined_call_operand.vmem [shape: bf16[20,512], index: 1, kind: input, shape index: {}]
  %s2 = inlined_call_operand.vmem [shape: f32[1,512], index: 2, kind: input, shape index: {}]
  %s3 = inlined_call_operand.vmem [shape: bf16[512,784], index: 3, kind: input, shape index: {}]
  %s4 = inlined_call_operand.vmem [shape: f32[1,784], index: 4, kind: input, shape index: {}]
  %s5 = inlined_call_operand.vmem [shape: f32[256,784], index: 5, kind: output, shape index: {}]
  %s6 = sld [smem:[#allocation0]]
  $region53: #{decoder_forward.1} parent=0
    _
  %s8 = ssub.s32 1, %s6
  %s9 = scalar_select 0, %s8, %s6
  loop: start=0, step=1, limit=4
  $region2: #{decoder_forward.1} parent=0 // loop_pre_header
    _
  $region3: #{decoder_forward.1} parent=0 // loop_header
    %s11 = sphi 0, %s15
    %p12 = scmp.ge.s32.totalorder %s11, 4
    %s21 = sphi 0, %s23
    %s24 = sphi 0, %s21
    %s25 = sphi 0, %s24
    %s41 = sphi 0, %s25
    %s45 = sphi 0, %s45
    %s47 = sphi 0, %s45
    %s48 = sphi 0, %s47
    %s62 = sphi 0, %s48
    %s66 = sphi 0, %s66
    %s68 = sphi 0, %s66
    %s69 = sphi 0, %s68
    %s83 = sphi 0, %s69
    %s87 = sphi 0, %s87
    %s89 = sphi 0, %s87
    %s90 = sphi 0, %s89
    %s104 = sphi 0, %s90
    %s108 = sphi 0, %s108
    %s110 = sphi 0, %s108
    %s111 = sphi 0, %s110
    %s125 = sphi 0, %s111
    %s131 = sphi 0, %s133
    %s134 = sphi 0, %s131
    %s135 = sphi 0, %s134
    %s151 = sphi 0, %s135
  $region4: #{decoder_forward.1} parent=0 // loop_header_branch
    %14 = sbr.rel (%p12) target = $region8
  $region5: #{decoder_forward.1} parent=0 // loop_body
    %s16 = ssub.s32 %s11, 1
    %s17 = ssub.s32 %s11, 2
    %s18 = sadd.s32 %s11, 1
    %s19 = ssub.s32 %s11, %s18
    %p20 = scmp.eq.s32.totalorder %s19, 0
    %s22 = sadd.s32 %s21, 1
    %s23 = scalar_select %p20, %s21, %s22
    %p26 = pneg %p20
    %p27 = scmp.eq.s32.totalorder %s11, 1
    %p28 = por %p26, %p27
    %p29 = scmp.ne.s32.totalorder %s21, %s24
    %p30 = scmp.eq.s32.totalorder %s11, 0
    %p31 = por %p29, %p30
    %p32 = scmp.ne.s32.totalorder %s21, %s24
    %p33 = scmp.eq.s32.totalorder %s16, 1
    %p34 = por %p32, %p33
    %p35 = scmp.ne.s32.totalorder %s24, %s25
    %p36 = scmp.eq.s32.totalorder %s16, 0
    %p37 = por %p35, %p36
    %p38 = scmp.ne.s32.totalorder %s24, %s25
    %p39 = scmp.eq.s32.totalorder %s17, 1
    %p40 = por %p38, %p39
    %p42 = scmp.ne.s32.totalorder %s25, %s41
    %p43 = scmp.eq.s32.totalorder %s17, 0
    %p44 = por %p42, %p43
    %s46 = sadd.s32 %s45, 1
    %p49 = scmp.eq.s32.totalorder %s11, 1
    %p50 = scmp.ne.s32.totalorder %s45, %s47
    %p51 = scmp.eq.s32.totalorder %s11, 0
    %p52 = por %p50, %p51
    %p53 = scmp.ne.s32.totalorder %s45, %s47
    %p54 = scmp.eq.s32.totalorder %s16, 1
    %p55 = por %p53, %p54
    %p56 = scmp.ne.s32.totalorder %s47, %s48
    %p57 = scmp.eq.s32.totalorder %s16, 0
    %p58 = por %p56, %p57
    %p59 = scmp.ne.s32.totalorder %s47, %s48
    %p60 = scmp.eq.s32.totalorder %s17, 1
    %p61 = por %p59, %p60
    %p63 = scmp.ne.s32.totalorder %s48, %s62
    %p64 = scmp.eq.s32.totalorder %s17, 0
    %p65 = por %p63, %p64
    %s67 = sadd.s32 %s66, 1
    %p70 = scmp.eq.s32.totalorder %s11, 1
    %p71 = scmp.ne.s32.totalorder %s66, %s68
    %p72 = scmp.eq.s32.totalorder %s11, 0
    %p73 = por %p71, %p72
    %p74 = scmp.ne.s32.totalorder %s66, %s68
    %p75 = scmp.eq.s32.totalorder %s16, 1
    %p76 = por %p74, %p75
    %p77 = scmp.ne.s32.totalorder %s68, %s69
    %p78 = scmp.eq.s32.totalorder %s16, 0
    %p79 = por %p77, %p78
    %p80 = scmp.ne.s32.totalorder %s68, %s69
    %p81 = scmp.eq.s32.totalorder %s17, 1
    %p82 = por %p80, %p81
    %p84 = scmp.ne.s32.totalorder %s69, %s83
    %p85 = scmp.eq.s32.totalorder %s17, 0
    %p86 = por %p84, %p85
    %s88 = sadd.s32 %s87, 1
    %p91 = scmp.eq.s32.totalorder %s11, 1
    %p92 = scmp.ne.s32.totalorder %s87, %s89
    %p93 = scmp.eq.s32.totalorder %s11, 0
    %p94 = por %p92, %p93
    %p95 = scmp.ne.s32.totalorder %s87, %s89
    %p96 = scmp.eq.s32.totalorder %s16, 1
    %p97 = por %p95, %p96
    %p98 = scmp.ne.s32.totalorder %s89, %s90
    %p99 = scmp.eq.s32.totalorder %s16, 0
    %p100 = por %p98, %p99
    %p101 = scmp.ne.s32.totalorder %s89, %s90
    %p102 = scmp.eq.s32.totalorder %s17, 1
    %p103 = por %p101, %p102
    %p105 = scmp.ne.s32.totalorder %s90, %s104
    %p106 = scmp.eq.s32.totalorder %s17, 0
    %p107 = por %p105, %p106
    %s109 = sadd.s32 %s108, 1
    %p112 = scmp.eq.s32.totalorder %s11, 1
    %p113 = scmp.ne.s32.totalorder %s108, %s110
    %p114 = scmp.eq.s32.totalorder %s11, 0
    %p115 = por %p113, %p114
    %p116 = scmp.ne.s32.totalorder %s108, %s110
    %p117 = scmp.eq.s32.totalorder %s16, 1
    %p118 = por %p116, %p117
    %p119 = scmp.ne.s32.totalorder %s110, %s111
    %p120 = scmp.eq.s32.totalorder %s16, 0
    %p121 = por %p119, %p120
    %p122 = scmp.ne.s32.totalorder %s110, %s111
    %p123 = scmp.eq.s32.totalorder %s17, 1
    %p124 = por %p122, %p123
    %p126 = scmp.ne.s32.totalorder %s111, %s125
    %p127 = scmp.eq.s32.totalorder %s17, 0
    %p128 = por %p126, %p127
    %s129 = ssub.s32 %s11, %s18
    %p130 = scmp.eq.s32.totalorder %s129, 0
    %s132 = sadd.s32 %s131, 1
    %s133 = scalar_select %p130, %s131, %s132
    %p136 = pneg %p130
    %p137 = scmp.eq.s32.totalorder %s11, 1
    %p138 = por %p136, %p137
    %p139 = scmp.ne.s32.totalorder %s131, %s134
    %p140 = scmp.eq.s32.totalorder %s11, 0
    %p141 = por %p139, %p140
    %p142 = scmp.ne.s32.totalorder %s131, %s134
    %p143 = scmp.eq.s32.totalorder %s16, 1
    %p144 = por %p142, %p143
    %p145 = scmp.ne.s32.totalorder %s134, %s135
    %p146 = scmp.eq.s32.totalorder %s16, 0
    %p147 = por %p145, %p146
    %p148 = scmp.ne.s32.totalorder %s134, %s135
    %p149 = scmp.eq.s32.totalorder %s17, 1
    %p150 = por %p148, %p149
    %p152 = scmp.ne.s32.totalorder %s135, %s151
    %p153 = scmp.eq.s32.totalorder %s17, 0
    %p154 = por %p152, %p153
    %p155 = scmp.le.s32.totalorder 1, %s11
    %p156 = scmp.lt.s32.totalorder %s11, 3
    %p157 = pnand %p155, %p156
    %p158 = pneg %p157
    // Predicated region
    $region9: #{decoder_forward.1} parent=5 // pred_check
      _
    $region10: #{decoder_forward.1} parent=5 // pred_check_branch
      %160 = sbr.rel (%p157) target = $region12
    $region11: #{decoder_forward.1} parent=5 // pred_region
      %s161 = ssub.s32 %s11, 1
      // Predicated region
      $region13: #{decoder_forward.1} parent=11 // pred_check
        %p162 = pneg %p58
      $region14: #{decoder_forward.1} parent=11 // pred_check_branch
        %164 = sbr.rel (%p162) target = $region16
      $region15: #{decoder_forward.1} parent=11 // pred_region
        _
      $region16: #{decoder_forward.1} parent=11 // pred_fallthru
        _
      // Predicated region
      $region17: #{decoder_forward.1} parent=11 // pred_check
        %p165 = pneg %p79
      $region18: #{decoder_forward.1} parent=11 // pred_check_branch
        %167 = sbr.rel (%p165) target = $region20
      $region19: #{decoder_forward.1} parent=11 // pred_region
        _
      $region20: #{decoder_forward.1} parent=11 // pred_fallthru
        _
      // Predicated region
      $region21: #{decoder_forward.1} parent=11 // pred_check
        %p168 = pneg %p100
      $region22: #{decoder_forward.1} parent=11 // pred_check_branch
        %170 = sbr.rel (%p168) target = $region24
      $region23: #{decoder_forward.1} parent=11 // pred_region
        _
      $region24: #{decoder_forward.1} parent=11 // pred_fallthru
        _
      // Predicated region
      $region25: #{decoder_forward.1} parent=11 // pred_check
        %p171 = pneg %p121
      $region26: #{decoder_forward.1} parent=11 // pred_check_branch
        %173 = sbr.rel (%p171) target = $region28
      $region27: #{decoder_forward.1} parent=11 // pred_region
        _
      $region28: #{decoder_forward.1} parent=11 // pred_fallthru
        _
    $region12: #{decoder_forward.1} parent=5 // pred_fallthru
      _
    %p174 = scmp.lt.s32.totalorder %s11, 2
    // Predicated region
    $region29: #{decoder_forward.1} parent=5 // pred_check
      %p175 = pneg %p174
    $region30: #{decoder_forward.1} parent=5 // pred_check_branch
      %177 = sbr.rel (%p175) target = $region32
    $region31: #{decoder_forward.1} parent=5 // pred_region
      // Predicated region
      $region33: #{decoder_forward.1} parent=31 // pred_check
        %p178 = pneg %p31
      $region34: #{decoder_forward.1} parent=31 // pred_check_branch
        %180 = sbr.rel (%p178) target = $region36
      $region35: #{decoder_forward.1} parent=31 // pred_region
        %s181 = smul.u32 16, %s11
        %p182 = scmp.lt.s32.totalorder %s181, 31
        %s183 = scalar_select %p182, %s181, 31
        %s184 = smul.addr %s183, 8
        %s185 = scalar_lea.vmem %s0, %s184
        %s186 = smul.u32 16, %s11
      $region36: #{decoder_forward.1} parent=31 // pred_fallthru
        _
    $region32: #{decoder_forward.1} parent=5 // pred_fallthru
      _
    %p187 = scmp.le.s32.totalorder 1, %s11
    %p188 = scmp.lt.s32.totalorder %s11, 3
    %p189 = pnand %p187, %p188
    %p190 = pneg %p189
    // Predicated region
    $region37: #{decoder_forward.1} parent=5 // pred_check
      _
    $region38: #{decoder_forward.1} parent=5 // pred_check_branch
      %192 = sbr.rel (%p189) target = $region40
    $region39: #{decoder_forward.1} parent=5 // pred_region
      %s193 = ssub.s32 %s11, 1
      %s194 = smul.u32 16, %s16
      %p195 = scmp.lt.s32.totalorder %s194, 31
      %s196 = scalar_select %p195, %s194, 31
      %s197 = smul.addr %s196, 8
      %s198 = scalar_lea.vmem %s0, %s197
      %p199 = pneg %p37
      %p200 = pneg %p34
      %p201 = pneg %p58
      %p202 = pneg %p55
      %p203 = pneg %p79
      %p204 = pneg %p76
      %p205 = pneg %p100
      %p206 = pneg %p97
      %p207 = pneg %p121
      %p208 = pneg %p118
      %p209 = pneg %p147
      %p210 = pneg %p144
      %s211 = smul.u32 16, %s16
      %p212 = scmp.lt.s32.totalorder %s211, 31
      %s213 = scalar_select %p212, %s211, 31
      %s214 = smul.addr %s213, 7
      %s215 = smul.addr %s214, 8
      %s216 = scalar_lea.vmem %s5, %s215
      %s217 = smul.u32 16, %s16
      %p218 = scmp.lt.s32.totalorder %s217, 31
      %s219 = scalar_select %p218, %s217, 31
      %s220 = smul.addr %s219, 8
      %s221 = scalar_lea.vmem %s0, %s220
      %s222 = smul.u32 16, %s16
      %s223 = smul.u32 16, %s16
      %p224 = scmp.lt.s32.totalorder %s223, 31
      %s225 = scalar_select %p224, %s223, 31
      %s226 = smul.addr %s225, 7
      %s227 = smul.addr %s226, 8
      %s228 = scalar_lea.vmem %s5, %s227
      %s229 = smul.u32 16, %s16
      %v231 = vld [vmem:[%s221] sm:$0xff]
      %v232 = vld [vmem:[%s221 + $0x8] sm:$0xff]
      %v233 = vld [vmem:[%s221 + $0x10] sm:$0xff]
      %v234 = vld [vmem:[%s221 + $0x18] sm:$0xff]
      %v235 = vld [vmem:[%s221 + $0x20] sm:$0xff]
      %v236 = vld [vmem:[%s221 + $0x28] sm:$0xff]
      %v237 = vld [vmem:[%s221 + $0x30] sm:$0xff]
      %v238 = vld [vmem:[%s221 + $0x38] sm:$0xff]
      %v239 = vld [vmem:[%s221 + $0x40] sm:$0xff]
      %v240 = vld [vmem:[%s221 + $0x48] sm:$0xff]
      %v241 = vld [vmem:[%s221 + $0x50] sm:$0xff]
      %v242 = vld [vmem:[%s221 + $0x58] sm:$0xff]
      %v243 = vld [vmem:[%s221 + $0x60] sm:$0xff]
      %v244 = vld [vmem:[%s221 + $0x68] sm:$0xff]
      %v245 = vld [vmem:[%s221 + $0x70] sm:$0xff]
      %v246 = vld [vmem:[%s221 + $0x78] sm:$0xff]
      %v247 = vpack.c.bf16 %v232, %v231
      %v248 = vpack.c.bf16 %v234, %v233
      %v249 = vpack.c.bf16 %v236, %v235
      %v250 = vpack.c.bf16 %v238, %v237
      %v251 = vpack.c.bf16 %v240, %v239
      %v252 = vpack.c.bf16 %v242, %v241
      %v253 = vpack.c.bf16 %v244, %v243
      %v254 = vpack.c.bf16 %v246, %v245
      %v255 = vld [vmem:[%s1] sm:$0xff]
      %v256 = vld [vmem:[%s1 + $0x8] sm:$0xff]
      %v257 = vld [vmem:[%s1 + $0x10] sm:$0xff]
      %v258 = vld [vmem:[%s1 + $0x18] sm:$0xff]
      %v259 = vld [vmem:[%s1 + $0x20] sm:$0x33]
      %v260 = vld [vmem:[%s1 + $0x28] sm:$0x33]
      %v261 = vld [vmem:[%s2] sm:$0xf]
      %v263 = vlaneseq
      %v264 = vshrl.u32 %v263, 7
      %v265 = vsub.s32 0, %v264
      %v266 = vrot.slane %v261, %v265
      %v267 = vlaneseq
      %v268 = vshrl.u32 %v267, 7
      %v269 = vsub.s32 1, %v268
      %v270 = vrot.slane %v261, %v269
      %v271 = vlaneseq
      %v272 = vshrl.u32 %v271, 7
      %v273 = vsub.s32 2, %v272
      %v274 = vrot.slane %v261, %v273
      %v275 = vlaneseq
      %v276 = vshrl.u32 %v275, 7
      %v277 = vsub.s32 3, %v276
      %v278 = vrot.slane %v261, %v277
      %v289 = vunpack.c.l.b16 %v255
      %v290 = vunpack.c.h.b16 %v255
      %v291 = vunpack.c.l.b16 %v256
      %v292 = vunpack.c.h.b16 %v256
      %v293 = vunpack.c.l.b16 %v257
      %v294 = vunpack.c.h.b16 %v257
      %v295 = vunpack.c.l.b16 %v258
      %v296 = vunpack.c.h.b16 %v258
      %v297 = vunpack.c.l.b16 %v259
      %v298 = vunpack.c.h.b16 %v259
      %v299 = vunpack.c.l.b16 %v260
      %v300 = vunpack.c.h.b16 %v260
      %v301 = vpack.c.b16 %v293, %v289
      %v302 = vpack.c.b16 %v294, %v290
      %v303 = vpack.c.b16 %v295, %v291
      %v304 = vpack.c.b16 %v296, %v292
      %v305 = vpack.c.b16 %v297, %v297
      %v306 = vpack.c.b16 %v298, %v298
      %v307 = vpack.c.b16 %v299, %v299
      %v308 = vpack.c.b16 %v300, %v300
      %vm313 = vcmask 162816
      %v315 = vsel %vm313, %v247, 0
      %v318 = vsel %vm313, %v248, 0
      %v321 = vsel %vm313, %v249, 0
      %v324 = vsel %vm313, %v250, 0
      %v327 = vsel %vm313, %v251, 0
      %v330 = vsel %vm313, %v252, 0
      %v333 = vsel %vm313, %v253, 0
      %v336 = vsel %vm313, %v254, 0
      %vm338 = vcmask 1041408
      %v340 = vsel %vm338, %v305, 0
      %v343 = vsel %vm338, %v306, 0
      %v346 = vsel %vm338, %v307, 0
      %v349 = vsel %vm338, %v308, 0
      %351 = vmatprep.subr.bf16.mxu0 %v302
      %352 = vmatpush1.bf16.msra.mxu0 %v301
      %353 = vmatprep.subr.bf16.mxu0 %v343
      %354 = vmatpush1.bf16.msra.mxu0 %v340
      %355 = vmatprep.subr.bf16.mxu0 0
      %356 = vmatpush1.bf16.msra.mxu0 0
      %357 = vmatprep.subr.bf16.mxu0 0
      %358 = vmatpush1.bf16.msra.mxu0 0
      %359 = vmatprep.subr.bf16.mxu0 0
      %360 = vmatpush1.bf16.msra.mxu0 0
      %361 = vmatprep.subr.bf16.mxu0 0
      %362 = vmatpush1.bf16.msra.mxu0 0
      %363 = vmatprep.subr.bf16.mxu0 0
      %364 = vmatpush1.bf16.msra.mxu0 0
      %365 = vmatprep.subr.bf16.mxu0 0
      %366 = vmatpush1.bf16.msra.mxu0 0
      %367 = vmatprep.subr.bf16.mxu0 0
      %368 = vmatpush1.bf16.msra.mxu0 0
      %369 = vmatprep.subr.bf16.mxu0 0
      %370 = vmatpush1.bf16.msra.mxu0 0
      %371 = vmatprep.subr.bf16.mxu0 0
      %372 = vmatpush1.bf16.msra.mxu0 0
      %373 = vmatprep.subr.bf16.mxu0 0
      %374 = vmatpush1.bf16.msra.mxu0 0
      %375 = vmatprep.subr.bf16.mxu0 0
      %376 = vmatpush1.bf16.msra.mxu0 0
      %377 = vmatprep.subr.bf16.mxu0 0
      %378 = vmatpush1.bf16.msra.mxu0 0
      %379 = vmatprep.subr.bf16.mxu0 0
      %380 = vmatpush1.bf16.msra.mxu0 0
      %381 = vmatprep.subr.bf16.mxu0 0
      %382 = vmatpush1.bf16.msra.mxu0 0
      %383 = vmatprep.mubr.bf16.mxu0 0
      %384 = vmatmul.mubr.bf16.gmra.mrb[0].mxu0 %v315
      %v385 = vpop.f32.mrb[0].mxu0
      %v386 = vadd.f32 %v266, %v385
      %v387 = vpop.f32.mrb[0].mxu0
      %v388 = vadd.f32 %v270, %v387
      %v389 = vpop.f32.mrb[0].mxu0
      %v390 = vadd.f32 %v266, %v389
      %v391 = vpop.f32.mrb[0].mxu0
      %v392 = vadd.f32 %v270, %v391
      %393 = vmatprep.mubr.bf16.mxu0 0
      %394 = vmatmul.mubr.bf16.gmra.mrb[0].mxu0 %v318
      %v395 = vpop.f32.mrb[0].mxu0
      %v396 = vadd.f32 %v266, %v395
      %v397 = vpop.f32.mrb[0].mxu0
      %v398 = vadd.f32 %v270, %v397
      %v399 = vpop.f32.mrb[0].mxu0
      %v400 = vadd.f32 %v266, %v399
      %v401 = vpop.f32.mrb[0].mxu0
      %v402 = vadd.f32 %v270, %v401
      %403 = vmatprep.mubr.bf16.mxu0 0
      %404 = vmatmul.mubr.bf16.gmra.mrb[0].mxu0 %v321
      %v405 = vpop.f32.mrb[0].mxu0
      %v406 = vadd.f32 %v266, %v405
      %v407 = vpop.f32.mrb[0].mxu0
      %v408 = vadd.f32 %v270, %v407
      %v409 = vpop.f32.mrb[0].mxu0
      %v410 = vadd.f32 %v266, %v409
      %v411 = vpop.f32.mrb[0].mxu0
      %v412 = vadd.f32 %v270, %v411
      %413 = vmatprep.mubr.bf16.mxu0 0
      %414 = vmatmul.mubr.bf16.gmra.mrb[0].mxu0 %v324
      %v415 = vpop.f32.mrb[0].mxu0
      %v416 = vadd.f32 %v266, %v415
      %v417 = vpop.f32.mrb[0].mxu0
      %v418 = vadd.f32 %v270, %v417
      %v419 = vpop.f32.mrb[0].mxu0
      %v420 = vadd.f32 %v266, %v419
      %v421 = vpop.f32.mrb[0].mxu0
      %v422 = vadd.f32 %v270, %v421
      %423 = vmatprep.mubr.bf16.mxu0 0
      %424 = vmatmul.mubr.bf16.gmra.mrb[0].mxu0 %v327
      %v425 = vpop.f32.mrb[0].mxu0
      %v426 = vadd.f32 %v266, %v425
      %v427 = vpop.f32.mrb[0].mxu0
      %v428 = vadd.f32 %v270, %v427
      %v429 = vpop.f32.mrb[0].mxu0
      %v430 = vadd.f32 %v266, %v429
      %v431 = vpop.f32.mrb[0].mxu0
      %v432 = vadd.f32 %v270, %v431
      %433 = vmatprep.mubr.bf16.mxu0 0
      %434 = vmatmul.mubr.bf16.gmra.mrb[0].mxu0 %v330
      %v435 = vpop.f32.mrb[0].mxu0
      %v436 = vadd.f32 %v266, %v435
      %v437 = vpop.f32.mrb[0].mxu0
      %v438 = vadd.f32 %v270, %v437
      %v439 = vpop.f32.mrb[0].mxu0
      %v440 = vadd.f32 %v266, %v439
      %v441 = vpop.f32.mrb[0].mxu0
      %v442 = vadd.f32 %v270, %v441
      %443 = vmatprep.mubr.bf16.mxu0 0
      %444 = vmatmul.mubr.bf16.gmra.mrb[0].mxu0 %v333
      %v445 = vpop.f32.mrb[0].mxu0
      %v446 = vadd.f32 %v266, %v445
      %v447 = vpop.f32.mrb[0].mxu0
      %v448 = vadd.f32 %v270, %v447
      %v449 = vpop.f32.mrb[0].mxu0
      %v450 = vadd.f32 %v266, %v449
      %v451 = vpop.f32.mrb[0].mxu0
      %v452 = vadd.f32 %v270, %v451
      %453 = vmatprep.mubr.bf16.mxu0 0
      %454 = vmatmul.mubr.bf16.gmra.mrb[0].mxu0 %v336
      %v455 = vpop.f32.mrb[0].mxu0
      %v456 = vadd.f32 %v266, %v455
      %v457 = vpop.f32.mrb[0].mxu0
      %v458 = vadd.f32 %v270, %v457
      %v459 = vpop.f32.mrb[0].mxu0
      %v460 = vadd.f32 %v266, %v459
      %v461 = vpop.f32.mrb[0].mxu0
      %v462 = vadd.f32 %v270, %v461
      %463 = vdwg.mxu0
      %464 = vmatprep.subr.bf16.mxu0 %v304
      %465 = vmatpush1.bf16.msra.mxu0 %v303
      %466 = vmatprep.subr.bf16.mxu0 %v349
      %467 = vmatpush1.bf16.msra.mxu0 %v346
      %468 = vmatprep.subr.bf16.mxu0 0
      %469 = vmatpush1.bf16.msra.mxu0 0
      %470 = vmatprep.subr.bf16.mxu0 0
      %471 = vmatpush1.bf16.msra.mxu0 0
      %472 = vmatprep.subr.bf16.mxu0 0
      %473 = vmatpush1.bf16.msra.mxu0 0
      %474 = vmatprep.subr.bf16.mxu0 0
      %475 = vmatpush1.bf16.msra.mxu0 0
      %476 = vmatprep.subr.bf16.mxu0 0
      %477 = vmatpush1.bf16.msra.mxu0 0
      %478 = vmatprep.subr.bf16.mxu0 0
      %479 = vmatpush1.bf16.msra.mxu0 0
      %480 = vmatprep.subr.bf16.mxu0 0
      %481 = vmatpush1.bf16.msra.mxu0 0
      %482 = vmatprep.subr.bf16.mxu0 0
      %483 = vmatpush1.bf16.msra.mxu0 0
      %484 = vmatprep.subr.bf16.mxu0 0
      %485 = vmatpush1.bf16.msra.mxu0 0
      %486 = vmatprep.subr.bf16.mxu0 0
      %487 = vmatpush1.bf16.msra.mxu0 0
      %488 = vmatprep.subr.bf16.mxu0 0
      %489 = vmatpush1.bf16.msra.mxu0 0
      %490 = vmatprep.subr.bf16.mxu0 0
      %491 = vmatpush1.bf16.msra.mxu0 0
      %492 = vmatprep.subr.bf16.mxu0 0
      %493 = vmatpush1.bf16.msra.mxu0 0
      %494 = vmatprep.subr.bf16.mxu0 0
      %495 = vmatpush1.bf16.msra.mxu0 0
      %496 = vmatprep.mubr.bf16.mxu0 0
      %497 = vmatmul.mubr.bf16.gmra.mrb[0].mxu0 %v315
      %v498 = vpop.f32.mrb[0].mxu0
      %v499 = vadd.f32 %v274, %v498
      %v500 = vpop.f32.mrb[0].mxu0
      %v501 = vadd.f32 %v278, %v500
      %v502 = vpop.f32.mrb[0].mxu0
      %v503 = vadd.f32 %v274, %v502
      %v504 = vpop.f32.mrb[0].mxu0
      %v505 = vadd.f32 %v278, %v504
      %506 = vmatprep.mubr.bf16.mxu0 0
      %507 = vmatmul.mubr.bf16.gmra.mrb[0].mxu0 %v318
      %v508 = vpop.f32.mrb[0].mxu0
      %v509 = vadd.f32 %v274, %v508
      %v510 = vpop.f32.mrb[0].mxu0
      %v511 = vadd.f32 %v278, %v510
      %v512 = vpop.f32.mrb[0].mxu0
      %v513 = vadd.f32 %v274, %v512
      %v514 = vpop.f32.mrb[0].mxu0
      %v515 = vadd.f32 %v278, %v514
      %516 = vmatprep.mubr.bf16.mxu0 0
      %517 = vmatmul.mubr.bf16.gmra.mrb[0].mxu0 %v321
      %v518 = vpop.f32.mrb[0].mxu0
      %v519 = vadd.f32 %v274, %v518
      %v520 = vpop.f32.mrb[0].mxu0
      %v521 = vadd.f32 %v278, %v520
      %v522 = vpop.f32.mrb[0].mxu0
      %v523 = vadd.f32 %v274, %v522
      %v524 = vpop.f32.mrb[0].mxu0
      %v525 = vadd.f32 %v278, %v524
      %526 = vmatprep.mubr.bf16.mxu0 0
      %527 = vmatmul.mubr.bf16.gmra.mrb[0].mxu0 %v324
      %v528 = vpop.f32.mrb[0].mxu0
      %v529 = vadd.f32 %v274, %v528
      %v530 = vpop.f32.mrb[0].mxu0
      %v531 = vadd.f32 %v278, %v530
      %v532 = vpop.f32.mrb[0].mxu0
      %v533 = vadd.f32 %v274, %v532
      %v534 = vpop.f32.mrb[0].mxu0
      %v535 = vadd.f32 %v278, %v534
      %536 = vmatprep.mubr.bf16.mxu0 0
      %537 = vmatmul.mubr.bf16.gmra.mrb[0].mxu0 %v327
      %v538 = vpop.f32.mrb[0].mxu0
      %v539 = vadd.f32 %v274, %v538
      %v540 = vpop.f32.mrb[0].mxu0
      %v541 = vadd.f32 %v278, %v540
      %v542 = vpop.f32.mrb[0].mxu0
      %v543 = vadd.f32 %v274, %v542
      %v544 = vpop.f32.mrb[0].mxu0
      %v545 = vadd.f32 %v278, %v544
      %546 = vmatprep.mubr.bf16.mxu0 0
      %547 = vmatmul.mubr.bf16.gmra.mrb[0].mxu0 %v330
      %v548 = vpop.f32.mrb[0].mxu0
      %v549 = vadd.f32 %v274, %v548
      %v550 = vpop.f32.mrb[0].mxu0
      %v551 = vadd.f32 %v278, %v550
      %v552 = vpop.f32.mrb[0].mxu0
      %v553 = vadd.f32 %v274, %v552
      %v554 = vpop.f32.mrb[0].mxu0
      %v555 = vadd.f32 %v278, %v554
      %556 = vmatprep.mubr.bf16.mxu0 0
      %557 = vmatmul.mubr.bf16.gmra.mrb[0].mxu0 %v333
      %v558 = vpop.f32.mrb[0].mxu0
      %v559 = vadd.f32 %v274, %v558
      %v560 = vpop.f32.mrb[0].mxu0
      %v561 = vadd.f32 %v278, %v560
      %v562 = vpop.f32.mrb[0].mxu0
      %v563 = vadd.f32 %v274, %v562
      %v564 = vpop.f32.mrb[0].mxu0
      %v565 = vadd.f32 %v278, %v564
      %566 = vmatprep.mubr.bf16.mxu0 0
      %567 = vmatmul.mubr.bf16.gmra.mrb[0].mxu0 %v336
      %v568 = vpop.f32.mrb[0].mxu0
      %v569 = vadd.f32 %v274, %v568
      %v570 = vpop.f32.mrb[0].mxu0
      %v571 = vadd.f32 %v278, %v570
      %v572 = vpop.f32.mrb[0].mxu0
      %v573 = vadd.f32 %v274, %v572
      %v574 = vpop.f32.mrb[0].mxu0
      %v575 = vadd.f32 %v278, %v574
      %576 = vdwg.mxu0
      %v577 = vmax.f32 %v386, 0.0
      %v578 = vmax.f32 %v388, 0.0
      %v579 = vmax.f32 %v499, 0.0
      %v580 = vmax.f32 %v501, 0.0
      %v581 = vmax.f32 %v390, 0.0
      %v582 = vmax.f32 %v392, 0.0
      %v583 = vmax.f32 %v503, 0.0
      %v584 = vmax.f32 %v505, 0.0
      %v585 = vmax.f32 %v396, 0.0
      %v586 = vmax.f32 %v398, 0.0
      %v587 = vmax.f32 %v509, 0.0
      %v588 = vmax.f32 %v511, 0.0
      %v589 = vmax.f32 %v400, 0.0
      %v590 = vmax.f32 %v402, 0.0
      %v591 = vmax.f32 %v513, 0.0
      %v592 = vmax.f32 %v515, 0.0
      %v593 = vmax.f32 %v406, 0.0
      %v594 = vmax.f32 %v408, 0.0
      %v595 = vmax.f32 %v519, 0.0
      %v596 = vmax.f32 %v521, 0.0
      %v597 = vmax.f32 %v410, 0.0
      %v598 = vmax.f32 %v412, 0.0
      %v599 = vmax.f32 %v523, 0.0
      %v600 = vmax.f32 %v525, 0.0
      %v601 = vmax.f32 %v416, 0.0
      %v602 = vmax.f32 %v418, 0.0
      %v603 = vmax.f32 %v529, 0.0
      %v604 = vmax.f32 %v531, 0.0
      %v605 = vmax.f32 %v420, 0.0
      %v606 = vmax.f32 %v422, 0.0
      %v607 = vmax.f32 %v533, 0.0
      %v608 = vmax.f32 %v535, 0.0
      %v609 = vmax.f32 %v426, 0.0
      %v610 = vmax.f32 %v428, 0.0
      %v611 = vmax.f32 %v539, 0.0
      %v612 = vmax.f32 %v541, 0.0
      %v613 = vmax.f32 %v430, 0.0
      %v614 = vmax.f32 %v432, 0.0
      %v615 = vmax.f32 %v543, 0.0
      %v616 = vmax.f32 %v545, 0.0
      %v617 = vmax.f32 %v436, 0.0
      %v618 = vmax.f32 %v438, 0.0
      %v619 = vmax.f32 %v549, 0.0
      %v620 = vmax.f32 %v551, 0.0
      %v621 = vmax.f32 %v440, 0.0
      %v622 = vmax.f32 %v442, 0.0
      %v623 = vmax.f32 %v553, 0.0
      %v624 = vmax.f32 %v555, 0.0
      %v625 = vmax.f32 %v446, 0.0
      %v626 = vmax.f32 %v448, 0.0
      %v627 = vmax.f32 %v559, 0.0
      %v628 = vmax.f32 %v561, 0.0
      %v629 = vmax.f32 %v450, 0.0
      %v630 = vmax.f32 %v452, 0.0
      %v631 = vmax.f32 %v563, 0.0
      %v632 = vmax.f32 %v565, 0.0
      %v633 = vmax.f32 %v456, 0.0
      %v634 = vmax.f32 %v458, 0.0
      %v635 = vmax.f32 %v569, 0.0
      %v636 = vmax.f32 %v571, 0.0
      %v637 = vmax.f32 %v460, 0.0
      %v638 = vmax.f32 %v462, 0.0
      %v639 = vmax.f32 %v573, 0.0
      %v640 = vmax.f32 %v575, 0.0
      %v641 = vpack.c.bf16 %v581, %v577
      %v642 = vpack.c.bf16 %v582, %v578
      %v643 = vpack.c.bf16 %v583, %v579
      %v644 = vpack.c.bf16 %v584, %v580
      %v645 = vpack.c.bf16 %v589, %v585
      %v646 = vpack.c.bf16 %v590, %v586
      %v647 = vpack.c.bf16 %v591, %v587
      %v648 = vpack.c.bf16 %v592, %v588
      %v649 = vpack.c.bf16 %v597, %v593
      %v650 = vpack.c.bf16 %v598, %v594
      %v651 = vpack.c.bf16 %v599, %v595
      %v652 = vpack.c.bf16 %v600, %v596
      %v653 = vpack.c.bf16 %v605, %v601
      %v654 = vpack.c.bf16 %v606, %v602
      %v655 = vpack.c.bf16 %v607, %v603
      %v656 = vpack.c.bf16 %v608, %v604
      %v657 = vpack.c.bf16 %v613, %v609
      %v658 = vpack.c.bf16 %v614, %v610
      %v659 = vpack.c.bf16 %v615, %v611
      %v660 = vpack.c.bf16 %v616, %v612
      %v661 = vpack.c.bf16 %v621, %v617
      %v662 = vpack.c.bf16 %v622, %v618
      %v663 = vpack.c.bf16 %v623, %v619
      %v664 = vpack.c.bf16 %v624, %v620
      %v665 = vpack.c.bf16 %v629, %v625
      %v666 = vpack.c.bf16 %v630, %v626
      %v667 = vpack.c.bf16 %v631, %v627
      %v668 = vpack.c.bf16 %v632, %v628
      %v669 = vpack.c.bf16 %v637, %v633
      %v670 = vpack.c.bf16 %v638, %v634
      %v671 = vpack.c.bf16 %v639, %v635
      %v672 = vpack.c.bf16 %v640, %v636
      %v673 = vld [vmem:[%s3] sm:$0xff]
      %v674 = vld [vmem:[%s3 + $0x8] sm:$0xff]
      %v675 = vld [vmem:[%s3 + $0x10] sm:$0xff]
      %v676 = vld [vmem:[%s3 + $0x18] sm:$0xf]
      %v677 = vld [vmem:[%s3 + $0x1c] sm:$0xff]
      %v678 = vld [vmem:[%s3 + $0x24] sm:$0xff]
      %v679 = vld [vmem:[%s3 + $0x2c] sm:$0xff]
      %v680 = vld [vmem:[%s3 + $0x34] sm:$0xf]
      %v681 = vld [vmem:[%s3 + $0x38] sm:$0xff]
      %v682 = vld [vmem:[%s3 + $0x40] sm:$0xff]
      %v683 = vld [vmem:[%s3 + $0x48] sm:$0xff]
      %v684 = vld [vmem:[%s3 + $0x50] sm:$0xf]
      %v685 = vld [vmem:[%s3 + $0x54] sm:$0xff]
      %v686 = vld [vmem:[%s3 + $0x5c] sm:$0xff]
      %v687 = vld [vmem:[%s3 + $0x64] sm:$0xff]
      %v688 = vld [vmem:[%s3 + $0x6c] sm:$0xf]
      %v689 = vld [vmem:[%s3 + $0x70] sm:$0xff]
      %v690 = vld [vmem:[%s3 + $0x78] sm:$0xff]
      %v691 = vld [vmem:[%s3 + $0x80] sm:$0xff]
      %v692 = vld [vmem:[%s3 + $0x88] sm:$0xf]
      %v693 = vld [vmem:[%s3 + $0x8c] sm:$0xff]
      %v694 = vld [vmem:[%s3 + $0x94] sm:$0xff]
      %v695 = vld [vmem:[%s3 + $0x9c] sm:$0xff]
      %v696 = vld [vmem:[%s3 + $0xa4] sm:$0xf]
      %v697 = vld [vmem:[%s3 + $0xa8] sm:$0xff]
      %v698 = vld [vmem:[%s3 + $0xb0] sm:$0xff]
      %v699 = vld [vmem:[%s3 + $0xb8] sm:$0xff]
      %v700 = vld [vmem:[%s3 + $0xc0] sm:$0xf]
      %v701 = vld [vmem:[%s3 + $0xc4] sm:$0xff]
      %v702 = vld [vmem:[%s3 + $0xcc] sm:$0xff]
      %v703 = vld [vmem:[%s3 + $0xd4] sm:$0xff]
      %v704 = vld [vmem:[%s3 + $0xdc] sm:$0xf]
      %v705 = vld [vmem:[%s3 + $0xe0] sm:$0xff]
      %v706 = vld [vmem:[%s3 + $0xe8] sm:$0xff]
      %v707 = vld [vmem:[%s3 + $0xf0] sm:$0xff]
      %v708 = vld [vmem:[%s3 + $0xf8] sm:$0xf]
      %v709 = vld [vmem:[%s3 + $0xfc] sm:$0xff]
      %v710 = vld [vmem:[%s3 + $0x104] sm:$0xff]
      %v711 = vld [vmem:[%s3 + $0x10c] sm:$0xff]
      %v712 = vld [vmem:[%s3 + $0x114] sm:$0xf]
      %v713 = vld [vmem:[%s3 + $0x118] sm:$0xff]
      %v714 = vld [vmem:[%s3 + $0x120] sm:$0xff]
      %v715 = vld [vmem:[%s3 + $0x128] sm:$0xff]
      %v716 = vld [vmem:[%s3 + $0x130] sm:$0xf]
      %v717 = vld [vmem:[%s3 + $0x134] sm:$0xff]
      %v718 = vld [vmem:[%s3 + $0x13c] sm:$0xff]
      %v719 = vld [vmem:[%s3 + $0x144] sm:$0xff]
      %v720 = vld [vmem:[%s3 + $0x14c] sm:$0xf]
      %v721 = vld [vmem:[%s3 + $0x150] sm:$0xff]
      %v722 = vld [vmem:[%s3 + $0x158] sm:$0xff]
      %v723 = vld [vmem:[%s3 + $0x160] sm:$0xff]
      %v724 = vld [vmem:[%s3 + $0x168] sm:$0xf]
      %v725 = vld [vmem:[%s3 + $0x16c] sm:$0xff]
      %v726 = vld [vmem:[%s3 + $0x174] sm:$0xff]
      %v727 = vld [vmem:[%s3 + $0x17c] sm:$0xff]
      %v728 = vld [vmem:[%s3 + $0x184] sm:$0xf]
      %v729 = vld [vmem:[%s3 + $0x188] sm:$0xff]
      %v730 = vld [vmem:[%s3 + $0x190] sm:$0xff]
      %v731 = vld [vmem:[%s3 + $0x198] sm:$0xff]
      %v732 = vld [vmem:[%s3 + $0x1a0] sm:$0xf]
      %v733 = vld [vmem:[%s3 + $0x1a4] sm:$0xff]
      %v734 = vld [vmem:[%s3 + $0x1ac] sm:$0xff]
      %v735 = vld [vmem:[%s3 + $0x1b4] sm:$0xff]
      %v736 = vld [vmem:[%s3 + $0x1bc] sm:$0xf]
      %v737 = vld [vmem:[%s3 + $0x1c0] sm:$0xff]
      %v738 = vld [vmem:[%s3 + $0x1c8] sm:$0xff]
      %v739 = vld [vmem:[%s3 + $0x1d0] sm:$0xff]
      %v740 = vld [vmem:[%s3 + $0x1d8] sm:$0xf]
      %v741 = vld [vmem:[%s3 + $0x1dc] sm:$0xff]
      %v742 = vld [vmem:[%s3 + $0x1e4] sm:$0xff]
      %v743 = vld [vmem:[%s3 + $0x1ec] sm:$0xff]
      %v744 = vld [vmem:[%s3 + $0x1f4] sm:$0xf]
      %v745 = vld [vmem:[%s3 + $0x1f8] sm:$0xff]
      %v746 = vld [vmem:[%s3 + $0x200] sm:$0xff]
      %v747 = vld [vmem:[%s3 + $0x208] sm:$0xff]
      %v748 = vld [vmem:[%s3 + $0x210] sm:$0xf]
      %v749 = vld [vmem:[%s3 + $0x214] sm:$0xff]
      %v750 = vld [vmem:[%s3 + $0x21c] sm:$0xff]
      %v751 = vld [vmem:[%s3 + $0x224] sm:$0xff]
      %v752 = vld [vmem:[%s3 + $0x22c] sm:$0xf]
      %v753 = vld [vmem:[%s3 + $0x230] sm:$0xff]
      %v754 = vld [vmem:[%s3 + $0x238] sm:$0xff]
      %v755 = vld [vmem:[%s3 + $0x240] sm:$0xff]
      %v756 = vld [vmem:[%s3 + $0x248] sm:$0xf]
      %v757 = vld [vmem:[%s3 + $0x24c] sm:$0xff]
      %v758 = vld [vmem:[%s3 + $0x254] sm:$0xff]
      %v759 = vld [vmem:[%s3 + $0x25c] sm:$0xff]
      %v760 = vld [vmem:[%s3 + $0x264] sm:$0xf]
      %v761 = vld [vmem:[%s3 + $0x268] sm:$0xff]
      %v762 = vld [vmem:[%s3 + $0x270] sm:$0xff]
      %v763 = vld [vmem:[%s3 + $0x278] sm:$0xff]
      %v764 = vld [vmem:[%s3 + $0x280] sm:$0xf]
      %v765 = vld [vmem:[%s3 + $0x284] sm:$0xff]
      %v766 = vld [vmem:[%s3 + $0x28c] sm:$0xff]
      %v767 = vld [vmem:[%s3 + $0x294] sm:$0xff]
      %v768 = vld [vmem:[%s3 + $0x29c] sm:$0xf]
      %v769 = vld [vmem:[%s3 + $0x2a0] sm:$0xff]
      %v770 = vld [vmem:[%s3 + $0x2a8] sm:$0xff]
      %v771 = vld [vmem:[%s3 + $0x2b0] sm:$0xff]
      %v772 = vld [vmem:[%s3 + $0x2b8] sm:$0xf]
      %v773 = vld [vmem:[%s3 + $0x2bc] sm:$0xff]
      %v774 = vld [vmem:[%s3 + $0x2c4] sm:$0xff]
      %v775 = vld [vmem:[%s3 + $0x2cc] sm:$0xff]
      %v776 = vld [vmem:[%s3 + $0x2d4] sm:$0xf]
      %v777 = vld [vmem:[%s3 + $0x2d8] sm:$0xff]
      %v778 = vld [vmem:[%s3 + $0x2e0] sm:$0xff]
      %v779 = vld [vmem:[%s3 + $0x2e8] sm:$0xff]
      %v780 = vld [vmem:[%s3 + $0x2f0] sm:$0xf]
      %v781 = vld [vmem:[%s3 + $0x2f4] sm:$0xff]
      %v782 = vld [vmem:[%s3 + $0x2fc] sm:$0xff]
      %v783 = vld [vmem:[%s3 + $0x304] sm:$0xff]
      %v784 = vld [vmem:[%s3 + $0x30c] sm:$0xf]
      %v785 = vld [vmem:[%s3 + $0x310] sm:$0xff]
      %v786 = vld [vmem:[%s3 + $0x318] sm:$0xff]
      %v787 = vld [vmem:[%s3 + $0x320] sm:$0xff]
      %v788 = vld [vmem:[%s3 + $0x328] sm:$0xf]
      %v789 = vld [vmem:[%s3 + $0x32c] sm:$0xff]
      %v790 = vld [vmem:[%s3 + $0x334] sm:$0xff]
      %v791 = vld [vmem:[%s3 + $0x33c] sm:$0xff]
      %v792 = vld [vmem:[%s3 + $0x344] sm:$0xf]
      %v793 = vld [vmem:[%s3 + $0x348] sm:$0xff]
      %v794 = vld [vmem:[%s3 + $0x350] sm:$0xff]
      %v795 = vld [vmem:[%s3 + $0x358] sm:$0xff]
      %v796 = vld [vmem:[%s3 + $0x360] sm:$0xf]
      %v797 = vld [vmem:[%s3 + $0x364] sm:$0xff]
      %v798 = vld [vmem:[%s3 + $0x36c] sm:$0xff]
      %v799 = vld [vmem:[%s3 + $0x374] sm:$0xff]
      %v800 = vld [vmem:[%s3 + $0x37c] sm:$0xf]
      %v801 = vld [vmem:[%s3 + $0x380] sm:$0xff]
      %v802 = vld [vmem:[%s3 + $0x388] sm:$0xff]
      %v803 = vld [vmem:[%s3 + $0x390] sm:$0xff]
      %v804 = vld [vmem:[%s3 + $0x398] sm:$0xf]
      %v805 = vld [vmem:[%s3 + $0x39c] sm:$0xff]
      %v806 = vld [vmem:[%s3 + $0x3a4] sm:$0xff]
      %v807 = vld [vmem:[%s3 + $0x3ac] sm:$0xff]
      %v808 = vld [vmem:[%s3 + $0x3b4] sm:$0xf]
      %v809 = vld [vmem:[%s3 + $0x3b8] sm:$0xff]
      %v810 = vld [vmem:[%s3 + $0x3c0] sm:$0xff]
      %v811 = vld [vmem:[%s3 + $0x3c8] sm:$0xff]
      %v812 = vld [vmem:[%s3 + $0x3d0] sm:$0xf]
      %v813 = vld [vmem:[%s3 + $0x3d4] sm:$0xff]
      %v814 = vld [vmem:[%s3 + $0x3dc] sm:$0xff]
      %v815 = vld [vmem:[%s3 + $0x3e4] sm:$0xff]
      %v816 = vld [vmem:[%s3 + $0x3ec] sm:$0xf]
      %v817 = vld [vmem:[%s3 + $0x3f0] sm:$0xff]
      %v818 = vld [vmem:[%s3 + $0x3f8] sm:$0xff]
      %v819 = vld [vmem:[%s3 + $0x400] sm:$0xff]
      %v820 = vld [vmem:[%s3 + $0x408] sm:$0xf]
      %v821 = vld [vmem:[%s3 + $0x40c] sm:$0xff]
      %v822 = vld [vmem:[%s3 + $0x414] sm:$0xff]
      %v823 = vld [vmem:[%s3 + $0x41c] sm:$0xff]
      %v824 = vld [vmem:[%s3 + $0x424] sm:$0xf]
      %v825 = vld [vmem:[%s3 + $0x428] sm:$0xff]
      %v826 = vld [vmem:[%s3 + $0x430] sm:$0xff]
      %v827 = vld [vmem:[%s3 + $0x438] sm:$0xff]
      %v828 = vld [vmem:[%s3 + $0x440] sm:$0xf]
      %v829 = vld [vmem:[%s3 + $0x444] sm:$0xff]
      %v830 = vld [vmem:[%s3 + $0x44c] sm:$0xff]
      %v831 = vld [vmem:[%s3 + $0x454] sm:$0xff]
      %v832 = vld [vmem:[%s3 + $0x45c] sm:$0xf]
      %v833 = vld [vmem:[%s3 + $0x460] sm:$0xff]
      %v834 = vld [vmem:[%s3 + $0x468] sm:$0xff]
      %v835 = vld [vmem:[%s3 + $0x470] sm:$0xff]
      %v836 = vld [vmem:[%s3 + $0x478] sm:$0xf]
      %v837 = vld [vmem:[%s3 + $0x47c] sm:$0xff]
      %v838 = vld [vmem:[%s3 + $0x484] sm:$0xff]
      %v839 = vld [vmem:[%s3 + $0x48c] sm:$0xff]
      %v840 = vld [vmem:[%s3 + $0x494] sm:$0xf]
      %v841 = vld [vmem:[%s3 + $0x498] sm:$0xff]
      %v842 = vld [vmem:[%s3 + $0x4a0] sm:$0xff]
      %v843 = vld [vmem:[%s3 + $0x4a8] sm:$0xff]
      %v844 = vld [vmem:[%s3 + $0x4b0] sm:$0xf]
      %v845 = vld [vmem:[%s3 + $0x4b4] sm:$0xff]
      %v846 = vld [vmem:[%s3 + $0x4bc] sm:$0xff]
      %v847 = vld [vmem:[%s3 + $0x4c4] sm:$0xff]
      %v848 = vld [vmem:[%s3 + $0x4cc] sm:$0xf]
      %v849 = vld [vmem:[%s3 + $0x4d0] sm:$0xff]
      %v850 = vld [vmem:[%s3 + $0x4d8] sm:$0xff]
      %v851 = vld [vmem:[%s3 + $0x4e0] sm:$0xff]
      %v852 = vld [vmem:[%s3 + $0x4e8] sm:$0xf]
      %v853 = vld [vmem:[%s3 + $0x4ec] sm:$0xff]
      %v854 = vld [vmem:[%s3 + $0x4f4] sm:$0xff]
      %v855 = vld [vmem:[%s3 + $0x4fc] sm:$0xff]
      %v856 = vld [vmem:[%s3 + $0x504] sm:$0xf]
      %v857 = vld [vmem:[%s3 + $0x508] sm:$0xff]
      %v858 = vld [vmem:[%s3 + $0x510] sm:$0xff]
      %v859 = vld [vmem:[%s3 + $0x518] sm:$0xff]
      %v860 = vld [vmem:[%s3 + $0x520] sm:$0xf]
      %v861 = vld [vmem:[%s3 + $0x524] sm:$0xff]
      %v862 = vld [vmem:[%s3 + $0x52c] sm:$0xff]
      %v863 = vld [vmem:[%s3 + $0x534] sm:$0xff]
      %v864 = vld [vmem:[%s3 + $0x53c] sm:$0xf]
      %v865 = vld [vmem:[%s3 + $0x540] sm:$0xff]
      %v866 = vld [vmem:[%s3 + $0x548] sm:$0xff]
      %v867 = vld [vmem:[%s3 + $0x550] sm:$0xff]
      %v868 = vld [vmem:[%s3 + $0x558] sm:$0xf]
      %v869 = vld [vmem:[%s3 + $0x55c] sm:$0xff]
      %v870 = vld [vmem:[%s3 + $0x564] sm:$0xff]
      %v871 = vld [vmem:[%s3 + $0x56c] sm:$0xff]
      %v872 = vld [vmem:[%s3 + $0x574] sm:$0xf]
      %v873 = vld [vmem:[%s3 + $0x578] sm:$0xff]
      %v874 = vld [vmem:[%s3 + $0x580] sm:$0xff]
      %v875 = vld [vmem:[%s3 + $0x588] sm:$0xff]
      %v876 = vld [vmem:[%s3 + $0x590] sm:$0xf]
      %v877 = vld [vmem:[%s3 + $0x594] sm:$0xff]
      %v878 = vld [vmem:[%s3 + $0x59c] sm:$0xff]
      %v879 = vld [vmem:[%s3 + $0x5a4] sm:$0xff]
      %v880 = vld [vmem:[%s3 + $0x5ac] sm:$0xf]
      %v881 = vld [vmem:[%s3 + $0x5b0] sm:$0xff]
      %v882 = vld [vmem:[%s3 + $0x5b8] sm:$0xff]
      %v883 = vld [vmem:[%s3 + $0x5c0] sm:$0xff]
      %v884 = vld [vmem:[%s3 + $0x5c8] sm:$0xf]
      %v885 = vld [vmem:[%s3 + $0x5cc] sm:$0xff]
      %v886 = vld [vmem:[%s3 + $0x5d4] sm:$0xff]
      %v887 = vld [vmem:[%s3 + $0x5dc] sm:$0xff]
      %v888 = vld [vmem:[%s3 + $0x5e4] sm:$0xf]
      %v889 = vld [vmem:[%s3 + $0x5e8] sm:$0xff]
      %v890 = vld [vmem:[%s3 + $0x5f0] sm:$0xff]
      %v891 = vld [vmem:[%s3 + $0x5f8] sm:$0xff]
      %v892 = vld [vmem:[%s3 + $0x600] sm:$0xf]
      %v893 = vld [vmem:[%s3 + $0x604] sm:$0xff]
      %v894 = vld [vmem:[%s3 + $0x60c] sm:$0xff]
      %v895 = vld [vmem:[%s3 + $0x614] sm:$0xff]
      %v896 = vld [vmem:[%s3 + $0x61c] sm:$0xf]
      %v897 = vld [vmem:[%s3 + $0x620] sm:$0xff]
      %v898 = vld [vmem:[%s3 + $0x628] sm:$0xff]
      %v899 = vld [vmem:[%s3 + $0x630] sm:$0xff]
      %v900 = vld [vmem:[%s3 + $0x638] sm:$0xf]
      %v901 = vld [vmem:[%s3 + $0x63c] sm:$0xff]
      %v902 = vld [vmem:[%s3 + $0x644] sm:$0xff]
      %v903 = vld [vmem:[%s3 + $0x64c] sm:$0xff]
      %v904 = vld [vmem:[%s3 + $0x654] sm:$0xf]
      %v905 = vld [vmem:[%s3 + $0x658] sm:$0xff]
      %v906 = vld [vmem:[%s3 + $0x660] sm:$0xff]
      %v907 = vld [vmem:[%s3 + $0x668] sm:$0xff]
      %v908 = vld [vmem:[%s3 + $0x670] sm:$0xf]
      %v909 = vld [vmem:[%s3 + $0x674] sm:$0xff]
      %v910 = vld [vmem:[%s3 + $0x67c] sm:$0xff]
      %v911 = vld [vmem:[%s3 + $0x684] sm:$0xff]
      %v912 = vld [vmem:[%s3 + $0x68c] sm:$0xf]
      %v913 = vld [vmem:[%s3 + $0x690] sm:$0xff]
      %v914 = vld [vmem:[%s3 + $0x698] sm:$0xff]
      %v915 = vld [vmem:[%s3 + $0x6a0] sm:$0xff]
      %v916 = vld [vmem:[%s3 + $0x6a8] sm:$0xf]
      %v917 = vld [vmem:[%s3 + $0x6ac] sm:$0xff]
      %v918 = vld [vmem:[%s3 + $0x6b4] sm:$0xff]
      %v919 = vld [vmem:[%s3 + $0x6bc] sm:$0xff]
      %v920 = vld [vmem:[%s3 + $0x6c4] sm:$0xf]
      %v921 = vld [vmem:[%s3 + $0x6c8] sm:$0xff]
      %v922 = vld [vmem:[%s3 + $0x6d0] sm:$0xff]
      %v923 = vld [vmem:[%s3 + $0x6d8] sm:$0xff]
      %v924 = vld [vmem:[%s3 + $0x6e0] sm:$0xf]
      %v925 = vld [vmem:[%s3 + $0x6e4] sm:$0xff]
      %v926 = vld [vmem:[%s3 + $0x6ec] sm:$0xff]
      %v927 = vld [vmem:[%s3 + $0x6f4] sm:$0xff]
      %v928 = vld [vmem:[%s3 + $0x6fc] sm:$0xf]
      %v929 = vld [vmem:[%s4] sm:$0x7f]
      %v931 = vlaneseq
      %v932 = vshrl.u32 %v931, 7
      %v933 = vsub.s32 0, %v932
      %v934 = vrot.slane %v929, %v933
      %v935 = vlaneseq
      %v936 = vshrl.u32 %v935, 7
      %v937 = vsub.s32 1, %v936
      %v938 = vrot.slane %v929, %v937
      %v939 = vlaneseq
      %v940 = vshrl.u32 %v939, 7
      %v941 = vsub.s32 2, %v940
      %v942 = vrot.slane %v929, %v941
      %v943 = vlaneseq
      %v944 = vshrl.u32 %v943, 7
      %v945 = vsub.s32 3, %v944
      %v946 = vrot.slane %v929, %v945
      %v947 = vlaneseq
      %v948 = vshrl.u32 %v947, 7
      %v949 = vsub.s32 4, %v948
      %v950 = vrot.slane %v929, %v949
      %v951 = vlaneseq
      %v952 = vshrl.u32 %v951, 7
      %v953 = vsub.s32 5, %v952
      %v954 = vrot.slane %v929, %v953
      %v955 = vlaneseq
      %v956 = vshrl.u32 %v955, 7
      %v957 = vsub.s32 6, %v956
      %v958 = vrot.slane %v929, %v957
      %v1222 = vunpack.c.l.b16 %v673
      %v1223 = vunpack.c.h.b16 %v673
      %v1224 = vunpack.c.l.b16 %v674
      %v1225 = vunpack.c.h.b16 %v674
      %v1226 = vunpack.c.l.b16 %v675
      %v1227 = vunpack.c.h.b16 %v675
      %v1228 = vunpack.c.l.b16 %v676
      %v1229 = vunpack.c.l.b16 %v677
      %v1230 = vunpack.c.h.b16 %v677
      %v1231 = vunpack.c.l.b16 %v678
      %v1232 = vunpack.c.h.b16 %v678
      %v1233 = vunpack.c.l.b16 %v679
      %v1234 = vunpack.c.h.b16 %v679
      %v1235 = vunpack.c.l.b16 %v680
      %v1236 = vunpack.c.l.b16 %v681
      %v1237 = vunpack.c.h.b16 %v681
      %v1238 = vunpack.c.l.b16 %v682
      %v1239 = vunpack.c.h.b16 %v682
      %v1240 = vunpack.c.l.b16 %v683
      %v1241 = vunpack.c.h.b16 %v683
      %v1242 = vunpack.c.l.b16 %v684
      %v1243 = vunpack.c.l.b16 %v685
      %v1244 = vunpack.c.h.b16 %v685
      %v1245 = vunpack.c.l.b16 %v686
      %v1246 = vunpack.c.h.b16 %v686
      %v1247 = vunpack.c.l.b16 %v687
      %v1248 = vunpack.c.h.b16 %v687
      %v1249 = vunpack.c.l.b16 %v688
      %v1250 = vunpack.c.l.b16 %v689
      %v1251 = vunpack.c.h.b16 %v689
      %v1252 = vunpack.c.l.b16 %v690
      %v1253 = vunpack.c.h.b16 %v690
      %v1254 = vunpack.c.l.b16 %v691
      %v1255 = vunpack.c.h.b16 %v691
      %v1256 = vunpack.c.l.b16 %v692
      %v1257 = vunpack.c.l.b16 %v693
      %v1258 = vunpack.c.h.b16 %v693
      %v1259 = vunpack.c.l.b16 %v694
      %v1260 = vunpack.c.h.b16 %v694
      %v1261 = vunpack.c.l.b16 %v695
      %v1262 = vunpack.c.h.b16 %v695
      %v1263 = vunpack.c.l.b16 %v696
      %v1264 = vunpack.c.l.b16 %v697
      %v1265 = vunpack.c.h.b16 %v697
      %v1266 = vunpack.c.l.b16 %v698
      %v1267 = vunpack.c.h.b16 %v698
      %v1268 = vunpack.c.l.b16 %v699
      %v1269 = vunpack.c.h.b16 %v699
      %v1270 = vunpack.c.l.b16 %v700
      %v1271 = vunpack.c.l.b16 %v701
      %v1272 = vunpack.c.h.b16 %v701
      %v1273 = vunpack.c.l.b16 %v702
      %v1274 = vunpack.c.h.b16 %v702
      %v1275 = vunpack.c.l.b16 %v703
      %v1276 = vunpack.c.h.b16 %v703
      %v1277 = vunpack.c.l.b16 %v704
      %v1278 = vunpack.c.l.b16 %v705
      %v1279 = vunpack.c.h.b16 %v705
      %v1280 = vunpack.c.l.b16 %v706
      %v1281 = vunpack.c.h.b16 %v706
      %v1282 = vunpack.c.l.b16 %v707
      %v1283 = vunpack.c.h.b16 %v707
      %v1284 = vunpack.c.l.b16 %v708
      %v1285 = vunpack.c.l.b16 %v709
      %v1286 = vunpack.c.h.b16 %v709
      %v1287 = vunpack.c.l.b16 %v710
      %v1288 = vunpack.c.h.b16 %v710
      %v1289 = vunpack.c.l.b16 %v711
      %v1290 = vunpack.c.h.b16 %v711
      %v1291 = vunpack.c.l.b16 %v712
      %v1292 = vunpack.c.l.b16 %v713
      %v1293 = vunpack.c.h.b16 %v713
      %v1294 = vunpack.c.l.b16 %v714
      %v1295 = vunpack.c.h.b16 %v714
      %v1296 = vunpack.c.l.b16 %v715
      %v1297 = vunpack.c.h.b16 %v715
      %v1298 = vunpack.c.l.b16 %v716
      %v1299 = vunpack.c.l.b16 %v717
      %v1300 = vunpack.c.h.b16 %v717
      %v1301 = vunpack.c.l.b16 %v718
      %v1302 = vunpack.c.h.b16 %v718
      %v1303 = vunpack.c.l.b16 %v719
      %v1304 = vunpack.c.h.b16 %v719
      %v1305 = vunpack.c.l.b16 %v720
      %v1306 = vunpack.c.l.b16 %v721
      %v1307 = vunpack.c.h.b16 %v721
      %v1308 = vunpack.c.l.b16 %v722
      %v1309 = vunpack.c.h.b16 %v722
      %v1310 = vunpack.c.l.b16 %v723
      %v1311 = vunpack.c.h.b16 %v723
      %v1312 = vunpack.c.l.b16 %v724
      %v1313 = vunpack.c.l.b16 %v725
      %v1314 = vunpack.c.h.b16 %v725
      %v1315 = vunpack.c.l.b16 %v726
      %v1316 = vunpack.c.h.b16 %v726
      %v1317 = vunpack.c.l.b16 %v727
      %v1318 = vunpack.c.h.b16 %v727
      %v1319 = vunpack.c.l.b16 %v728
      %v1320 = vunpack.c.l.b16 %v729
      %v1321 = vunpack.c.h.b16 %v729
      %v1322 = vunpack.c.l.b16 %v730
      %v1323 = vunpack.c.h.b16 %v730
      %v1324 = vunpack.c.l.b16 %v731
      %v1325 = vunpack.c.h.b16 %v731
      %v1326 = vunpack.c.l.b16 %v732
      %v1327 = vunpack.c.l.b16 %v733
      %v1328 = vunpack.c.h.b16 %v733
      %v1329 = vunpack.c.l.b16 %v734
      %v1330 = vunpack.c.h.b16 %v734
      %v1331 = vunpack.c.l.b16 %v735
      %v1332 = vunpack.c.h.b16 %v735
      %v1333 = vunpack.c.l.b16 %v736
      %v1334 = vunpack.c.l.b16 %v737
      %v1335 = vunpack.c.h.b16 %v737
      %v1336 = vunpack.c.l.b16 %v738
      %v1337 = vunpack.c.h.b16 %v738
      %v1338 = vunpack.c.l.b16 %v739
      %v1339 = vunpack.c.h.b16 %v739
      %v1340 = vunpack.c.l.b16 %v740
      %v1341 = vunpack.c.l.b16 %v741
      %v1342 = vunpack.c.h.b16 %v741
      %v1343 = vunpack.c.l.b16 %v742
      %v1344 = vunpack.c.h.b16 %v742
      %v1345 = vunpack.c.l.b16 %v743
      %v1346 = vunpack.c.h.b16 %v743
      %v1347 = vunpack.c.l.b16 %v744
      %v1348 = vunpack.c.l.b16 %v745
      %v1349 = vunpack.c.h.b16 %v745
      %v1350 = vunpack.c.l.b16 %v746
      %v1351 = vunpack.c.h.b16 %v746
      %v1352 = vunpack.c.l.b16 %v747
      %v1353 = vunpack.c.h.b16 %v747
      %v1354 = vunpack.c.l.b16 %v748
      %v1355 = vunpack.c.l.b16 %v749
      %v1356 = vunpack.c.h.b16 %v749
      %v1357 = vunpack.c.l.b16 %v750
      %v1358 = vunpack.c.h.b16 %v750
      %v1359 = vunpack.c.l.b16 %v751
      %v1360 = vunpack.c.h.b16 %v751
      %v1361 = vunpack.c.l.b16 %v752
      %v1362 = vunpack.c.l.b16 %v753
      %v1363 = vunpack.c.h.b16 %v753
      %v1364 = vunpack.c.l.b16 %v754
      %v1365 = vunpack.c.h.b16 %v754
      %v1366 = vunpack.c.l.b16 %v755
      %v1367 = vunpack.c.h.b16 %v755
      %v1368 = vunpack.c.l.b16 %v756
      %v1369 = vunpack.c.l.b16 %v757
      %v1370 = vunpack.c.h.b16 %v757
      %v1371 = vunpack.c.l.b16 %v758
      %v1372 = vunpack.c.h.b16 %v758
      %v1373 = vunpack.c.l.b16 %v759
      %v1374 = vunpack.c.h.b16 %v759
      %v1375 = vunpack.c.l.b16 %v760
      %v1376 = vunpack.c.l.b16 %v761
      %v1377 = vunpack.c.h.b16 %v761
      %v1378 = vunpack.c.l.b16 %v762
      %v1379 = vunpack.c.h.b16 %v762
      %v1380 = vunpack.c.l.b16 %v763
      %v1381 = vunpack.c.h.b16 %v763
      %v1382 = vunpack.c.l.b16 %v764
      %v1383 = vunpack.c.l.b16 %v765
      %v1384 = vunpack.c.h.b16 %v765
      %v1385 = vunpack.c.l.b16 %v766
      %v1386 = vunpack.c.h.b16 %v766
      %v1387 = vunpack.c.l.b16 %v767
      %v1388 = vunpack.c.h.b16 %v767
      %v1389 = vunpack.c.l.b16 %v768
      %v1390 = vunpack.c.l.b16 %v769
      %v1391 = vunpack.c.h.b16 %v769
      %v1392 = vunpack.c.l.b16 %v770
      %v1393 = vunpack.c.h.b16 %v770
      %v1394 = vunpack.c.l.b16 %v771
      %v1395 = vunpack.c.h.b16 %v771
      %v1396 = vunpack.c.l.b16 %v772
      %v1397 = vunpack.c.l.b16 %v773
      %v1398 = vunpack.c.h.b16 %v773
      %v1399 = vunpack.c.l.b16 %v774
      %v1400 = vunpack.c.h.b16 %v774
      %v1401 = vunpack.c.l.b16 %v775
      %v1402 = vunpack.c.h.b16 %v775
      %v1403 = vunpack.c.l.b16 %v776
      %v1404 = vunpack.c.l.b16 %v777
      %v1405 = vunpack.c.h.b16 %v777
      %v1406 = vunpack.c.l.b16 %v778
      %v1407 = vunpack.c.h.b16 %v778
      %v1408 = vunpack.c.l.b16 %v779
      %v1409 = vunpack.c.h.b16 %v779
      %v1410 = vunpack.c.l.b16 %v780
      %v1411 = vunpack.c.l.b16 %v781
      %v1412 = vunpack.c.h.b16 %v781
      %v1413 = vunpack.c.l.b16 %v782
      %v1414 = vunpack.c.h.b16 %v782
      %v1415 = vunpack.c.l.b16 %v783
      %v1416 = vunpack.c.h.b16 %v783
      %v1417 = vunpack.c.l.b16 %v784
      %v1418 = vunpack.c.l.b16 %v785
      %v1419 = vunpack.c.h.b16 %v785
      %v1420 = vunpack.c.l.b16 %v786
      %v1421 = vunpack.c.h.b16 %v786
      %v1422 = vunpack.c.l.b16 %v787
      %v1423 = vunpack.c.h.b16 %v787
      %v1424 = vunpack.c.l.b16 %v788
      %v1425 = vunpack.c.l.b16 %v789
      %v1426 = vunpack.c.h.b16 %v789
      %v1427 = vunpack.c.l.b16 %v790
      %v1428 = vunpack.c.h.b16 %v790
      %v1429 = vunpack.c.l.b16 %v791
      %v1430 = vunpack.c.h.b16 %v791
      %v1431 = vunpack.c.l.b16 %v792
      %v1432 = vunpack.c.l.b16 %v793
      %v1433 = vunpack.c.h.b16 %v793
      %v1434 = vunpack.c.l.b16 %v794
      %v1435 = vunpack.c.h.b16 %v794
      %v1436 = vunpack.c.l.b16 %v795
      %v1437 = vunpack.c.h.b16 %v795
      %v1438 = vunpack.c.l.b16 %v796
      %v1439 = vunpack.c.l.b16 %v797
      %v1440 = vunpack.c.h.b16 %v797
      %v1441 = vunpack.c.l.b16 %v798
      %v1442 = vunpack.c.h.b16 %v798
      %v1443 = vunpack.c.l.b16 %v799
      %v1444 = vunpack.c.h.b16 %v799
      %v1445 = vunpack.c.l.b16 %v800
      %v1446 = vunpack.c.l.b16 %v801
      %v1447 = vunpack.c.h.b16 %v801
      %v1448 = vunpack.c.l.b16 %v802
      %v1449 = vunpack.c.h.b16 %v802
      %v1450 = vunpack.c.l.b16 %v803
      %v1451 = vunpack.c.h.b16 %v803
      %v1452 = vunpack.c.l.b16 %v804
      %v1453 = vunpack.c.l.b16 %v805
      %v1454 = vunpack.c.h.b16 %v805
      %v1455 = vunpack.c.l.b16 %v806
      %v1456 = vunpack.c.h.b16 %v806
      %v1457 = vunpack.c.l.b16 %v807
      %v1458 = vunpack.c.h.b16 %v807
      %v1459 = vunpack.c.l.b16 %v808
      %v1460 = vunpack.c.l.b16 %v809
      %v1461 = vunpack.c.h.b16 %v809
      %v1462 = vunpack.c.l.b16 %v810
      %v1463 = vunpack.c.h.b16 %v810
      %v1464 = vunpack.c.l.b16 %v811
      %v1465 = vunpack.c.h.b16 %v811
      %v1466 = vunpack.c.l.b16 %v812
      %v1467 = vunpack.c.l.b16 %v813
      %v1468 = vunpack.c.h.b16 %v813
      %v1469 = vunpack.c.l.b16 %v814
      %v1470 = vunpack.c.h.b16 %v814
      %v1471 = vunpack.c.l.b16 %v815
      %v1472 = vunpack.c.h.b16 %v815
      %v1473 = vunpack.c.l.b16 %v816
      %v1474 = vunpack.c.l.b16 %v817
      %v1475 = vunpack.c.h.b16 %v817
      %v1476 = vunpack.c.l.b16 %v818
      %v1477 = vunpack.c.h.b16 %v818
      %v1478 = vunpack.c.l.b16 %v819
      %v1479 = vunpack.c.h.b16 %v819
      %v1480 = vunpack.c.l.b16 %v820
      %v1481 = vunpack.c.l.b16 %v821
      %v1482 = vunpack.c.h.b16 %v821
      %v1483 = vunpack.c.l.b16 %v822
      %v1484 = vunpack.c.h.b16 %v822
      %v1485 = vunpack.c.l.b16 %v823
      %v1486 = vunpack.c.h.b16 %v823
      %v1487 = vunpack.c.l.b16 %v824
      %v1488 = vunpack.c.l.b16 %v825
      %v1489 = vunpack.c.h.b16 %v825
      %v1490 = vunpack.c.l.b16 %v826
      %v1491 = vunpack.c.h.b16 %v826
      %v1492 = vunpack.c.l.b16 %v827
      %v1493 = vunpack.c.h.b16 %v827
      %v1494 = vunpack.c.l.b16 %v828
      %v1495 = vunpack.c.l.b16 %v829
      %v1496 = vunpack.c.h.b16 %v829
      %v1497 = vunpack.c.l.b16 %v830
      %v1498 = vunpack.c.h.b16 %v830
      %v1499 = vunpack.c.l.b16 %v831
      %v1500 = vunpack.c.h.b16 %v831
      %v1501 = vunpack.c.l.b16 %v832
      %v1502 = vunpack.c.l.b16 %v833
      %v1503 = vunpack.c.h.b16 %v833
      %v1504 = vunpack.c.l.b16 %v834
      %v1505 = vunpack.c.h.b16 %v834
      %v1506 = vunpack.c.l.b16 %v835
      %v1507 = vunpack.c.h.b16 %v835
      %v1508 = vunpack.c.l.b16 %v836
      %v1509 = vunpack.c.l.b16 %v837
      %v1510 = vunpack.c.h.b16 %v837
      %v1511 = vunpack.c.l.b16 %v838
      %v1512 = vunpack.c.h.b16 %v838
      %v1513 = vunpack.c.l.b16 %v839
      %v1514 = vunpack.c.h.b16 %v839
      %v1515 = vunpack.c.l.b16 %v840
      %v1516 = vunpack.c.l.b16 %v841
      %v1517 = vunpack.c.h.b16 %v841
      %v1518 = vunpack.c.l.b16 %v842
      %v1519 = vunpack.c.h.b16 %v842
      %v1520 = vunpack.c.l.b16 %v843
      %v1521 = vunpack.c.h.b16 %v843
      %v1522 = vunpack.c.l.b16 %v844
      %v1523 = vunpack.c.l.b16 %v845
      %v1524 = vunpack.c.h.b16 %v845
      %v1525 = vunpack.c.l.b16 %v846
      %v1526 = vunpack.c.h.b16 %v846
      %v1527 = vunpack.c.l.b16 %v847
      %v1528 = vunpack.c.h.b16 %v847
      %v1529 = vunpack.c.l.b16 %v848
      %v1530 = vunpack.c.l.b16 %v849
      %v1531 = vunpack.c.h.b16 %v849
      %v1532 = vunpack.c.l.b16 %v850
      %v1533 = vunpack.c.h.b16 %v850
      %v1534 = vunpack.c.l.b16 %v851
      %v1535 = vunpack.c.h.b16 %v851
      %v1536 = vunpack.c.l.b16 %v852
      %v1537 = vunpack.c.l.b16 %v853
      %v1538 = vunpack.c.h.b16 %v853
      %v1539 = vunpack.c.l.b16 %v854
      %v1540 = vunpack.c.h.b16 %v854
      %v1541 = vunpack.c.l.b16 %v855
      %v1542 = vunpack.c.h.b16 %v855
      %v1543 = vunpack.c.l.b16 %v856
      %v1544 = vunpack.c.l.b16 %v857
      %v1545 = vunpack.c.h.b16 %v857
      %v1546 = vunpack.c.l.b16 %v858
      %v1547 = vunpack.c.h.b16 %v858
      %v1548 = vunpack.c.l.b16 %v859
      %v1549 = vunpack.c.h.b16 %v859
      %v1550 = vunpack.c.l.b16 %v860
      %v1551 = vunpack.c.l.b16 %v861
      %v1552 = vunpack.c.h.b16 %v861
      %v1553 = vunpack.c.l.b16 %v862
      %v1554 = vunpack.c.h.b16 %v862
      %v1555 = vunpack.c.l.b16 %v863
      %v1556 = vunpack.c.h.b16 %v863
      %v1557 = vunpack.c.l.b16 %v864
      %v1558 = vunpack.c.l.b16 %v865
      %v1559 = vunpack.c.h.b16 %v865
      %v1560 = vunpack.c.l.b16 %v866
      %v1561 = vunpack.c.h.b16 %v866
      %v1562 = vunpack.c.l.b16 %v867
      %v1563 = vunpack.c.h.b16 %v867
      %v1564 = vunpack.c.l.b16 %v868
      %v1565 = vunpack.c.l.b16 %v869
      %v1566 = vunpack.c.h.b16 %v869
      %v1567 = vunpack.c.l.b16 %v870
      %v1568 = vunpack.c.h.b16 %v870
      %v1569 = vunpack.c.l.b16 %v871
      %v1570 = vunpack.c.h.b16 %v871
      %v1571 = vunpack.c.l.b16 %v872
      %v1572 = vunpack.c.l.b16 %v873
      %v1573 = vunpack.c.h.b16 %v873
      %v1574 = vunpack.c.l.b16 %v874
      %v1575 = vunpack.c.h.b16 %v874
      %v1576 = vunpack.c.l.b16 %v875
      %v1577 = vunpack.c.h.b16 %v875
      %v1578 = vunpack.c.l.b16 %v876
      %v1579 = vunpack.c.l.b16 %v877
      %v1580 = vunpack.c.h.b16 %v877
      %v1581 = vunpack.c.l.b16 %v878
      %v1582 = vunpack.c.h.b16 %v878
      %v1583 = vunpack.c.l.b16 %v879
      %v1584 = vunpack.c.h.b16 %v879
      %v1585 = vunpack.c.l.b16 %v880
      %v1586 = vunpack.c.l.b16 %v881
      %v1587 = vunpack.c.h.b16 %v881
      %v1588 = vunpack.c.l.b16 %v882
      %v1589 = vunpack.c.h.b16 %v882
      %v1590 = vunpack.c.l.b16 %v883
      %v1591 = vunpack.c.h.b16 %v883
      %v1592 = vunpack.c.l.b16 %v884
      %v1593 = vunpack.c.l.b16 %v885
      %v1594 = vunpack.c.h.b16 %v885
      %v1595 = vunpack.c.l.b16 %v886
      %v1596 = vunpack.c.h.b16 %v886
      %v1597 = vunpack.c.l.b16 %v887
      %v1598 = vunpack.c.h.b16 %v887
      %v1599 = vunpack.c.l.b16 %v888
      %v1600 = vunpack.c.l.b16 %v889
      %v1601 = vunpack.c.h.b16 %v889
      %v1602 = vunpack.c.l.b16 %v890
      %v1603 = vunpack.c.h.b16 %v890
      %v1604 = vunpack.c.l.b16 %v891
      %v1605 = vunpack.c.h.b16 %v891
      %v1606 = vunpack.c.l.b16 %v892
      %v1607 = vunpack.c.l.b16 %v893
      %v1608 = vunpack.c.h.b16 %v893
      %v1609 = vunpack.c.l.b16 %v894
      %v1610 = vunpack.c.h.b16 %v894
      %v1611 = vunpack.c.l.b16 %v895
      %v1612 = vunpack.c.h.b16 %v895
      %v1613 = vunpack.c.l.b16 %v896
      %v1614 = vunpack.c.l.b16 %v897
      %v1615 = vunpack.c.h.b16 %v897
      %v1616 = vunpack.c.l.b16 %v898
      %v1617 = vunpack.c.h.b16 %v898
      %v1618 = vunpack.c.l.b16 %v899
      %v1619 = vunpack.c.h.b16 %v899
      %v1620 = vunpack.c.l.b16 %v900
      %v1621 = vunpack.c.l.b16 %v901
      %v1622 = vunpack.c.h.b16 %v901
      %v1623 = vunpack.c.l.b16 %v902
      %v1624 = vunpack.c.h.b16 %v902
      %v1625 = vunpack.c.l.b16 %v903
      %v1626 = vunpack.c.h.b16 %v903
      %v1627 = vunpack.c.l.b16 %v904
      %v1628 = vunpack.c.l.b16 %v905
      %v1629 = vunpack.c.h.b16 %v905
      %v1630 = vunpack.c.l.b16 %v906
      %v1631 = vunpack.c.h.b16 %v906
      %v1632 = vunpack.c.l.b16 %v907
      %v1633 = vunpack.c.h.b16 %v907
      %v1634 = vunpack.c.l.b16 %v908
      %v1635 = vunpack.c.l.b16 %v909
      %v1636 = vunpack.c.h.b16 %v909
      %v1637 = vunpack.c.l.b16 %v910
      %v1638 = vunpack.c.h.b16 %v910
      %v1639 = vunpack.c.l.b16 %v911
      %v1640 = vunpack.c.h.b16 %v911
      %v1641 = vunpack.c.l.b16 %v912
      %v1642 = vunpack.c.l.b16 %v913
      %v1643 = vunpack.c.h.b16 %v913
      %v1644 = vunpack.c.l.b16 %v914
      %v1645 = vunpack.c.h.b16 %v914
      %v1646 = vunpack.c.l.b16 %v915
      %v1647 = vunpack.c.h.b16 %v915
      %v1648 = vunpack.c.l.b16 %v916
      %v1649 = vunpack.c.l.b16 %v917
      %v1650 = vunpack.c.h.b16 %v917
      %v1651 = vunpack.c.l.b16 %v918
      %v1652 = vunpack.c.h.b16 %v918
      %v1653 = vunpack.c.l.b16 %v919
      %v1654 = vunpack.c.h.b16 %v919
      %v1655 = vunpack.c.l.b16 %v920
      %v1656 = vunpack.c.l.b16 %v921
      %v1657 = vunpack.c.h.b16 %v921
      %v1658 = vunpack.c.l.b16 %v922
      %v1659 = vunpack.c.h.b16 %v922
      %v1660 = vunpack.c.l.b16 %v923
      %v1661 = vunpack.c.h.b16 %v923
      %v1662 = vunpack.c.l.b16 %v924
      %v1663 = vunpack.c.l.b16 %v925
      %v1664 = vunpack.c.h.b16 %v925
      %v1665 = vunpack.c.l.b16 %v926
      %v1666 = vunpack.c.h.b16 %v926
      %v1667 = vunpack.c.l.b16 %v927
      %v1668 = vunpack.c.h.b16 %v927
      %v1669 = vunpack.c.l.b16 %v928
      %v1670 = vpack.c.b16 %v1229, %v1222
      %v1671 = vpack.c.b16 %v1230, %v1223
      %v1672 = vpack.c.b16 %v1231, %v1224
      %v1673 = vpack.c.b16 %v1232, %v1225
      %v1674 = vpack.c.b16 %v1233, %v1226
      %v1675 = vpack.c.b16 %v1234, %v1227
      %v1676 = vpack.c.b16 %v1235, %v1228
      %v1677 = vpack.c.b16 %v1243, %v1236
      %v1678 = vpack.c.b16 %v1244, %v1237
      %v1679 = vpack.c.b16 %v1245, %v1238
      %v1680 = vpack.c.b16 %v1246, %v1239
      %v1681 = vpack.c.b16 %v1247, %v1240
      %v1682 = vpack.c.b16 %v1248, %v1241
      %v1683 = vpack.c.b16 %v1249, %v1242
      %v1684 = vpack.c.b16 %v1257, %v1250
      %v1685 = vpack.c.b16 %v1258, %v1251
      %v1686 = vpack.c.b16 %v1259, %v1252
      %v1687 = vpack.c.b16 %v1260, %v1253
      %v1688 = vpack.c.b16 %v1261, %v1254
      %v1689 = vpack.c.b16 %v1262, %v1255
      %v1690 = vpack.c.b16 %v1263, %v1256
      %v1691 = vpack.c.b16 %v1271, %v1264
      %v1692 = vpack.c.b16 %v1272, %v1265
      %v1693 = vpack.c.b16 %v1273, %v1266
      %v1694 = vpack.c.b16 %v1274, %v1267
      %v1695 = vpack.c.b16 %v1275, %v1268
      %v1696 = vpack.c.b16 %v1276, %v1269
      %v1697 = vpack.c.b16 %v1277, %v1270
      %v1698 = vpack.c.b16 %v1285, %v1278
      %v1699 = vpack.c.b16 %v1286, %v1279
      %v1700 = vpack.c.b16 %v1287, %v1280
      %v1701 = vpack.c.b16 %v1288, %v1281
      %v1702 = vpack.c.b16 %v1289, %v1282
      %v1703 = vpack.c.b16 %v1290, %v1283
      %v1704 = vpack.c.b16 %v1291, %v1284
      %v1705 = vpack.c.b16 %v1299, %v1292
      %v1706 = vpack.c.b16 %v1300, %v1293
      %v1707 = vpack.c.b16 %v1301, %v1294
      %v1708 = vpack.c.b16 %v1302, %v1295
      %v1709 = vpack.c.b16 %v1303, %v1296
      %v1710 = vpack.c.b16 %v1304, %v1297
      %v1711 = vpack.c.b16 %v1305, %v1298
      %v1712 = vpack.c.b16 %v1313, %v1306
      %v1713 = vpack.c.b16 %v1314, %v1307
      %v1714 = vpack.c.b16 %v1315, %v1308
      %v1715 = vpack.c.b16 %v1316, %v1309
      %v1716 = vpack.c.b16 %v1317, %v1310
      %v1717 = vpack.c.b16 %v1318, %v1311
      %v1718 = vpack.c.b16 %v1319, %v1312
      %v1719 = vpack.c.b16 %v1327, %v1320
      %v1720 = vpack.c.b16 %v1328, %v1321
      %v1721 = vpack.c.b16 %v1329, %v1322
      %v1722 = vpack.c.b16 %v1330, %v1323
      %v1723 = vpack.c.b16 %v1331, %v1324
      %v1724 = vpack.c.b16 %v1332, %v1325
      %v1725 = vpack.c.b16 %v1333, %v1326
      %v1726 = vpack.c.b16 %v1341, %v1334
      %v1727 = vpack.c.b16 %v1342, %v1335
      %v1728 = vpack.c.b16 %v1343, %v1336
      %v1729 = vpack.c.b16 %v1344, %v1337
      %v1730 = vpack.c.b16 %v1345, %v1338
      %v1731 = vpack.c.b16 %v1346, %v1339
      %v1732 = vpack.c.b16 %v1347, %v1340
      %v1733 = vpack.c.b16 %v1355, %v1348
      %v1734 = vpack.c.b16 %v1356, %v1349
      %v1735 = vpack.c.b16 %v1357, %v1350
      %v1736 = vpack.c.b16 %v1358, %v1351
      %v1737 = vpack.c.b16 %v1359, %v1352
      %v1738 = vpack.c.b16 %v1360, %v1353
      %v1739 = vpack.c.b16 %v1361, %v1354
      %v1740 = vpack.c.b16 %v1369, %v1362
      %v1741 = vpack.c.b16 %v1370, %v1363
      %v1742 = vpack.c.b16 %v1371, %v1364
      %v1743 = vpack.c.b16 %v1372, %v1365
      %v1744 = vpack.c.b16 %v1373, %v1366
      %v1745 = vpack.c.b16 %v1374, %v1367
      %v1746 = vpack.c.b16 %v1375, %v1368
      %v1747 = vpack.c.b16 %v1383, %v1376
      %v1748 = vpack.c.b16 %v1384, %v1377
      %v1749 = vpack.c.b16 %v1385, %v1378
      %v1750 = vpack.c.b16 %v1386, %v1379
      %v1751 = vpack.c.b16 %v1387, %v1380
      %v1752 = vpack.c.b16 %v1388, %v1381
      %v1753 = vpack.c.b16 %v1389, %v1382
      %v1754 = vpack.c.b16 %v1397, %v1390
      %v1755 = vpack.c.b16 %v1398, %v1391
      %v1756 = vpack.c.b16 %v1399, %v1392
      %v1757 = vpack.c.b16 %v1400, %v1393
      %v1758 = vpack.c.b16 %v1401, %v1394
      %v1759 = vpack.c.b16 %v1402, %v1395
      %v1760 = vpack.c.b16 %v1403, %v1396
      %v1761 = vpack.c.b16 %v1411, %v1404
      %v1762 = vpack.c.b16 %v1412, %v1405
      %v1763 = vpack.c.b16 %v1413, %v1406
      %v1764 = vpack.c.b16 %v1414, %v1407
      %v1765 = vpack.c.b16 %v1415, %v1408
      %v1766 = vpack.c.b16 %v1416, %v1409
      %v1767 = vpack.c.b16 %v1417, %v1410
      %v1768 = vpack.c.b16 %v1425, %v1418
      %v1769 = vpack.c.b16 %v1426, %v1419
      %v1770 = vpack.c.b16 %v1427, %v1420
      %v1771 = vpack.c.b16 %v1428, %v1421
      %v1772 = vpack.c.b16 %v1429, %v1422
      %v1773 = vpack.c.b16 %v1430, %v1423
      %v1774 = vpack.c.b16 %v1431, %v1424
      %v1775 = vpack.c.b16 %v1439, %v1432
      %v1776 = vpack.c.b16 %v1440, %v1433
      %v1777 = vpack.c.b16 %v1441, %v1434
      %v1778 = vpack.c.b16 %v1442, %v1435
      %v1779 = vpack.c.b16 %v1443, %v1436
      %v1780 = vpack.c.b16 %v1444, %v1437
      %v1781 = vpack.c.b16 %v1445, %v1438
      %v1782 = vpack.c.b16 %v1453, %v1446
      %v1783 = vpack.c.b16 %v1454, %v1447
      %v1784 = vpack.c.b16 %v1455, %v1448
      %v1785 = vpack.c.b16 %v1456, %v1449
      %v1786 = vpack.c.b16 %v1457, %v1450
      %v1787 = vpack.c.b16 %v1458, %v1451
      %v1788 = vpack.c.b16 %v1459, %v1452
      %v1789 = vpack.c.b16 %v1467, %v1460
      %v1790 = vpack.c.b16 %v1468, %v1461
      %v1791 = vpack.c.b16 %v1469, %v1462
      %v1792 = vpack.c.b16 %v1470, %v1463
      %v1793 = vpack.c.b16 %v1471, %v1464
      %v1794 = vpack.c.b16 %v1472, %v1465
      %v1795 = vpack.c.b16 %v1473, %v1466
      %v1796 = vpack.c.b16 %v1481, %v1474
      %v1797 = vpack.c.b16 %v1482, %v1475
      %v1798 = vpack.c.b16 %v1483, %v1476
      %v1799 = vpack.c.b16 %v1484, %v1477
      %v1800 = vpack.c.b16 %v1485, %v1478
      %v1801 = vpack.c.b16 %v1486, %v1479
      %v1802 = vpack.c.b16 %v1487, %v1480
      %v1803 = vpack.c.b16 %v1495, %v1488
      %v1804 = vpack.c.b16 %v1496, %v1489
      %v1805 = vpack.c.b16 %v1497, %v1490
      %v1806 = vpack.c.b16 %v1498, %v1491
      %v1807 = vpack.c.b16 %v1499, %v1492
      %v1808 = vpack.c.b16 %v1500, %v1493
      %v1809 = vpack.c.b16 %v1501, %v1494
      %v1810 = vpack.c.b16 %v1509, %v1502
      %v1811 = vpack.c.b16 %v1510, %v1503
      %v1812 = vpack.c.b16 %v1511, %v1504
      %v1813 = vpack.c.b16 %v1512, %v1505
      %v1814 = vpack.c.b16 %v1513, %v1506
      %v1815 = vpack.c.b16 %v1514, %v1507
      %v1816 = vpack.c.b16 %v1515, %v1508
      %v1817 = vpack.c.b16 %v1523, %v1516
      %v1818 = vpack.c.b16 %v1524, %v1517
      %v1819 = vpack.c.b16 %v1525, %v1518
      %v1820 = vpack.c.b16 %v1526, %v1519
      %v1821 = vpack.c.b16 %v1527, %v1520
      %v1822 = vpack.c.b16 %v1528, %v1521
      %v1823 = vpack.c.b16 %v1529, %v1522
      %v1824 = vpack.c.b16 %v1537, %v1530
      %v1825 = vpack.c.b16 %v1538, %v1531
      %v1826 = vpack.c.b16 %v1539, %v1532
      %v1827 = vpack.c.b16 %v1540, %v1533
      %v1828 = vpack.c.b16 %v1541, %v1534
      %v1829 = vpack.c.b16 %v1542, %v1535
      %v1830 = vpack.c.b16 %v1543, %v1536
      %v1831 = vpack.c.b16 %v1551, %v1544
      %v1832 = vpack.c.b16 %v1552, %v1545
      %v1833 = vpack.c.b16 %v1553, %v1546
      %v1834 = vpack.c.b16 %v1554, %v1547
      %v1835 = vpack.c.b16 %v1555, %v1548
      %v1836 = vpack.c.b16 %v1556, %v1549
      %v1837 = vpack.c.b16 %v1557, %v1550
      %v1838 = vpack.c.b16 %v1565, %v1558
      %v1839 = vpack.c.b16 %v1566, %v1559
      %v1840 = vpack.c.b16 %v1567, %v1560
      %v1841 = vpack.c.b16 %v1568, %v1561
      %v1842 = vpack.c.b16 %v1569, %v1562
      %v1843 = vpack.c.b16 %v1570, %v1563
      %v1844 = vpack.c.b16 %v1571, %v1564
      %v1845 = vpack.c.b16 %v1579, %v1572
      %v1846 = vpack.c.b16 %v1580, %v1573
      %v1847 = vpack.c.b16 %v1581, %v1574
      %v1848 = vpack.c.b16 %v1582, %v1575
      %v1849 = vpack.c.b16 %v1583, %v1576
      %v1850 = vpack.c.b16 %v1584, %v1577
      %v1851 = vpack.c.b16 %v1585, %v1578
      %v1852 = vpack.c.b16 %v1593, %v1586
      %v1853 = vpack.c.b16 %v1594, %v1587
      %v1854 = vpack.c.b16 %v1595, %v1588
      %v1855 = vpack.c.b16 %v1596, %v1589
      %v1856 = vpack.c.b16 %v1597, %v1590
      %v1857 = vpack.c.b16 %v1598, %v1591
      %v1858 = vpack.c.b16 %v1599, %v1592
      %v1859 = vpack.c.b16 %v1607, %v1600
      %v1860 = vpack.c.b16 %v1608, %v1601
      %v1861 = vpack.c.b16 %v1609, %v1602
      %v1862 = vpack.c.b16 %v1610, %v1603
      %v1863 = vpack.c.b16 %v1611, %v1604
      %v1864 = vpack.c.b16 %v1612, %v1605
      %v1865 = vpack.c.b16 %v1613, %v1606
      %v1866 = vpack.c.b16 %v1621, %v1614
      %v1867 = vpack.c.b16 %v1622, %v1615
      %v1868 = vpack.c.b16 %v1623, %v1616
      %v1869 = vpack.c.b16 %v1624, %v1617
      %v1870 = vpack.c.b16 %v1625, %v1618
      %v1871 = vpack.c.b16 %v1626, %v1619
      %v1872 = vpack.c.b16 %v1627, %v1620
      %v1873 = vpack.c.b16 %v1635, %v1628
      %v1874 = vpack.c.b16 %v1636, %v1629
      %v1875 = vpack.c.b16 %v1637, %v1630
      %v1876 = vpack.c.b16 %v1638, %v1631
      %v1877 = vpack.c.b16 %v1639, %v1632
      %v1878 = vpack.c.b16 %v1640, %v1633
      %v1879 = vpack.c.b16 %v1641, %v1634
      %v1880 = vpack.c.b16 %v1649, %v1642
      %v1881 = vpack.c.b16 %v1650, %v1643
      %v1882 = vpack.c.b16 %v1651, %v1644
      %v1883 = vpack.c.b16 %v1652, %v1645
      %v1884 = vpack.c.b16 %v1653, %v1646
      %v1885 = vpack.c.b16 %v1654, %v1647
      %v1886 = vpack.c.b16 %v1655, %v1648
      %v1887 = vpack.c.b16 %v1663, %v1656
      %v1888 = vpack.c.b16 %v1664, %v1657
      %v1889 = vpack.c.b16 %v1665, %v1658
      %v1890 = vpack.c.b16 %v1666, %v1659
      %v1891 = vpack.c.b16 %v1667, %v1660
      %v1892 = vpack.c.b16 %v1668, %v1661
      %v1893 = vpack.c.b16 %v1669, %v1662
      %2118 = vmatprep.subr.bf16.mxu0 %v1671
      %2119 = vmatpush1.bf16.msra.mxu0 %v1670
      %2120 = vmatprep.subr.bf16.mxu0 %v1678
      %2121 = vmatpush1.bf16.msra.mxu0 %v1677
      %2122 = vmatprep.subr.bf16.mxu0 %v1685
      %2123 = vmatpush1.bf16.msra.mxu0 %v1684
      %2124 = vmatprep.subr.bf16.mxu0 %v1692
      %2125 = vmatpush1.bf16.msra.mxu0 %v1691
      %2126 = vmatprep.subr.bf16.mxu0 %v1699
      %2127 = vmatpush1.bf16.msra.mxu0 %v1698
      %2128 = vmatprep.subr.bf16.mxu0 %v1706
      %2129 = vmatpush1.bf16.msra.mxu0 %v1705
      %2130 = vmatprep.subr.bf16.mxu0 %v1713
      %2131 = vmatpush1.bf16.msra.mxu0 %v1712
      %2132 = vmatprep.subr.bf16.mxu0 %v1720
      %2133 = vmatpush1.bf16.msra.mxu0 %v1719
      %2134 = vmatprep.subr.bf16.mxu0 %v1727
      %2135 = vmatpush1.bf16.msra.mxu0 %v1726
      %2136 = vmatprep.subr.bf16.mxu0 %v1734
      %2137 = vmatpush1.bf16.msra.mxu0 %v1733
      %2138 = vmatprep.subr.bf16.mxu0 %v1741
      %2139 = vmatpush1.bf16.msra.mxu0 %v1740
      %2140 = vmatprep.subr.bf16.mxu0 %v1748
      %2141 = vmatpush1.bf16.msra.mxu0 %v1747
      %2142 = vmatprep.subr.bf16.mxu0 %v1755
      %2143 = vmatpush1.bf16.msra.mxu0 %v1754
      %2144 = vmatprep.subr.bf16.mxu0 %v1762
      %2145 = vmatpush1.bf16.msra.mxu0 %v1761
      %2146 = vmatprep.subr.bf16.mxu0 %v1769
      %2147 = vmatpush1.bf16.msra.mxu0 %v1768
      %2148 = vmatprep.subr.bf16.mxu0 %v1776
      %2149 = vmatpush1.bf16.msra.mxu0 %v1775
      %2150 = vmatprep.mubr.bf16.mxu0 %v642
      %2151 = vmatmul.mubr.bf16.gmra.mrb[0].mxu0 %v641
      %v2152 = vpop.f32.mrb[0].mxu0
      %v2153 = vadd.f32 %v934, %v2152
      %v2154 = vpop.f32.mrb[0].mxu0
      %v2155 = vadd.f32 %v938, %v2154
      %v2156 = vpop.f32.mrb[0].mxu0
      %v2157 = vadd.f32 %v934, %v2156
      %v2158 = vpop.f32.mrb[0].mxu0
      %v2159 = vadd.f32 %v938, %v2158
      %2160 = vmatprep.mubr.bf16.mxu0 %v646
      %2161 = vmatmul.mubr.bf16.gmra.mrb[0].mxu0 %v645
      %v2162 = vpop.f32.mrb[0].mxu0
      %v2163 = vadd.f32 %v934, %v2162
      %v2164 = vpop.f32.mrb[0].mxu0
      %v2165 = vadd.f32 %v938, %v2164
      %v2166 = vpop.f32.mrb[0].mxu0
      %v2167 = vadd.f32 %v934, %v2166
      %v2168 = vpop.f32.mrb[0].mxu0
      %v2169 = vadd.f32 %v938, %v2168
      %2170 = vmatprep.mubr.bf16.mxu0 %v650
      %2171 = vmatmul.mubr.bf16.gmra.mrb[0].mxu0 %v649
      %v2172 = vpop.f32.mrb[0].mxu0
      %v2173 = vadd.f32 %v934, %v2172
      %v2174 = vpop.f32.mrb[0].mxu0
      %v2175 = vadd.f32 %v938, %v2174
      %v2176 = vpop.f32.mrb[0].mxu0
      %v2177 = vadd.f32 %v934, %v2176
      %v2178 = vpop.f32.mrb[0].mxu0
      %v2179 = vadd.f32 %v938, %v2178
      %2180 = vmatprep.mubr.bf16.mxu0 %v654
      %2181 = vmatmul.mubr.bf16.gmra.mrb[0].mxu0 %v653
      %v2182 = vpop.f32.mrb[0].mxu0
      %v2183 = vadd.f32 %v934, %v2182
      %v2184 = vpop.f32.mrb[0].mxu0
      %v2185 = vadd.f32 %v938, %v2184
      %v2186 = vpop.f32.mrb[0].mxu0
      %v2187 = vadd.f32 %v934, %v2186
      %v2188 = vpop.f32.mrb[0].mxu0
      %v2189 = vadd.f32 %v938, %v2188
      %2190 = vmatprep.mubr.bf16.mxu0 %v658
      %2191 = vmatmul.mubr.bf16.gmra.mrb[0].mxu0 %v657
      %v2192 = vpop.f32.mrb[0].mxu0
      %v2193 = vadd.f32 %v934, %v2192
      %v2194 = vpop.f32.mrb[0].mxu0
      %v2195 = vadd.f32 %v938, %v2194
      %v2196 = vpop.f32.mrb[0].mxu0
      %v2197 = vadd.f32 %v934, %v2196
      %v2198 = vpop.f32.mrb[0].mxu0
      %v2199 = vadd.f32 %v938, %v2198
      %2200 = vmatprep.mubr.bf16.mxu0 %v662
      %2201 = vmatmul.mubr.bf16.gmra.mrb[0].mxu0 %v661
      %v2202 = vpop.f32.mrb[0].mxu0
      %v2203 = vadd.f32 %v934, %v2202
      %v2204 = vpop.f32.mrb[0].mxu0
      %v2205 = vadd.f32 %v938, %v2204
      %v2206 = vpop.f32.mrb[0].mxu0
      %v2207 = vadd.f32 %v934, %v2206
      %v2208 = vpop.f32.mrb[0].mxu0
      %v2209 = vadd.f32 %v938, %v2208
      %2210 = vmatprep.mubr.bf16.mxu0 %v666
      %2211 = vmatmul.mubr.bf16.gmra.mrb[0].mxu0 %v665
      %v2212 = vpop.f32.mrb[0].mxu0
      %v2213 = vadd.f32 %v934, %v2212
      %v2214 = vpop.f32.mrb[0].mxu0
      %v2215 = vadd.f32 %v938, %v2214
      %v2216 = vpop.f32.mrb[0].mxu0
      %v2217 = vadd.f32 %v934, %v2216
      %v2218 = vpop.f32.mrb[0].mxu0
      %v2219 = vadd.f32 %v938, %v2218
      %2220 = vmatprep.mubr.bf16.mxu0 %v670
      %2221 = vmatmul.mubr.bf16.gmra.mrb[0].mxu0 %v669
      %v2222 = vpop.f32.mrb[0].mxu0
      %v2223 = vadd.f32 %v934, %v2222
      %v2224 = vpop.f32.mrb[0].mxu0
      %v2225 = vadd.f32 %v938, %v2224
      %v2226 = vpop.f32.mrb[0].mxu0
      %v2227 = vadd.f32 %v934, %v2226
      %v2228 = vpop.f32.mrb[0].mxu0
      %v2229 = vadd.f32 %v938, %v2228
      %2230 = vdwg.mxu0
      %2231 = vmatprep.subr.bf16.mxu0 %v1783
      %2232 = vmatpush1.bf16.msra.mxu0 %v1782
      %2233 = vmatprep.subr.bf16.mxu0 %v1790
      %2234 = vmatpush1.bf16.msra.mxu0 %v1789
      %2235 = vmatprep.subr.bf16.mxu0 %v1797
      %2236 = vmatpush1.bf16.msra.mxu0 %v1796
      %2237 = vmatprep.subr.bf16.mxu0 %v1804
      %2238 = vmatpush1.bf16.msra.mxu0 %v1803
      %2239 = vmatprep.subr.bf16.mxu0 %v1811
      %2240 = vmatpush1.bf16.msra.mxu0 %v1810
      %2241 = vmatprep.subr.bf16.mxu0 %v1818
      %2242 = vmatpush1.bf16.msra.mxu0 %v1817
      %2243 = vmatprep.subr.bf16.mxu0 %v1825
      %2244 = vmatpush1.bf16.msra.mxu0 %v1824
      %2245 = vmatprep.subr.bf16.mxu0 %v1832
      %2246 = vmatpush1.bf16.msra.mxu0 %v1831
      %2247 = vmatprep.subr.bf16.mxu0 %v1839
      %2248 = vmatpush1.bf16.msra.mxu0 %v1838
      %2249 = vmatprep.subr.bf16.mxu0 %v1846
      %2250 = vmatpush1.bf16.msra.mxu0 %v1845
      %2251 = vmatprep.subr.bf16.mxu0 %v1853
      %2252 = vmatpush1.bf16.msra.mxu0 %v1852
      %2253 = vmatprep.subr.bf16.mxu0 %v1860
      %2254 = vmatpush1.bf16.msra.mxu0 %v1859
      %2255 = vmatprep.subr.bf16.mxu0 %v1867
      %2256 = vmatpush1.bf16.msra.mxu0 %v1866
      %2257 = vmatprep.subr.bf16.mxu0 %v1874
      %2258 = vmatpush1.bf16.msra.mxu0 %v1873
      %2259 = vmatprep.subr.bf16.mxu0 %v1881
      %2260 = vmatpush1.bf16.msra.mxu0 %v1880
      %2261 = vmatprep.subr.bf16.mxu0 %v1888
      %2262 = vmatpush1.bf16.msra.mxu0 %v1887
      %2263 = vmatprep.mubr.bf16.mxu0 %v644
      %2264 = vmatmul.mubr.bf16.gmra.mrb[0].mxu0 %v643
      %v2265 = vpop.f32.mrb[0].mxu0
      %v2266 = vadd.f32 %v2153, %v2265
      %v2267 = vpop.f32.mrb[0].mxu0
      %v2268 = vadd.f32 %v2155, %v2267
      %v2269 = vpop.f32.mrb[0].mxu0
      %v2270 = vadd.f32 %v2157, %v2269
      %v2271 = vpop.f32.mrb[0].mxu0
      %v2272 = vadd.f32 %v2159, %v2271
      %2273 = vmatprep.mubr.bf16.mxu0 %v648
      %2274 = vmatmul.mubr.bf16.gmra.mrb[0].mxu0 %v647
      %v2275 = vpop.f32.mrb[0].mxu0
      %v2276 = vadd.f32 %v2163, %v2275
      %v2277 = vpop.f32.mrb[0].mxu0
      %v2278 = vadd.f32 %v2165, %v2277
      %v2279 = vpop.f32.mrb[0].mxu0
      %v2280 = vadd.f32 %v2167, %v2279
      %v2281 = vpop.f32.mrb[0].mxu0
      %v2282 = vadd.f32 %v2169, %v2281
      %2283 = vmatprep.mubr.bf16.mxu0 %v652
      %2284 = vmatmul.mubr.bf16.gmra.mrb[0].mxu0 %v651
      %v2285 = vpop.f32.mrb[0].mxu0
      %v2286 = vadd.f32 %v2173, %v2285
      %v2287 = vpop.f32.mrb[0].mxu0
      %v2288 = vadd.f32 %v2175, %v2287
      %v2289 = vpop.f32.mrb[0].mxu0
      %v2290 = vadd.f32 %v2177, %v2289
      %v2291 = vpop.f32.mrb[0].mxu0
      %v2292 = vadd.f32 %v2179, %v2291
      %2293 = vmatprep.mubr.bf16.mxu0 %v656
      %2294 = vmatmul.mubr.bf16.gmra.mrb[0].mxu0 %v655
      %v2295 = vpop.f32.mrb[0].mxu0
      %v2296 = vadd.f32 %v2183, %v2295
      %v2297 = vpop.f32.mrb[0].mxu0
      %v2298 = vadd.f32 %v2185, %v2297
      %v2299 = vpop.f32.mrb[0].mxu0
      %v2300 = vadd.f32 %v2187, %v2299
      %v2301 = vpop.f32.mrb[0].mxu0
      %v2302 = vadd.f32 %v2189, %v2301
      %2303 = vmatprep.mubr.bf16.mxu0 %v660
      %2304 = vmatmul.mubr.bf16.gmra.mrb[0].mxu0 %v659
      %v2305 = vpop.f32.mrb[0].mxu0
      %v2306 = vadd.f32 %v2193, %v2305
      %v2307 = vpop.f32.mrb[0].mxu0
      %v2308 = vadd.f32 %v2195, %v2307
      %v2309 = vpop.f32.mrb[0].mxu0
      %v2310 = vadd.f32 %v2197, %v2309
      %v2311 = vpop.f32.mrb[0].mxu0
      %v2312 = vadd.f32 %v2199, %v2311
      %2313 = vmatprep.mubr.bf16.mxu0 %v664
      %2314 = vmatmul.mubr.bf16.gmra.mrb[0].mxu0 %v663
      %v2315 = vpop.f32.mrb[0].mxu0
      %v2316 = vadd.f32 %v2203, %v2315
      %v2317 = vpop.f32.mrb[0].mxu0
      %v2318 = vadd.f32 %v2205, %v2317
      %v2319 = vpop.f32.mrb[0].mxu0
      %v2320 = vadd.f32 %v2207, %v2319
      %v2321 = vpop.f32.mrb[0].mxu0
      %v2322 = vadd.f32 %v2209, %v2321
      %2323 = vmatprep.mubr.bf16.mxu0 %v668
      %2324 = vmatmul.mubr.bf16.gmra.mrb[0].mxu0 %v667
      %v2325 = vpop.f32.mrb[0].mxu0
      %v2326 = vadd.f32 %v2213, %v2325
      %v2327 = vpop.f32.mrb[0].mxu0
      %v2328 = vadd.f32 %v2215, %v2327
      %v2329 = vpop.f32.mrb[0].mxu0
      %v2330 = vadd.f32 %v2217, %v2329
      %v2331 = vpop.f32.mrb[0].mxu0
      %v2332 = vadd.f32 %v2219, %v2331
      %2333 = vmatprep.mubr.bf16.mxu0 %v672
      %2334 = vmatmul.mubr.bf16.gmra.mrb[0].mxu0 %v671
      %v2335 = vpop.f32.mrb[0].mxu0
      %v2336 = vadd.f32 %v2223, %v2335
      %v2337 = vpop.f32.mrb[0].mxu0
      %v2338 = vadd.f32 %v2225, %v2337
      %v2339 = vpop.f32.mrb[0].mxu0
      %v2340 = vadd.f32 %v2227, %v2339
      %v2341 = vpop.f32.mrb[0].mxu0
      %v2342 = vadd.f32 %v2229, %v2341
      %2343 = vdwg.mxu0
      %2344 = vmatprep.subr.bf16.mxu0 %v1673
      %2345 = vmatpush1.bf16.msra.mxu0 %v1672
      %2346 = vmatprep.subr.bf16.mxu0 %v1680
      %2347 = vmatpush1.bf16.msra.mxu0 %v1679
      %2348 = vmatprep.subr.bf16.mxu0 %v1687
      %2349 = vmatpush1.bf16.msra.mxu0 %v1686
      %2350 = vmatprep.subr.bf16.mxu0 %v1694
      %2351 = vmatpush1.bf16.msra.mxu0 %v1693
      %2352 = vmatprep.subr.bf16.mxu0 %v1701
      %2353 = vmatpush1.bf16.msra.mxu0 %v1700
      %2354 = vmatprep.subr.bf16.mxu0 %v1708
      %2355 = vmatpush1.bf16.msra.mxu0 %v1707
      %2356 = vmatprep.subr.bf16.mxu0 %v1715
      %2357 = vmatpush1.bf16.msra.mxu0 %v1714
      %2358 = vmatprep.subr.bf16.mxu0 %v1722
      %2359 = vmatpush1.bf16.msra.mxu0 %v1721
      %2360 = vmatprep.subr.bf16.mxu0 %v1729
      %2361 = vmatpush1.bf16.msra.mxu0 %v1728
      %2362 = vmatprep.subr.bf16.mxu0 %v1736
      %2363 = vmatpush1.bf16.msra.mxu0 %v1735
      %2364 = vmatprep.subr.bf16.mxu0 %v1743
      %2365 = vmatpush1.bf16.msra.mxu0 %v1742
      %2366 = vmatprep.subr.bf16.mxu0 %v1750
      %2367 = vmatpush1.bf16.msra.mxu0 %v1749
      %2368 = vmatprep.subr.bf16.mxu0 %v1757
      %2369 = vmatpush1.bf16.msra.mxu0 %v1756
      %2370 = vmatprep.subr.bf16.mxu0 %v1764
      %2371 = vmatpush1.bf16.msra.mxu0 %v1763
      %2372 = vmatprep.subr.bf16.mxu0 %v1771
      %2373 = vmatpush1.bf16.msra.mxu0 %v1770
      %2374 = vmatprep.subr.bf16.mxu0 %v1778
      %2375 = vmatpush1.bf16.msra.mxu0 %v1777
      %2376 = vmatprep.mubr.bf16.mxu0 %v642
      %2377 = vmatmul.mubr.bf16.gmra.mrb[0].mxu0 %v641
      %v2378 = vpop.f32.mrb[0].mxu0
      %v2379 = vadd.f32 %v942, %v2378
      %v2380 = vpop.f32.mrb[0].mxu0
      %v2381 = vadd.f32 %v946, %v2380
      %v2382 = vpop.f32.mrb[0].mxu0
      %v2383 = vadd.f32 %v942, %v2382
      %v2384 = vpop.f32.mrb[0].mxu0
      %v2385 = vadd.f32 %v946, %v2384
      %2386 = vmatprep.mubr.bf16.mxu0 %v646
      %2387 = vmatmul.mubr.bf16.gmra.mrb[0].mxu0 %v645
      %v2388 = vpop.f32.mrb[0].mxu0
      %v2389 = vadd.f32 %v942, %v2388
      %v2390 = vpop.f32.mrb[0].mxu0
      %v2391 = vadd.f32 %v946, %v2390
      %v2392 = vpop.f32.mrb[0].mxu0
      %v2393 = vadd.f32 %v942, %v2392
      %v2394 = vpop.f32.mrb[0].mxu0
      %v2395 = vadd.f32 %v946, %v2394
      %2396 = vmatprep.mubr.bf16.mxu0 %v650
      %2397 = vmatmul.mubr.bf16.gmra.mrb[0].mxu0 %v649
      %v2398 = vpop.f32.mrb[0].mxu0
      %v2399 = vadd.f32 %v942, %v2398
      %v2400 = vpop.f32.mrb[0].mxu0
      %v2401 = vadd.f32 %v946, %v2400
      %v2402 = vpop.f32.mrb[0].mxu0
      %v2403 = vadd.f32 %v942, %v2402
      %v2404 = vpop.f32.mrb[0].mxu0
      %v2405 = vadd.f32 %v946, %v2404
      %2406 = vmatprep.mubr.bf16.mxu0 %v654
      %2407 = vmatmul.mubr.bf16.gmra.mrb[0].mxu0 %v653
      %v2408 = vpop.f32.mrb[0].mxu0
      %v2409 = vadd.f32 %v942, %v2408
      %v2410 = vpop.f32.mrb[0].mxu0
      %v2411 = vadd.f32 %v946, %v2410
      %v2412 = vpop.f32.mrb[0].mxu0
      %v2413 = vadd.f32 %v942, %v2412
      %v2414 = vpop.f32.mrb[0].mxu0
      %v2415 = vadd.f32 %v946, %v2414
      %2416 = vmatprep.mubr.bf16.mxu0 %v658
      %2417 = vmatmul.mubr.bf16.gmra.mrb[0].mxu0 %v657
      %v2418 = vpop.f32.mrb[0].mxu0
      %v2419 = vadd.f32 %v942, %v2418
      %v2420 = vpop.f32.mrb[0].mxu0
      %v2421 = vadd.f32 %v946, %v2420
      %v2422 = vpop.f32.mrb[0].mxu0
      %v2423 = vadd.f32 %v942, %v2422
      %v2424 = vpop.f32.mrb[0].mxu0
      %v2425 = vadd.f32 %v946, %v2424
      %2426 = vmatprep.mubr.bf16.mxu0 %v662
      %2427 = vmatmul.mubr.bf16.gmra.mrb[0].mxu0 %v661
      %v2428 = vpop.f32.mrb[0].mxu0
      %v2429 = vadd.f32 %v942, %v2428
      %v2430 = vpop.f32.mrb[0].mxu0
      %v2431 = vadd.f32 %v946, %v2430
      %v2432 = vpop.f32.mrb[0].mxu0
      %v2433 = vadd.f32 %v942, %v2432
      %v2434 = vpop.f32.mrb[0].mxu0
      %v2435 = vadd.f32 %v946, %v2434
      %2436 = vmatprep.mubr.bf16.mxu0 %v666
      %2437 = vmatmul.mubr.bf16.gmra.mrb[0].mxu0 %v665
      %v2438 = vpop.f32.mrb[0].mxu0
      %v2439 = vadd.f32 %v942, %v2438
      %v2440 = vpop.f32.mrb[0].mxu0
      %v2441 = vadd.f32 %v946, %v2440
      %v2442 = vpop.f32.mrb[0].mxu0
      %v2443 = vadd.f32 %v942, %v2442
      %v2444 = vpop.f32.mrb[0].mxu0
      %v2445 = vadd.f32 %v946, %v2444
      %2446 = vmatprep.mubr.bf16.mxu0 %v670
      %2447 = vmatmul.mubr.bf16.gmra.mrb[0].mxu0 %v669
      %v2448 = vpop.f32.mrb[0].mxu0
      %v2449 = vadd.f32 %v942, %v2448
      %v2450 = vpop.f32.mrb[0].mxu0
      %v2451 = vadd.f32 %v946, %v2450
      %v2452 = vpop.f32.mrb[0].mxu0
      %v2453 = vadd.f32 %v942, %v2452
      %v2454 = vpop.f32.mrb[0].mxu0
      %v2455 = vadd.f32 %v946, %v2454
      %2456 = vdwg.mxu0
      %2457 = vmatprep.subr.bf16.mxu0 %v1785
      %2458 = vmatpush1.bf16.msra.mxu0 %v1784
      %2459 = vmatprep.subr.bf16.mxu0 %v1792
      %2460 = vmatpush1.bf16.msra.mxu0 %v1791
      %2461 = vmatprep.subr.bf16.mxu0 %v1799
      %2462 = vmatpush1.bf16.msra.mxu0 %v1798
      %2463 = vmatprep.subr.bf16.mxu0 %v1806
      %2464 = vmatpush1.bf16.msra.mxu0 %v1805
      %2465 = vmatprep.subr.bf16.mxu0 %v1813
      %2466 = vmatpush1.bf16.msra.mxu0 %v1812
      %2467 = vmatprep.subr.bf16.mxu0 %v1820
      %2468 = vmatpush1.bf16.msra.mxu0 %v1819
      %2469 = vmatprep.subr.bf16.mxu0 %v1827
      %2470 = vmatpush1.bf16.msra.mxu0 %v1826
      %2471 = vmatprep.subr.bf16.mxu0 %v1834
      %2472 = vmatpush1.bf16.msra.mxu0 %v1833
      %2473 = vmatprep.subr.bf16.mxu0 %v1841
      %2474 = vmatpush1.bf16.msra.mxu0 %v1840
      %2475 = vmatprep.subr.bf16.mxu0 %v1848
      %2476 = vmatpush1.bf16.msra.mxu0 %v1847
      %2477 = vmatprep.subr.bf16.mxu0 %v1855
      %2478 = vmatpush1.bf16.msra.mxu0 %v1854
      %2479 = vmatprep.subr.bf16.mxu0 %v1862
      %2480 = vmatpush1.bf16.msra.mxu0 %v1861
      %2481 = vmatprep.subr.bf16.mxu0 %v1869
      %2482 = vmatpush1.bf16.msra.mxu0 %v1868
      %2483 = vmatprep.subr.bf16.mxu0 %v1876
      %2484 = vmatpush1.bf16.msra.mxu0 %v1875
      %2485 = vmatprep.subr.bf16.mxu0 %v1883
      %2486 = vmatpush1.bf16.msra.mxu0 %v1882
      %2487 = vmatprep.subr.bf16.mxu0 %v1890
      %2488 = vmatpush1.bf16.msra.mxu0 %v1889
      %2489 = vmatprep.mubr.bf16.mxu0 %v644
      %2490 = vmatmul.mubr.bf16.gmra.mrb[0].mxu0 %v643
      %v2491 = vpop.f32.mrb[0].mxu0
      %v2492 = vadd.f32 %v2379, %v2491
      %v2493 = vpop.f32.mrb[0].mxu0
      %v2494 = vadd.f32 %v2381, %v2493
      %v2495 = vpop.f32.mrb[0].mxu0
      %v2496 = vadd.f32 %v2383, %v2495
      %v2497 = vpop.f32.mrb[0].mxu0
      %v2498 = vadd.f32 %v2385, %v2497
      %2499 = vmatprep.mubr.bf16.mxu0 %v648
      %2500 = vmatmul.mubr.bf16.gmra.mrb[0].mxu0 %v647
      %v2501 = vpop.f32.mrb[0].mxu0
      %v2502 = vadd.f32 %v2389, %v2501
      %v2503 = vpop.f32.mrb[0].mxu0
      %v2504 = vadd.f32 %v2391, %v2503
      %v2505 = vpop.f32.mrb[0].mxu0
      %v2506 = vadd.f32 %v2393, %v2505
      %v2507 = vpop.f32.mrb[0].mxu0
      %v2508 = vadd.f32 %v2395, %v2507
      %2509 = vmatprep.mubr.bf16.mxu0 %v652
      %2510 = vmatmul.mubr.bf16.gmra.mrb[0].mxu0 %v651
      %v2511 = vpop.f32.mrb[0].mxu0
      %v2512 = vadd.f32 %v2399, %v2511
      %v2513 = vpop.f32.mrb[0].mxu0
      %v2514 = vadd.f32 %v2401, %v2513
      %v2515 = vpop.f32.mrb[0].mxu0
      %v2516 = vadd.f32 %v2403, %v2515
      %v2517 = vpop.f32.mrb[0].mxu0
      %v2518 = vadd.f32 %v2405, %v2517
      %2519 = vmatprep.mubr.bf16.mxu0 %v656
      %2520 = vmatmul.mubr.bf16.gmra.mrb[0].mxu0 %v655
      %v2521 = vpop.f32.mrb[0].mxu0
      %v2522 = vadd.f32 %v2409, %v2521
      %v2523 = vpop.f32.mrb[0].mxu0
      %v2524 = vadd.f32 %v2411, %v2523
      %v2525 = vpop.f32.mrb[0].mxu0
      %v2526 = vadd.f32 %v2413, %v2525
      %v2527 = vpop.f32.mrb[0].mxu0
      %v2528 = vadd.f32 %v2415, %v2527
      %2529 = vmatprep.mubr.bf16.mxu0 %v660
      %2530 = vmatmul.mubr.bf16.gmra.mrb[0].mxu0 %v659
      %v2531 = vpop.f32.mrb[0].mxu0
      %v2532 = vadd.f32 %v2419, %v2531
      %v2533 = vpop.f32.mrb[0].mxu0
      %v2534 = vadd.f32 %v2421, %v2533
      %v2535 = vpop.f32.mrb[0].mxu0
      %v2536 = vadd.f32 %v2423, %v2535
      %v2537 = vpop.f32.mrb[0].mxu0
      %v2538 = vadd.f32 %v2425, %v2537
      %2539 = vmatprep.mubr.bf16.mxu0 %v664
      %2540 = vmatmul.mubr.bf16.gmra.mrb[0].mxu0 %v663
      %v2541 = vpop.f32.mrb[0].mxu0
      %v2542 = vadd.f32 %v2429, %v2541
      %v2543 = vpop.f32.mrb[0].mxu0
      %v2544 = vadd.f32 %v2431, %v2543
      %v2545 = vpop.f32.mrb[0].mxu0
      %v2546 = vadd.f32 %v2433, %v2545
      %v2547 = vpop.f32.mrb[0].mxu0
      %v2548 = vadd.f32 %v2435, %v2547
      %2549 = vmatprep.mubr.bf16.mxu0 %v668
      %2550 = vmatmul.mubr.bf16.gmra.mrb[0].mxu0 %v667
      %v2551 = vpop.f32.mrb[0].mxu0
      %v2552 = vadd.f32 %v2439, %v2551
      %v2553 = vpop.f32.mrb[0].mxu0
      %v2554 = vadd.f32 %v2441, %v2553
      %v2555 = vpop.f32.mrb[0].mxu0
      %v2556 = vadd.f32 %v2443, %v2555
      %v2557 = vpop.f32.mrb[0].mxu0
      %v2558 = vadd.f32 %v2445, %v2557
      %2559 = vmatprep.mubr.bf16.mxu0 %v672
      %2560 = vmatmul.mubr.bf16.gmra.mrb[0].mxu0 %v671
      %v2561 = vpop.f32.mrb[0].mxu0
      %v2562 = vadd.f32 %v2449, %v2561
      %v2563 = vpop.f32.mrb[0].mxu0
      %v2564 = vadd.f32 %v2451, %v2563
      %v2565 = vpop.f32.mrb[0].mxu0
      %v2566 = vadd.f32 %v2453, %v2565
      %v2567 = vpop.f32.mrb[0].mxu0
      %v2568 = vadd.f32 %v2455, %v2567
      %2569 = vdwg.mxu0
      %2570 = vmatprep.subr.bf16.mxu0 %v1675
      %2571 = vmatpush1.bf16.msra.mxu0 %v1674
      %2572 = vmatprep.subr.bf16.mxu0 %v1682
      %2573 = vmatpush1.bf16.msra.mxu0 %v1681
      %2574 = vmatprep.subr.bf16.mxu0 %v1689
      %2575 = vmatpush1.bf16.msra.mxu0 %v1688
      %2576 = vmatprep.subr.bf16.mxu0 %v1696
      %2577 = vmatpush1.bf16.msra.mxu0 %v1695
      %2578 = vmatprep.subr.bf16.mxu0 %v1703
      %2579 = vmatpush1.bf16.msra.mxu0 %v1702
      %2580 = vmatprep.subr.bf16.mxu0 %v1710
      %2581 = vmatpush1.bf16.msra.mxu0 %v1709
      %2582 = vmatprep.subr.bf16.mxu0 %v1717
      %2583 = vmatpush1.bf16.msra.mxu0 %v1716
      %2584 = vmatprep.subr.bf16.mxu0 %v1724
      %2585 = vmatpush1.bf16.msra.mxu0 %v1723
      %2586 = vmatprep.subr.bf16.mxu0 %v1731
      %2587 = vmatpush1.bf16.msra.mxu0 %v1730
      %2588 = vmatprep.subr.bf16.mxu0 %v1738
      %2589 = vmatpush1.bf16.msra.mxu0 %v1737
      %2590 = vmatprep.subr.bf16.mxu0 %v1745
      %2591 = vmatpush1.bf16.msra.mxu0 %v1744
      %2592 = vmatprep.subr.bf16.mxu0 %v1752
      %2593 = vmatpush1.bf16.msra.mxu0 %v1751
      %2594 = vmatprep.subr.bf16.mxu0 %v1759
      %2595 = vmatpush1.bf16.msra.mxu0 %v1758
      %2596 = vmatprep.subr.bf16.mxu0 %v1766
      %2597 = vmatpush1.bf16.msra.mxu0 %v1765
      %2598 = vmatprep.subr.bf16.mxu0 %v1773
      %2599 = vmatpush1.bf16.msra.mxu0 %v1772
      %2600 = vmatprep.subr.bf16.mxu0 %v1780
      %2601 = vmatpush1.bf16.msra.mxu0 %v1779
      %2602 = vmatprep.mubr.bf16.mxu0 %v642
      %2603 = vmatmul.mubr.bf16.gmra.mrb[0].mxu0 %v641
      %v2604 = vpop.f32.mrb[0].mxu0
      %v2605 = vadd.f32 %v950, %v2604
      %v2606 = vpop.f32.mrb[0].mxu0
      %v2607 = vadd.f32 %v954, %v2606
      %v2608 = vpop.f32.mrb[0].mxu0
      %v2609 = vadd.f32 %v950, %v2608
      %v2610 = vpop.f32.mrb[0].mxu0
      %v2611 = vadd.f32 %v954, %v2610
      %2612 = vmatprep.mubr.bf16.mxu0 %v646
      %2613 = vmatmul.mubr.bf16.gmra.mrb[0].mxu0 %v645
      %v2614 = vpop.f32.mrb[0].mxu0
      %v2615 = vadd.f32 %v950, %v2614
      %v2616 = vpop.f32.mrb[0].mxu0
      %v2617 = vadd.f32 %v954, %v2616
      %v2618 = vpop.f32.mrb[0].mxu0
      %v2619 = vadd.f32 %v950, %v2618
      %v2620 = vpop.f32.mrb[0].mxu0
      %v2621 = vadd.f32 %v954, %v2620
      %2622 = vmatprep.mubr.bf16.mxu0 %v650
      %2623 = vmatmul.mubr.bf16.gmra.mrb[0].mxu0 %v649
      %v2624 = vpop.f32.mrb[0].mxu0
      %v2625 = vadd.f32 %v950, %v2624
      %v2626 = vpop.f32.mrb[0].mxu0
      %v2627 = vadd.f32 %v954, %v2626
      %v2628 = vpop.f32.mrb[0].mxu0
      %v2629 = vadd.f32 %v950, %v2628
      %v2630 = vpop.f32.mrb[0].mxu0
      %v2631 = vadd.f32 %v954, %v2630
      %2632 = vmatprep.mubr.bf16.mxu0 %v654
      %2633 = vmatmul.mubr.bf16.gmra.mrb[0].mxu0 %v653
      %v2634 = vpop.f32.mrb[0].mxu0
      %v2635 = vadd.f32 %v950, %v2634
      %v2636 = vpop.f32.mrb[0].mxu0
      %v2637 = vadd.f32 %v954, %v2636
      %v2638 = vpop.f32.mrb[0].mxu0
      %v2639 = vadd.f32 %v950, %v2638
      %v2640 = vpop.f32.mrb[0].mxu0
      %v2641 = vadd.f32 %v954, %v2640
      %2642 = vmatprep.mubr.bf16.mxu0 %v658
      %2643 = vmatmul.mubr.bf16.gmra.mrb[0].mxu0 %v657
      %v2644 = vpop.f32.mrb[0].mxu0
      %v2645 = vadd.f32 %v950, %v2644
      %v2646 = vpop.f32.mrb[0].mxu0
      %v2647 = vadd.f32 %v954, %v2646
      %v2648 = vpop.f32.mrb[0].mxu0
      %v2649 = vadd.f32 %v950, %v2648
      %v2650 = vpop.f32.mrb[0].mxu0
      %v2651 = vadd.f32 %v954, %v2650
      %2652 = vmatprep.mubr.bf16.mxu0 %v662
      %2653 = vmatmul.mubr.bf16.gmra.mrb[0].mxu0 %v661
      %v2654 = vpop.f32.mrb[0].mxu0
      %v2655 = vadd.f32 %v950, %v2654
      %v2656 = vpop.f32.mrb[0].mxu0
      %v2657 = vadd.f32 %v954, %v2656
      %v2658 = vpop.f32.mrb[0].mxu0
      %v2659 = vadd.f32 %v950, %v2658
      %v2660 = vpop.f32.mrb[0].mxu0
      %v2661 = vadd.f32 %v954, %v2660
      %2662 = vmatprep.mubr.bf16.mxu0 %v666
      %2663 = vmatmul.mubr.bf16.gmra.mrb[0].mxu0 %v665
      %v2664 = vpop.f32.mrb[0].mxu0
      %v2665 = vadd.f32 %v950, %v2664
      %v2666 = vpop.f32.mrb[0].mxu0
      %v2667 = vadd.f32 %v954, %v2666
      %v2668 = vpop.f32.mrb[0].mxu0
      %v2669 = vadd.f32 %v950, %v2668
      %v2670 = vpop.f32.mrb[0].mxu0
      %v2671 = vadd.f32 %v954, %v2670
      %2672 = vmatprep.mubr.bf16.mxu0 %v670
      %2673 = vmatmul.mubr.bf16.gmra.mrb[0].mxu0 %v669
      %v2674 = vpop.f32.mrb[0].mxu0
      %v2675 = vadd.f32 %v950, %v2674
      %v2676 = vpop.f32.mrb[0].mxu0
      %v2677 = vadd.f32 %v954, %v2676
      %v2678 = vpop.f32.mrb[0].mxu0
      %v2679 = vadd.f32 %v950, %v2678
      %v2680 = vpop.f32.mrb[0].mxu0
      %v2681 = vadd.f32 %v954, %v2680
      %2682 = vdwg.mxu0
      %2683 = vmatprep.subr.bf16.mxu0 %v1787
      %2684 = vmatpush1.bf16.msra.mxu0 %v1786
      %2685 = vmatprep.subr.bf16.mxu0 %v1794
      %2686 = vmatpush1.bf16.msra.mxu0 %v1793
      %2687 = vmatprep.subr.bf16.mxu0 %v1801
      %2688 = vmatpush1.bf16.msra.mxu0 %v1800
      %2689 = vmatprep.subr.bf16.mxu0 %v1808
      %2690 = vmatpush1.bf16.msra.mxu0 %v1807
      %2691 = vmatprep.subr.bf16.mxu0 %v1815
      %2692 = vmatpush1.bf16.msra.mxu0 %v1814
      %2693 = vmatprep.subr.bf16.mxu0 %v1822
      %2694 = vmatpush1.bf16.msra.mxu0 %v1821
      %2695 = vmatprep.subr.bf16.mxu0 %v1829
      %2696 = vmatpush1.bf16.msra.mxu0 %v1828
      %2697 = vmatprep.subr.bf16.mxu0 %v1836
      %2698 = vmatpush1.bf16.msra.mxu0 %v1835
      %2699 = vmatprep.subr.bf16.mxu0 %v1843
      %2700 = vmatpush1.bf16.msra.mxu0 %v1842
      %2701 = vmatprep.subr.bf16.mxu0 %v1850
      %2702 = vmatpush1.bf16.msra.mxu0 %v1849
      %2703 = vmatprep.subr.bf16.mxu0 %v1857
      %2704 = vmatpush1.bf16.msra.mxu0 %v1856
      %2705 = vmatprep.subr.bf16.mxu0 %v1864
      %2706 = vmatpush1.bf16.msra.mxu0 %v1863
      %2707 = vmatprep.subr.bf16.mxu0 %v1871
      %2708 = vmatpush1.bf16.msra.mxu0 %v1870
      %2709 = vmatprep.subr.bf16.mxu0 %v1878
      %2710 = vmatpush1.bf16.msra.mxu0 %v1877
      %2711 = vmatprep.subr.bf16.mxu0 %v1885
      %2712 = vmatpush1.bf16.msra.mxu0 %v1884
      %2713 = vmatprep.subr.bf16.mxu0 %v1892
      %2714 = vmatpush1.bf16.msra.mxu0 %v1891
      %2715 = vmatprep.mubr.bf16.mxu0 %v644
      %2716 = vmatmul.mubr.bf16.gmra.mrb[0].mxu0 %v643
      %v2717 = vpop.f32.mrb[0].mxu0
      %v2718 = vadd.f32 %v2605, %v2717
      %v2719 = vpop.f32.mrb[0].mxu0
      %v2720 = vadd.f32 %v2607, %v2719
      %v2721 = vpop.f32.mrb[0].mxu0
      %v2722 = vadd.f32 %v2609, %v2721
      %v2723 = vpop.f32.mrb[0].mxu0
      %v2724 = vadd.f32 %v2611, %v2723
      %2725 = vmatprep.mubr.bf16.mxu0 %v648
      %2726 = vmatmul.mubr.bf16.gmra.mrb[0].mxu0 %v647
      %v2727 = vpop.f32.mrb[0].mxu0
      %v2728 = vadd.f32 %v2615, %v2727
      %v2729 = vpop.f32.mrb[0].mxu0
      %v2730 = vadd.f32 %v2617, %v2729
      %v2731 = vpop.f32.mrb[0].mxu0
      %v2732 = vadd.f32 %v2619, %v2731
      %v2733 = vpop.f32.mrb[0].mxu0
      %v2734 = vadd.f32 %v2621, %v2733
      %2735 = vmatprep.mubr.bf16.mxu0 %v652
      %2736 = vmatmul.mubr.bf16.gmra.mrb[0].mxu0 %v651
      %v2737 = vpop.f32.mrb[0].mxu0
      %v2738 = vadd.f32 %v2625, %v2737
      %v2739 = vpop.f32.mrb[0].mxu0
      %v2740 = vadd.f32 %v2627, %v2739
      %v2741 = vpop.f32.mrb[0].mxu0
      %v2742 = vadd.f32 %v2629, %v2741
      %v2743 = vpop.f32.mrb[0].mxu0
      %v2744 = vadd.f32 %v2631, %v2743
      %2745 = vmatprep.mubr.bf16.mxu0 %v656
      %2746 = vmatmul.mubr.bf16.gmra.mrb[0].mxu0 %v655
      %v2747 = vpop.f32.mrb[0].mxu0
      %v2748 = vadd.f32 %v2635, %v2747
      %v2749 = vpop.f32.mrb[0].mxu0
      %v2750 = vadd.f32 %v2637, %v2749
      %v2751 = vpop.f32.mrb[0].mxu0
      %v2752 = vadd.f32 %v2639, %v2751
      %v2753 = vpop.f32.mrb[0].mxu0
      %v2754 = vadd.f32 %v2641, %v2753
      %2755 = vmatprep.mubr.bf16.mxu0 %v660
      %2756 = vmatmul.mubr.bf16.gmra.mrb[0].mxu0 %v659
      %v2757 = vpop.f32.mrb[0].mxu0
      %v2758 = vadd.f32 %v2645, %v2757
      %v2759 = vpop.f32.mrb[0].mxu0
      %v2760 = vadd.f32 %v2647, %v2759
      %v2761 = vpop.f32.mrb[0].mxu0
      %v2762 = vadd.f32 %v2649, %v2761
      %v2763 = vpop.f32.mrb[0].mxu0
      %v2764 = vadd.f32 %v2651, %v2763
      %2765 = vmatprep.mubr.bf16.mxu0 %v664
      %2766 = vmatmul.mubr.bf16.gmra.mrb[0].mxu0 %v663
      %v2767 = vpop.f32.mrb[0].mxu0
      %v2768 = vadd.f32 %v2655, %v2767
      %v2769 = vpop.f32.mrb[0].mxu0
      %v2770 = vadd.f32 %v2657, %v2769
      %v2771 = vpop.f32.mrb[0].mxu0
      %v2772 = vadd.f32 %v2659, %v2771
      %v2773 = vpop.f32.mrb[0].mxu0
      %v2774 = vadd.f32 %v2661, %v2773
      %2775 = vmatprep.mubr.bf16.mxu0 %v668
      %2776 = vmatmul.mubr.bf16.gmra.mrb[0].mxu0 %v667
      %v2777 = vpop.f32.mrb[0].mxu0
      %v2778 = vadd.f32 %v2665, %v2777
      %v2779 = vpop.f32.mrb[0].mxu0
      %v2780 = vadd.f32 %v2667, %v2779
      %v2781 = vpop.f32.mrb[0].mxu0
      %v2782 = vadd.f32 %v2669, %v2781
      %v2783 = vpop.f32.mrb[0].mxu0
      %v2784 = vadd.f32 %v2671, %v2783
      %2785 = vmatprep.mubr.bf16.mxu0 %v672
      %2786 = vmatmul.mubr.bf16.gmra.mrb[0].mxu0 %v671
      %v2787 = vpop.f32.mrb[0].mxu0
      %v2788 = vadd.f32 %v2675, %v2787
      %v2789 = vpop.f32.mrb[0].mxu0
      %v2790 = vadd.f32 %v2677, %v2789
      %v2791 = vpop.f32.mrb[0].mxu0
      %v2792 = vadd.f32 %v2679, %v2791
      %v2793 = vpop.f32.mrb[0].mxu0
      %v2794 = vadd.f32 %v2681, %v2793
      %2795 = vdwg.mxu0
      %2796 = vmatprep.subr.bf16.mxu0 0
      %2797 = vmatpush1.bf16.msra.mxu0 %v1676
      %2798 = vmatprep.subr.bf16.mxu0 0
      %2799 = vmatpush1.bf16.msra.mxu0 %v1683
      %2800 = vmatprep.subr.bf16.mxu0 0
      %2801 = vmatpush1.bf16.msra.mxu0 %v1690
      %2802 = vmatprep.subr.bf16.mxu0 0
      %2803 = vmatpush1.bf16.msra.mxu0 %v1697
      %2804 = vmatprep.subr.bf16.mxu0 0
      %2805 = vmatpush1.bf16.msra.mxu0 %v1704
      %2806 = vmatprep.subr.bf16.mxu0 0
      %2807 = vmatpush1.bf16.msra.mxu0 %v1711
      %2808 = vmatprep.subr.bf16.mxu0 0
      %2809 = vmatpush1.bf16.msra.mxu0 %v1718
      %2810 = vmatprep.subr.bf16.mxu0 0
      %2811 = vmatpush1.bf16.msra.mxu0 %v1725
      %2812 = vmatprep.subr.bf16.mxu0 0
      %2813 = vmatpush1.bf16.msra.mxu0 %v1732
      %2814 = vmatprep.subr.bf16.mxu0 0
      %2815 = vmatpush1.bf16.msra.mxu0 %v1739
      %2816 = vmatprep.subr.bf16.mxu0 0
      %2817 = vmatpush1.bf16.msra.mxu0 %v1746
      %2818 = vmatprep.subr.bf16.mxu0 0
      %2819 = vmatpush1.bf16.msra.mxu0 %v1753
      %2820 = vmatprep.subr.bf16.mxu0 0
      %2821 = vmatpush1.bf16.msra.mxu0 %v1760
      %2822 = vmatprep.subr.bf16.mxu0 0
      %2823 = vmatpush1.bf16.msra.mxu0 %v1767
      %2824 = vmatprep.subr.bf16.mxu0 0
      %2825 = vmatpush1.bf16.msra.mxu0 %v1774
      %2826 = vmatprep.subr.bf16.mxu0 0
      %2827 = vmatpush1.bf16.msra.mxu0 %v1781
      %2828 = vmatprep.mubr.bf16.mxu0 %v642
      %2829 = vmatmul.mubr.bf16.gmra.mrb[0].mxu0 %v641
      %v2830 = vpop.f32.mrb[0].mxu0
      %v2831 = vadd.f32 %v958, %v2830
      %v2832 = vpop.f32.mrb[0].mxu0
      %v2833 = vpop.f32.mrb[0].mxu0
      %v2834 = vadd.f32 %v958, %v2833
      %v2835 = vpop.f32.mrb[0].mxu0
      %2836 = vmatprep.mubr.bf16.mxu0 %v646
      %2837 = vmatmul.mubr.bf16.gmra.mrb[0].mxu0 %v645
      %v2838 = vpop.f32.mrb[0].mxu0
      %v2839 = vadd.f32 %v958, %v2838
      %v2840 = vpop.f32.mrb[0].mxu0
      %v2841 = vpop.f32.mrb[0].mxu0
      %v2842 = vadd.f32 %v958, %v2841
      %v2843 = vpop.f32.mrb[0].mxu0
      %2844 = vmatprep.mubr.bf16.mxu0 %v650
      %2845 = vmatmul.mubr.bf16.gmra.mrb[0].mxu0 %v649
      %v2846 = vpop.f32.mrb[0].mxu0
      %v2847 = vadd.f32 %v958, %v2846
      %v2848 = vpop.f32.mrb[0].mxu0
      %v2849 = vpop.f32.mrb[0].mxu0
      %v2850 = vadd.f32 %v958, %v2849
      %v2851 = vpop.f32.mrb[0].mxu0
      %2852 = vmatprep.mubr.bf16.mxu0 %v654
      %2853 = vmatmul.mubr.bf16.gmra.mrb[0].mxu0 %v653
      %v2854 = vpop.f32.mrb[0].mxu0
      %v2855 = vadd.f32 %v958, %v2854
      %v2856 = vpop.f32.mrb[0].mxu0
      %v2857 = vpop.f32.mrb[0].mxu0
      %v2858 = vadd.f32 %v958, %v2857
      %v2859 = vpop.f32.mrb[0].mxu0
      %2860 = vmatprep.mubr.bf16.mxu0 %v658
      %2861 = vmatmul.mubr.bf16.gmra.mrb[0].mxu0 %v657
      %v2862 = vpop.f32.mrb[0].mxu0
      %v2863 = vadd.f32 %v958, %v2862
      %v2864 = vpop.f32.mrb[0].mxu0
      %v2865 = vpop.f32.mrb[0].mxu0
      %v2866 = vadd.f32 %v958, %v2865
      %v2867 = vpop.f32.mrb[0].mxu0
      %2868 = vmatprep.mubr.bf16.mxu0 %v662
      %2869 = vmatmul.mubr.bf16.gmra.mrb[0].mxu0 %v661
      %v2870 = vpop.f32.mrb[0].mxu0
      %v2871 = vadd.f32 %v958, %v2870
      %v2872 = vpop.f32.mrb[0].mxu0
      %v2873 = vpop.f32.mrb[0].mxu0
      %v2874 = vadd.f32 %v958, %v2873
      %v2875 = vpop.f32.mrb[0].mxu0
      %2876 = vmatprep.mubr.bf16.mxu0 %v666
      %2877 = vmatmul.mubr.bf16.gmra.mrb[0].mxu0 %v665
      %v2878 = vpop.f32.mrb[0].mxu0
      %v2879 = vadd.f32 %v958, %v2878
      %v2880 = vpop.f32.mrb[0].mxu0
      %v2881 = vpop.f32.mrb[0].mxu0
      %v2882 = vadd.f32 %v958, %v2881
      %v2883 = vpop.f32.mrb[0].mxu0
      %2884 = vmatprep.mubr.bf16.mxu0 %v670
      %2885 = vmatmul.mubr.bf16.gmra.mrb[0].mxu0 %v669
      %v2886 = vpop.f32.mrb[0].mxu0
      %v2887 = vadd.f32 %v958, %v2886
      %v2888 = vpop.f32.mrb[0].mxu0
      %v2889 = vpop.f32.mrb[0].mxu0
      %v2890 = vadd.f32 %v958, %v2889
      %v2891 = vpop.f32.mrb[0].mxu0
      %2892 = vdwg.mxu0
      %2893 = vmatprep.subr.bf16.mxu0 0
      %2894 = vmatpush1.bf16.msra.mxu0 %v1788
      %2895 = vmatprep.subr.bf16.mxu0 0
      %2896 = vmatpush1.bf16.msra.mxu0 %v1795
      %2897 = vmatprep.subr.bf16.mxu0 0
      %2898 = vmatpush1.bf16.msra.mxu0 %v1802
      %2899 = vmatprep.subr.bf16.mxu0 0
      %2900 = vmatpush1.bf16.msra.mxu0 %v1809
      %2901 = vmatprep.subr.bf16.mxu0 0
      %2902 = vmatpush1.bf16.msra.mxu0 %v1816
      %2903 = vmatprep.subr.bf16.mxu0 0
      %2904 = vmatpush1.bf16.msra.mxu0 %v1823
      %2905 = vmatprep.subr.bf16.mxu0 0
      %2906 = vmatpush1.bf16.msra.mxu0 %v1830
      %2907 = vmatprep.subr.bf16.mxu0 0
      %2908 = vmatpush1.bf16.msra.mxu0 %v1837
      %2909 = vmatprep.subr.bf16.mxu0 0
      %2910 = vmatpush1.bf16.msra.mxu0 %v1844
      %2911 = vmatprep.subr.bf16.mxu0 0
      %2912 = vmatpush1.bf16.msra.mxu0 %v1851
      %2913 = vmatprep.subr.bf16.mxu0 0
      %2914 = vmatpush1.bf16.msra.mxu0 %v1858
      %2915 = vmatprep.subr.bf16.mxu0 0
      %2916 = vmatpush1.bf16.msra.mxu0 %v1865
      %2917 = vmatprep.subr.bf16.mxu0 0
      %2918 = vmatpush1.bf16.msra.mxu0 %v1872
      %2919 = vmatprep.subr.bf16.mxu0 0
      %2920 = vmatpush1.bf16.msra.mxu0 %v1879
      %2921 = vmatprep.subr.bf16.mxu0 0
      %2922 = vmatpush1.bf16.msra.mxu0 %v1886
      %2923 = vmatprep.subr.bf16.mxu0 0
      %2924 = vmatpush1.bf16.msra.mxu0 %v1893
      %2925 = vmatprep.mubr.bf16.mxu0 %v644
      %2926 = vmatmul.mubr.bf16.gmra.mrb[0].mxu0 %v643
      %v2927 = vpop.f32.mrb[0].mxu0
      %v2928 = vadd.f32 %v2831, %v2927
      %v2929 = vpop.f32.mrb[0].mxu0
      %v2930 = vpop.f32.mrb[0].mxu0
      %v2931 = vadd.f32 %v2834, %v2930
      %v2932 = vpop.f32.mrb[0].mxu0
      %2933 = vmatprep.mubr.bf16.mxu0 %v648
      %2934 = vmatmul.mubr.bf16.gmra.mrb[0].mxu0 %v647
      %v2935 = vpop.f32.mrb[0].mxu0
      %v2936 = vadd.f32 %v2839, %v2935
      %v2937 = vpop.f32.mrb[0].mxu0
      %v2938 = vpop.f32.mrb[0].mxu0
      %v2939 = vadd.f32 %v2842, %v2938
      %v2940 = vpop.f32.mrb[0].mxu0
      %2941 = vmatprep.mubr.bf16.mxu0 %v652
      %2942 = vmatmul.mubr.bf16.gmra.mrb[0].mxu0 %v651
      %v2943 = vpop.f32.mrb[0].mxu0
      %v2944 = vadd.f32 %v2847, %v2943
      %v2945 = vpop.f32.mrb[0].mxu0
      %v2946 = vpop.f32.mrb[0].mxu0
      %v2947 = vadd.f32 %v2850, %v2946
      %v2948 = vpop.f32.mrb[0].mxu0
      %2949 = vmatprep.mubr.bf16.mxu0 %v656
      %2950 = vmatmul.mubr.bf16.gmra.mrb[0].mxu0 %v655
      %v2951 = vpop.f32.mrb[0].mxu0
      %v2952 = vadd.f32 %v2855, %v2951
      %v2953 = vpop.f32.mrb[0].mxu0
      %v2954 = vpop.f32.mrb[0].mxu0
      %v2955 = vadd.f32 %v2858, %v2954
      %v2956 = vpop.f32.mrb[0].mxu0
      %2957 = vmatprep.mubr.bf16.mxu0 %v660
      %2958 = vmatmul.mubr.bf16.gmra.mrb[0].mxu0 %v659
      %v2959 = vpop.f32.mrb[0].mxu0
      %v2960 = vadd.f32 %v2863, %v2959
      %v2961 = vpop.f32.mrb[0].mxu0
      %v2962 = vpop.f32.mrb[0].mxu0
      %v2963 = vadd.f32 %v2866, %v2962
      %v2964 = vpop.f32.mrb[0].mxu0
      %2965 = vmatprep.mubr.bf16.mxu0 %v664
      %2966 = vmatmul.mubr.bf16.gmra.mrb[0].mxu0 %v663
      %v2967 = vpop.f32.mrb[0].mxu0
      %v2968 = vadd.f32 %v2871, %v2967
      %v2969 = vpop.f32.mrb[0].mxu0
      %v2970 = vpop.f32.mrb[0].mxu0
      %v2971 = vadd.f32 %v2874, %v2970
      %v2972 = vpop.f32.mrb[0].mxu0
      %2973 = vmatprep.mubr.bf16.mxu0 %v668
      %2974 = vmatmul.mubr.bf16.gmra.mrb[0].mxu0 %v667
      %v2975 = vpop.f32.mrb[0].mxu0
      %v2976 = vadd.f32 %v2879, %v2975
      %v2977 = vpop.f32.mrb[0].mxu0
      %v2978 = vpop.f32.mrb[0].mxu0
      %v2979 = vadd.f32 %v2882, %v2978
      %v2980 = vpop.f32.mrb[0].mxu0
      %2981 = vmatprep.mubr.bf16.mxu0 %v672
      %2982 = vmatmul.mubr.bf16.gmra.mrb[0].mxu0 %v671
      %v2983 = vpop.f32.mrb[0].mxu0
      %v2984 = vadd.f32 %v2887, %v2983
      %v2985 = vpop.f32.mrb[0].mxu0
      %v2986 = vpop.f32.mrb[0].mxu0
      %v2987 = vadd.f32 %v2890, %v2986
      %v2988 = vpop.f32.mrb[0].mxu0
      %2989 = vdwg.mxu0
      %v2990 = vmul.f32 %v2266, 0.5
      %v2991 = vmul.f32 %v2268, 0.5
      %v2992 = vmul.f32 %v2492, 0.5
      %v2993 = vmul.f32 %v2494, 0.5
      %v2994 = vmul.f32 %v2718, 0.5
      %v2995 = vmul.f32 %v2720, 0.5
      %v2996 = vmul.f32 %v2928, 0.5
      %v2997 = vmul.f32 %v2270, 0.5
      %v2998 = vmul.f32 %v2272, 0.5
      %v2999 = vmul.f32 %v2496, 0.5
      %v3000 = vmul.f32 %v2498, 0.5
      %v3001 = vmul.f32 %v2722, 0.5
      %v3002 = vmul.f32 %v2724, 0.5
      %v3003 = vmul.f32 %v2931, 0.5
      %v3004 = vmul.f32 %v2276, 0.5
      %v3005 = vmul.f32 %v2278, 0.5
      %v3006 = vmul.f32 %v2502, 0.5
      %v3007 = vmul.f32 %v2504, 0.5
      %v3008 = vmul.f32 %v2728, 0.5
      %v3009 = vmul.f32 %v2730, 0.5
      %v3010 = vmul.f32 %v2936, 0.5
      %v3011 = vmul.f32 %v2280, 0.5
      %v3012 = vmul.f32 %v2282, 0.5
      %v3013 = vmul.f32 %v2506, 0.5
      %v3014 = vmul.f32 %v2508, 0.5
      %v3015 = vmul.f32 %v2732, 0.5
      %v3016 = vmul.f32 %v2734, 0.5
      %v3017 = vmul.f32 %v2939, 0.5
      %v3018 = vmul.f32 %v2286, 0.5
      %v3019 = vmul.f32 %v2288, 0.5
      %v3020 = vmul.f32 %v2512, 0.5
      %v3021 = vmul.f32 %v2514, 0.5
      %v3022 = vmul.f32 %v2738, 0.5
      %v3023 = vmul.f32 %v2740, 0.5
      %v3024 = vmul.f32 %v2944, 0.5
      %v3025 = vmul.f32 %v2290, 0.5
      %v3026 = vmul.f32 %v2292, 0.5
      %v3027 = vmul.f32 %v2516, 0.5
      %v3028 = vmul.f32 %v2518, 0.5
      %v3029 = vmul.f32 %v2742, 0.5
      %v3030 = vmul.f32 %v2744, 0.5
      %v3031 = vmul.f32 %v2947, 0.5
      %v3032 = vmul.f32 %v2296, 0.5
      %v3033 = vmul.f32 %v2298, 0.5
      %v3034 = vmul.f32 %v2522, 0.5
      %v3035 = vmul.f32 %v2524, 0.5
      %v3036 = vmul.f32 %v2748, 0.5
      %v3037 = vmul.f32 %v2750, 0.5
      %v3038 = vmul.f32 %v2952, 0.5
      %v3039 = vmul.f32 %v2300, 0.5
      %v3040 = vmul.f32 %v2302, 0.5
      %v3041 = vmul.f32 %v2526, 0.5
      %v3042 = vmul.f32 %v2528, 0.5
      %v3043 = vmul.f32 %v2752, 0.5
      %v3044 = vmul.f32 %v2754, 0.5
      %v3045 = vmul.f32 %v2955, 0.5
      %v3046 = vmul.f32 %v2306, 0.5
      %v3047 = vmul.f32 %v2308, 0.5
      %v3048 = vmul.f32 %v2532, 0.5
      %v3049 = vmul.f32 %v2534, 0.5
      %v3050 = vmul.f32 %v2758, 0.5
      %v3051 = vmul.f32 %v2760, 0.5
      %v3052 = vmul.f32 %v2960, 0.5
      %v3053 = vmul.f32 %v2310, 0.5
      %v3054 = vmul.f32 %v2312, 0.5
      %v3055 = vmul.f32 %v2536, 0.5
      %v3056 = vmul.f32 %v2538, 0.5
      %v3057 = vmul.f32 %v2762, 0.5
      %v3058 = vmul.f32 %v2764, 0.5
      %v3059 = vmul.f32 %v2963, 0.5
      %v3060 = vmul.f32 %v2316, 0.5
      %v3061 = vmul.f32 %v2318, 0.5
      %v3062 = vmul.f32 %v2542, 0.5
      %v3063 = vmul.f32 %v2544, 0.5
      %v3064 = vmul.f32 %v2768, 0.5
      %v3065 = vmul.f32 %v2770, 0.5
      %v3066 = vmul.f32 %v2968, 0.5
      %v3067 = vmul.f32 %v2320, 0.5
      %v3068 = vmul.f32 %v2322, 0.5
      %v3069 = vmul.f32 %v2546, 0.5
      %v3070 = vmul.f32 %v2548, 0.5
      %v3071 = vmul.f32 %v2772, 0.5
      %v3072 = vmul.f32 %v2774, 0.5
      %v3073 = vmul.f32 %v2971, 0.5
      %v3074 = vmul.f32 %v2326, 0.5
      %v3075 = vmul.f32 %v2328, 0.5
      %v3076 = vmul.f32 %v2552, 0.5
      %v3077 = vmul.f32 %v2554, 0.5
      %v3078 = vmul.f32 %v2778, 0.5
      %v3079 = vmul.f32 %v2780, 0.5
      %v3080 = vmul.f32 %v2976, 0.5
      %v3081 = vmul.f32 %v2330, 0.5
      %v3082 = vmul.f32 %v2332, 0.5
      %v3083 = vmul.f32 %v2556, 0.5
      %v3084 = vmul.f32 %v2558, 0.5
      %v3085 = vmul.f32 %v2782, 0.5
      %v3086 = vmul.f32 %v2784, 0.5
      %v3087 = vmul.f32 %v2979, 0.5
      %v3088 = vmul.f32 %v2336, 0.5
      %v3089 = vmul.f32 %v2338, 0.5
      %v3090 = vmul.f32 %v2562, 0.5
      %v3091 = vmul.f32 %v2564, 0.5
      %v3092 = vmul.f32 %v2788, 0.5
      %v3093 = vmul.f32 %v2790, 0.5
      %v3094 = vmul.f32 %v2984, 0.5
      %v3095 = vmul.f32 %v2340, 0.5
      %v3096 = vmul.f32 %v2342, 0.5
      %v3097 = vmul.f32 %v2566, 0.5
      %v3098 = vmul.f32 %v2568, 0.5
      %v3099 = vmul.f32 %v2792, 0.5
      %v3100 = vmul.f32 %v2794, 0.5
      %v3101 = vmul.f32 %v2987, 0.5
      %v3102 = vtanh.pop %v2990
      %v3103 = vtanh.pop %v2991
      %v3104 = vtanh.pop %v2992
      %v3105 = vtanh.pop %v2993
      %v3106 = vtanh.pop %v2994
      %v3107 = vtanh.pop %v2995
      %v3108 = vtanh.pop %v2996
      %v3109 = vtanh.pop %v2997
      %v3110 = vtanh.pop %v2998
      %v3111 = vtanh.pop %v2999
      %v3112 = vtanh.pop %v3000
      %v3113 = vtanh.pop %v3001
      %v3114 = vtanh.pop %v3002
      %v3115 = vtanh.pop %v3003
      %v3116 = vtanh.pop %v3004
      %v3117 = vtanh.pop %v3005
      %v3118 = vtanh.pop %v3006
      %v3119 = vtanh.pop %v3007
      %v3120 = vtanh.pop %v3008
      %v3121 = vtanh.pop %v3009
      %v3122 = vtanh.pop %v3010
      %v3123 = vtanh.pop %v3011
      %v3124 = vtanh.pop %v3012
      %v3125 = vtanh.pop %v3013
      %v3126 = vtanh.pop %v3014
      %v3127 = vtanh.pop %v3015
      %v3128 = vtanh.pop %v3016
      %v3129 = vtanh.pop %v3017
      %v3130 = vtanh.pop %v3018
      %v3131 = vtanh.pop %v3019
      %v3132 = vtanh.pop %v3020
      %v3133 = vtanh.pop %v3021
      %v3134 = vtanh.pop %v3022
      %v3135 = vtanh.pop %v3023
      %v3136 = vtanh.pop %v3024
      %v3137 = vtanh.pop %v3025
      %v3138 = vtanh.pop %v3026
      %v3139 = vtanh.pop %v3027
      %v3140 = vtanh.pop %v3028
      %v3141 = vtanh.pop %v3029
      %v3142 = vtanh.pop %v3030
      %v3143 = vtanh.pop %v3031
      %v3144 = vtanh.pop %v3032
      %v3145 = vtanh.pop %v3033
      %v3146 = vtanh.pop %v3034
      %v3147 = vtanh.pop %v3035
      %v3148 = vtanh.pop %v3036
      %v3149 = vtanh.pop %v3037
      %v3150 = vtanh.pop %v3038
      %v3151 = vtanh.pop %v3039
      %v3152 = vtanh.pop %v3040
      %v3153 = vtanh.pop %v3041
      %v3154 = vtanh.pop %v3042
      %v3155 = vtanh.pop %v3043
      %v3156 = vtanh.pop %v3044
      %v3157 = vtanh.pop %v3045
      %v3158 = vtanh.pop %v3046
      %v3159 = vtanh.pop %v3047
      %v3160 = vtanh.pop %v3048
      %v3161 = vtanh.pop %v3049
      %v3162 = vtanh.pop %v3050
      %v3163 = vtanh.pop %v3051
      %v3164 = vtanh.pop %v3052
      %v3165 = vtanh.pop %v3053
      %v3166 = vtanh.pop %v3054
      %v3167 = vtanh.pop %v3055
      %v3168 = vtanh.pop %v3056
      %v3169 = vtanh.pop %v3057
      %v3170 = vtanh.pop %v3058
      %v3171 = vtanh.pop %v3059
      %v3172 = vtanh.pop %v3060
      %v3173 = vtanh.pop %v3061
      %v3174 = vtanh.pop %v3062
      %v3175 = vtanh.pop %v3063
      %v3176 = vtanh.pop %v3064
      %v3177 = vtanh.pop %v3065
      %v3178 = vtanh.pop %v3066
      %v3179 = vtanh.pop %v3067
      %v3180 = vtanh.pop %v3068
      %v3181 = vtanh.pop %v3069
      %v3182 = vtanh.pop %v3070
      %v3183 = vtanh.pop %v3071
      %v3184 = vtanh.pop %v3072
      %v3185 = vtanh.pop %v3073
      %v3186 = vtanh.pop %v3074
      %v3187 = vtanh.pop %v3075
      %v3188 = vtanh.pop %v3076
      %v3189 = vtanh.pop %v3077
      %v3190 = vtanh.pop %v3078
      %v3191 = vtanh.pop %v3079
      %v3192 = vtanh.pop %v3080
      %v3193 = vtanh.pop %v3081
      %v3194 = vtanh.pop %v3082
      %v3195 = vtanh.pop %v3083
      %v3196 = vtanh.pop %v3084
      %v3197 = vtanh.pop %v3085
      %v3198 = vtanh.pop %v3086
      %v3199 = vtanh.pop %v3087
      %v3200 = vtanh.pop %v3088
      %v3201 = vtanh.pop %v3089
      %v3202 = vtanh.pop %v3090
      %v3203 = vtanh.pop %v3091
      %v3204 = vtanh.pop %v3092
      %v3205 = vtanh.pop %v3093
      %v3206 = vtanh.pop %v3094
      %v3207 = vtanh.pop %v3095
      %v3208 = vtanh.pop %v3096
      %v3209 = vtanh.pop %v3097
      %v3210 = vtanh.pop %v3098
      %v3211 = vtanh.pop %v3099
      %v3212 = vtanh.pop %v3100
      %v3213 = vtanh.pop %v3101
      %v3214 = vadd.f32 %v3102, 1.0
      %v3215 = vadd.f32 %v3103, 1.0
      %v3216 = vadd.f32 %v3104, 1.0
      %v3217 = vadd.f32 %v3105, 1.0
      %v3218 = vadd.f32 %v3106, 1.0
      %v3219 = vadd.f32 %v3107, 1.0
      %v3220 = vadd.f32 %v3108, 1.0
      %v3221 = vadd.f32 %v3109, 1.0
      %v3222 = vadd.f32 %v3110, 1.0
      %v3223 = vadd.f32 %v3111, 1.0
      %v3224 = vadd.f32 %v3112, 1.0
      %v3225 = vadd.f32 %v3113, 1.0
      %v3226 = vadd.f32 %v3114, 1.0
      %v3227 = vadd.f32 %v3115, 1.0
      %v3228 = vadd.f32 %v3116, 1.0
      %v3229 = vadd.f32 %v3117, 1.0
      %v3230 = vadd.f32 %v3118, 1.0
      %v3231 = vadd.f32 %v3119, 1.0
      %v3232 = vadd.f32 %v3120, 1.0
      %v3233 = vadd.f32 %v3121, 1.0
      %v3234 = vadd.f32 %v3122, 1.0
      %v3235 = vadd.f32 %v3123, 1.0
      %v3236 = vadd.f32 %v3124, 1.0
      %v3237 = vadd.f32 %v3125, 1.0
      %v3238 = vadd.f32 %v3126, 1.0
      %v3239 = vadd.f32 %v3127, 1.0
      %v3240 = vadd.f32 %v3128, 1.0
      %v3241 = vadd.f32 %v3129, 1.0
      %v3242 = vadd.f32 %v3130, 1.0
      %v3243 = vadd.f32 %v3131, 1.0
      %v3244 = vadd.f32 %v3132, 1.0
      %v3245 = vadd.f32 %v3133, 1.0
      %v3246 = vadd.f32 %v3134, 1.0
      %v3247 = vadd.f32 %v3135, 1.0
      %v3248 = vadd.f32 %v3136, 1.0
      %v3249 = vadd.f32 %v3137, 1.0
      %v3250 = vadd.f32 %v3138, 1.0
      %v3251 = vadd.f32 %v3139, 1.0
      %v3252 = vadd.f32 %v3140, 1.0
      %v3253 = vadd.f32 %v3141, 1.0
      %v3254 = vadd.f32 %v3142, 1.0
      %v3255 = vadd.f32 %v3143, 1.0
      %v3256 = vadd.f32 %v3144, 1.0
      %v3257 = vadd.f32 %v3145, 1.0
      %v3258 = vadd.f32 %v3146, 1.0
      %v3259 = vadd.f32 %v3147, 1.0
      %v3260 = vadd.f32 %v3148, 1.0
      %v3261 = vadd.f32 %v3149, 1.0
      %v3262 = vadd.f32 %v3150, 1.0
      %v3263 = vadd.f32 %v3151, 1.0
      %v3264 = vadd.f32 %v3152, 1.0
      %v3265 = vadd.f32 %v3153, 1.0
      %v3266 = vadd.f32 %v3154, 1.0
      %v3267 = vadd.f32 %v3155, 1.0
      %v3268 = vadd.f32 %v3156, 1.0
      %v3269 = vadd.f32 %v3157, 1.0
      %v3270 = vadd.f32 %v3158, 1.0
      %v3271 = vadd.f32 %v3159, 1.0
      %v3272 = vadd.f32 %v3160, 1.0
      %v3273 = vadd.f32 %v3161, 1.0
      %v3274 = vadd.f32 %v3162, 1.0
      %v3275 = vadd.f32 %v3163, 1.0
      %v3276 = vadd.f32 %v3164, 1.0
      %v3277 = vadd.f32 %v3165, 1.0
      %v3278 = vadd.f32 %v3166, 1.0
      %v3279 = vadd.f32 %v3167, 1.0
      %v3280 = vadd.f32 %v3168, 1.0
      %v3281 = vadd.f32 %v3169, 1.0
      %v3282 = vadd.f32 %v3170, 1.0
      %v3283 = vadd.f32 %v3171, 1.0
      %v3284 = vadd.f32 %v3172, 1.0
      %v3285 = vadd.f32 %v3173, 1.0
      %v3286 = vadd.f32 %v3174, 1.0
      %v3287 = vadd.f32 %v3175, 1.0
      %v3288 = vadd.f32 %v3176, 1.0
      %v3289 = vadd.f32 %v3177, 1.0
      %v3290 = vadd.f32 %v3178, 1.0
      %v3291 = vadd.f32 %v3179, 1.0
      %v3292 = vadd.f32 %v3180, 1.0
      %v3293 = vadd.f32 %v3181, 1.0
      %v3294 = vadd.f32 %v3182, 1.0
      %v3295 = vadd.f32 %v3183, 1.0
      %v3296 = vadd.f32 %v3184, 1.0
      %v3297 = vadd.f32 %v3185, 1.0
      %v3298 = vadd.f32 %v3186, 1.0
      %v3299 = vadd.f32 %v3187, 1.0
      %v3300 = vadd.f32 %v3188, 1.0
      %v3301 = vadd.f32 %v3189, 1.0
      %v3302 = vadd.f32 %v3190, 1.0
      %v3303 = vadd.f32 %v3191, 1.0
      %v3304 = vadd.f32 %v3192, 1.0
      %v3305 = vadd.f32 %v3193, 1.0
      %v3306 = vadd.f32 %v3194, 1.0
      %v3307 = vadd.f32 %v3195, 1.0
      %v3308 = vadd.f32 %v3196, 1.0
      %v3309 = vadd.f32 %v3197, 1.0
      %v3310 = vadd.f32 %v3198, 1.0
      %v3311 = vadd.f32 %v3199, 1.0
      %v3312 = vadd.f32 %v3200, 1.0
      %v3313 = vadd.f32 %v3201, 1.0
      %v3314 = vadd.f32 %v3202, 1.0
      %v3315 = vadd.f32 %v3203, 1.0
      %v3316 = vadd.f32 %v3204, 1.0
      %v3317 = vadd.f32 %v3205, 1.0
      %v3318 = vadd.f32 %v3206, 1.0
      %v3319 = vadd.f32 %v3207, 1.0
      %v3320 = vadd.f32 %v3208, 1.0
      %v3321 = vadd.f32 %v3209, 1.0
      %v3322 = vadd.f32 %v3210, 1.0
      %v3323 = vadd.f32 %v3211, 1.0
      %v3324 = vadd.f32 %v3212, 1.0
      %v3325 = vadd.f32 %v3213, 1.0
      %v3326 = vmul.f32 %v3214, 0.5
      %v3327 = vmul.f32 %v3215, 0.5
      %v3328 = vmul.f32 %v3216, 0.5
      %v3329 = vmul.f32 %v3217, 0.5
      %v3330 = vmul.f32 %v3218, 0.5
      %v3331 = vmul.f32 %v3219, 0.5
      %v3332 = vmul.f32 %v3220, 0.5
      %v3333 = vmul.f32 %v3221, 0.5
      %v3334 = vmul.f32 %v3222, 0.5
      %v3335 = vmul.f32 %v3223, 0.5
      %v3336 = vmul.f32 %v3224, 0.5
      %v3337 = vmul.f32 %v3225, 0.5
      %v3338 = vmul.f32 %v3226, 0.5
      %v3339 = vmul.f32 %v3227, 0.5
      %v3340 = vmul.f32 %v3228, 0.5
      %v3341 = vmul.f32 %v3229, 0.5
      %v3342 = vmul.f32 %v3230, 0.5
      %v3343 = vmul.f32 %v3231, 0.5
      %v3344 = vmul.f32 %v3232, 0.5
      %v3345 = vmul.f32 %v3233, 0.5
      %v3346 = vmul.f32 %v3234, 0.5
      %v3347 = vmul.f32 %v3235, 0.5
      %v3348 = vmul.f32 %v3236, 0.5
      %v3349 = vmul.f32 %v3237, 0.5
      %v3350 = vmul.f32 %v3238, 0.5
      %v3351 = vmul.f32 %v3239, 0.5
      %v3352 = vmul.f32 %v3240, 0.5
      %v3353 = vmul.f32 %v3241, 0.5
      %v3354 = vmul.f32 %v3242, 0.5
      %v3355 = vmul.f32 %v3243, 0.5
      %v3356 = vmul.f32 %v3244, 0.5
      %v3357 = vmul.f32 %v3245, 0.5
      %v3358 = vmul.f32 %v3246, 0.5
      %v3359 = vmul.f32 %v3247, 0.5
      %v3360 = vmul.f32 %v3248, 0.5
      %v3361 = vmul.f32 %v3249, 0.5
      %v3362 = vmul.f32 %v3250, 0.5
      %v3363 = vmul.f32 %v3251, 0.5
      %v3364 = vmul.f32 %v3252, 0.5
      %v3365 = vmul.f32 %v3253, 0.5
      %v3366 = vmul.f32 %v3254, 0.5
      %v3367 = vmul.f32 %v3255, 0.5
      %v3368 = vmul.f32 %v3256, 0.5
      %v3369 = vmul.f32 %v3257, 0.5
      %v3370 = vmul.f32 %v3258, 0.5
      %v3371 = vmul.f32 %v3259, 0.5
      %v3372 = vmul.f32 %v3260, 0.5
      %v3373 = vmul.f32 %v3261, 0.5
      %v3374 = vmul.f32 %v3262, 0.5
      %v3375 = vmul.f32 %v3263, 0.5
      %v3376 = vmul.f32 %v3264, 0.5
      %v3377 = vmul.f32 %v3265, 0.5
      %v3378 = vmul.f32 %v3266, 0.5
      %v3379 = vmul.f32 %v3267, 0.5
      %v3380 = vmul.f32 %v3268, 0.5
      %v3381 = vmul.f32 %v3269, 0.5
      %v3382 = vmul.f32 %v3270, 0.5
      %v3383 = vmul.f32 %v3271, 0.5
      %v3384 = vmul.f32 %v3272, 0.5
      %v3385 = vmul.f32 %v3273, 0.5
      %v3386 = vmul.f32 %v3274, 0.5
      %v3387 = vmul.f32 %v3275, 0.5
      %v3388 = vmul.f32 %v3276, 0.5
      %v3389 = vmul.f32 %v3277, 0.5
      %v3390 = vmul.f32 %v3278, 0.5
      %v3391 = vmul.f32 %v3279, 0.5
      %v3392 = vmul.f32 %v3280, 0.5
      %v3393 = vmul.f32 %v3281, 0.5
      %v3394 = vmul.f32 %v3282, 0.5
      %v3395 = vmul.f32 %v3283, 0.5
      %v3396 = vmul.f32 %v3284, 0.5
      %v3397 = vmul.f32 %v3285, 0.5
      %v3398 = vmul.f32 %v3286, 0.5
      %v3399 = vmul.f32 %v3287, 0.5
      %v3400 = vmul.f32 %v3288, 0.5
      %v3401 = vmul.f32 %v3289, 0.5
      %v3402 = vmul.f32 %v3290, 0.5
      %v3403 = vmul.f32 %v3291, 0.5
      %v3404 = vmul.f32 %v3292, 0.5
      %v3405 = vmul.f32 %v3293, 0.5
      %v3406 = vmul.f32 %v3294, 0.5
      %v3407 = vmul.f32 %v3295, 0.5
      %v3408 = vmul.f32 %v3296, 0.5
      %v3409 = vmul.f32 %v3297, 0.5
      %v3410 = vmul.f32 %v3298, 0.5
      %v3411 = vmul.f32 %v3299, 0.5
      %v3412 = vmul.f32 %v3300, 0.5
      %v3413 = vmul.f32 %v3301, 0.5
      %v3414 = vmul.f32 %v3302, 0.5
      %v3415 = vmul.f32 %v3303, 0.5
      %v3416 = vmul.f32 %v3304, 0.5
      %v3417 = vmul.f32 %v3305, 0.5
      %v3418 = vmul.f32 %v3306, 0.5
      %v3419 = vmul.f32 %v3307, 0.5
      %v3420 = vmul.f32 %v3308, 0.5
      %v3421 = vmul.f32 %v3309, 0.5
      %v3422 = vmul.f32 %v3310, 0.5
      %v3423 = vmul.f32 %v3311, 0.5
      %v3424 = vmul.f32 %v3312, 0.5
      %v3425 = vmul.f32 %v3313, 0.5
      %v3426 = vmul.f32 %v3314, 0.5
      %v3427 = vmul.f32 %v3315, 0.5
      %v3428 = vmul.f32 %v3316, 0.5
      %v3429 = vmul.f32 %v3317, 0.5
      %v3430 = vmul.f32 %v3318, 0.5
      %v3431 = vmul.f32 %v3319, 0.5
      %v3432 = vmul.f32 %v3320, 0.5
      %v3433 = vmul.f32 %v3321, 0.5
      %v3434 = vmul.f32 %v3322, 0.5
      %v3435 = vmul.f32 %v3323, 0.5
      %v3436 = vmul.f32 %v3324, 0.5
      %v3437 = vmul.f32 %v3325, 0.5
      %3438 = vst [vmem:[%s228] sm:$0xff] %v3326
      %3439 = vst [vmem:[%s228 + $0x8] sm:$0xff] %v3327
      %3440 = vst [vmem:[%s228 + $0x10] sm:$0xff] %v3328
      %3441 = vst [vmem:[%s228 + $0x18] sm:$0xff] %v3329
      %3442 = vst [vmem:[%s228 + $0x20] sm:$0xff] %v3330
      %3443 = vst [vmem:[%s228 + $0x28] sm:$0xff] %v3331
      %vm3444 = vcmask 130048
      %3445 = vst.msk [vmem:[%s228 + $0x30] sm:$0xff] %vm3444, %v3332
      %3446 = vst [vmem:[%s228 + $0x38] sm:$0xff] %v3333
      %3447 = vst [vmem:[%s228 + $0x40] sm:$0xff] %v3334
      %3448 = vst [vmem:[%s228 + $0x48] sm:$0xff] %v3335
      %3449 = vst [vmem:[%s228 + $0x50] sm:$0xff] %v3336
      %3450 = vst [vmem:[%s228 + $0x58] sm:$0xff] %v3337
      %3451 = vst [vmem:[%s228 + $0x60] sm:$0xff] %v3338
      %3452 = vst.msk [vmem:[%s228 + $0x68] sm:$0xff] %vm3444, %v3339
      %3453 = vst [vmem:[%s228 + $0x70] sm:$0xff] %v3340
      %3454 = vst [vmem:[%s228 + $0x78] sm:$0xff] %v3341
      %3455 = vst [vmem:[%s228 + $0x80] sm:$0xff] %v3342
      %3456 = vst [vmem:[%s228 + $0x88] sm:$0xff] %v3343
      %3457 = vst [vmem:[%s228 + $0x90] sm:$0xff] %v3344
      %3458 = vst [vmem:[%s228 + $0x98] sm:$0xff] %v3345
      %3459 = vst.msk [vmem:[%s228 + $0xa0] sm:$0xff] %vm3444, %v3346
      %3460 = vst [vmem:[%s228 + $0xa8] sm:$0xff] %v3347
      %3461 = vst [vmem:[%s228 + $0xb0] sm:$0xff] %v3348
      %3462 = vst [vmem:[%s228 + $0xb8] sm:$0xff] %v3349
      %3463 = vst [vmem:[%s228 + $0xc0] sm:$0xff] %v3350
      %3464 = vst [vmem:[%s228 + $0xc8] sm:$0xff] %v3351
      %3465 = vst [vmem:[%s228 + $0xd0] sm:$0xff] %v3352
      %3466 = vst.msk [vmem:[%s228 + $0xd8] sm:$0xff] %vm3444, %v3353
      %3467 = vst [vmem:[%s228 + $0xe0] sm:$0xff] %v3354
      %3468 = vst [vmem:[%s228 + $0xe8] sm:$0xff] %v3355
      %3469 = vst [vmem:[%s228 + $0xf0] sm:$0xff] %v3356
      %3470 = vst [vmem:[%s228 + $0xf8] sm:$0xff] %v3357
      %3471 = vst [vmem:[%s228 + $0x100] sm:$0xff] %v3358
      %3472 = vst [vmem:[%s228 + $0x108] sm:$0xff] %v3359
      %3473 = vst.msk [vmem:[%s228 + $0x110] sm:$0xff] %vm3444, %v3360
      %3474 = vst [vmem:[%s228 + $0x118] sm:$0xff] %v3361
      %3475 = vst [vmem:[%s228 + $0x120] sm:$0xff] %v3362
      %3476 = vst [vmem:[%s228 + $0x128] sm:$0xff] %v3363
      %3477 = vst [vmem:[%s228 + $0x130] sm:$0xff] %v3364
      %3478 = vst [vmem:[%s228 + $0x138] sm:$0xff] %v3365
      %3479 = vst [vmem:[%s228 + $0x140] sm:$0xff] %v3366
      %3480 = vst.msk [vmem:[%s228 + $0x148] sm:$0xff] %vm3444, %v3367
      %3481 = vst [vmem:[%s228 + $0x150] sm:$0xff] %v3368
      %3482 = vst [vmem:[%s228 + $0x158] sm:$0xff] %v3369
      %3483 = vst [vmem:[%s228 + $0x160] sm:$0xff] %v3370
      %3484 = vst [vmem:[%s228 + $0x168] sm:$0xff] %v3371
      %3485 = vst [vmem:[%s228 + $0x170] sm:$0xff] %v3372
      %3486 = vst [vmem:[%s228 + $0x178] sm:$0xff] %v3373
      %3487 = vst.msk [vmem:[%s228 + $0x180] sm:$0xff] %vm3444, %v3374
      %3488 = vst [vmem:[%s228 + $0x188] sm:$0xff] %v3375
      %3489 = vst [vmem:[%s228 + $0x190] sm:$0xff] %v3376
      %3490 = vst [vmem:[%s228 + $0x198] sm:$0xff] %v3377
      %3491 = vst [vmem:[%s228 + $0x1a0] sm:$0xff] %v3378
      %3492 = vst [vmem:[%s228 + $0x1a8] sm:$0xff] %v3379
      %3493 = vst [vmem:[%s228 + $0x1b0] sm:$0xff] %v3380
      %3494 = vst.msk [vmem:[%s228 + $0x1b8] sm:$0xff] %vm3444, %v3381
      %3495 = vst [vmem:[%s228 + $0x1c0] sm:$0xff] %v3382
      %3496 = vst [vmem:[%s228 + $0x1c8] sm:$0xff] %v3383
      %3497 = vst [vmem:[%s228 + $0x1d0] sm:$0xff] %v3384
      %3498 = vst [vmem:[%s228 + $0x1d8] sm:$0xff] %v3385
      %3499 = vst [vmem:[%s228 + $0x1e0] sm:$0xff] %v3386
      %3500 = vst [vmem:[%s228 + $0x1e8] sm:$0xff] %v3387
      %3501 = vst.msk [vmem:[%s228 + $0x1f0] sm:$0xff] %vm3444, %v3388
      %3502 = vst [vmem:[%s228 + $0x1f8] sm:$0xff] %v3389
      %3503 = vst [vmem:[%s228 + $0x200] sm:$0xff] %v3390
      %3504 = vst [vmem:[%s228 + $0x208] sm:$0xff] %v3391
      %3505 = vst [vmem:[%s228 + $0x210] sm:$0xff] %v3392
      %3506 = vst [vmem:[%s228 + $0x218] sm:$0xff] %v3393
      %3507 = vst [vmem:[%s228 + $0x220] sm:$0xff] %v3394
      %3508 = vst.msk [vmem:[%s228 + $0x228] sm:$0xff] %vm3444, %v3395
      %3509 = vst [vmem:[%s228 + $0x230] sm:$0xff] %v3396
      %3510 = vst [vmem:[%s228 + $0x238] sm:$0xff] %v3397
      %3511 = vst [vmem:[%s228 + $0x240] sm:$0xff] %v3398
      %3512 = vst [vmem:[%s228 + $0x248] sm:$0xff] %v3399
      %3513 = vst [vmem:[%s228 + $0x250] sm:$0xff] %v3400
      %3514 = vst [vmem:[%s228 + $0x258] sm:$0xff] %v3401
      %3515 = vst.msk [vmem:[%s228 + $0x260] sm:$0xff] %vm3444, %v3402
      %3516 = vst [vmem:[%s228 + $0x268] sm:$0xff] %v3403
      %3517 = vst [vmem:[%s228 + $0x270] sm:$0xff] %v3404
      %3518 = vst [vmem:[%s228 + $0x278] sm:$0xff] %v3405
      %3519 = vst [vmem:[%s228 + $0x280] sm:$0xff] %v3406
      %3520 = vst [vmem:[%s228 + $0x288] sm:$0xff] %v3407
      %3521 = vst [vmem:[%s228 + $0x290] sm:$0xff] %v3408
      %3522 = vst.msk [vmem:[%s228 + $0x298] sm:$0xff] %vm3444, %v3409
      %3523 = vst [vmem:[%s228 + $0x2a0] sm:$0xff] %v3410
      %3524 = vst [vmem:[%s228 + $0x2a8] sm:$0xff] %v3411
      %3525 = vst [vmem:[%s228 + $0x2b0] sm:$0xff] %v3412
      %3526 = vst [vmem:[%s228 + $0x2b8] sm:$0xff] %v3413
      %3527 = vst [vmem:[%s228 + $0x2c0] sm:$0xff] %v3414
      %3528 = vst [vmem:[%s228 + $0x2c8] sm:$0xff] %v3415
      %3529 = vst.msk [vmem:[%s228 + $0x2d0] sm:$0xff] %vm3444, %v3416
      %3530 = vst [vmem:[%s228 + $0x2d8] sm:$0xff] %v3417
      %3531 = vst [vmem:[%s228 + $0x2e0] sm:$0xff] %v3418
      %3532 = vst [vmem:[%s228 + $0x2e8] sm:$0xff] %v3419
      %3533 = vst [vmem:[%s228 + $0x2f0] sm:$0xff] %v3420
      %3534 = vst [vmem:[%s228 + $0x2f8] sm:$0xff] %v3421
      %3535 = vst [vmem:[%s228 + $0x300] sm:$0xff] %v3422
      %3536 = vst.msk [vmem:[%s228 + $0x308] sm:$0xff] %vm3444, %v3423
      %3537 = vst [vmem:[%s228 + $0x310] sm:$0xff] %v3424
      %3538 = vst [vmem:[%s228 + $0x318] sm:$0xff] %v3425
      %3539 = vst [vmem:[%s228 + $0x320] sm:$0xff] %v3426
      %3540 = vst [vmem:[%s228 + $0x328] sm:$0xff] %v3427
      %3541 = vst [vmem:[%s228 + $0x330] sm:$0xff] %v3428
      %3542 = vst [vmem:[%s228 + $0x338] sm:$0xff] %v3429
      %3543 = vst.msk [vmem:[%s228 + $0x340] sm:$0xff] %vm3444, %v3430
      %3544 = vst [vmem:[%s228 + $0x348] sm:$0xff] %v3431
      %3545 = vst [vmem:[%s228 + $0x350] sm:$0xff] %v3432
      %3546 = vst [vmem:[%s228 + $0x358] sm:$0xff] %v3433
      %3547 = vst [vmem:[%s228 + $0x360] sm:$0xff] %v3434
      %3548 = vst [vmem:[%s228 + $0x368] sm:$0xff] %v3435
      %3549 = vst [vmem:[%s228 + $0x370] sm:$0xff] %v3436
      %3550 = vst.msk [vmem:[%s228 + $0x378] sm:$0xff] %vm3444, %v3437
      %s3551 = smul.u32 16, %s16
      %p3552 = scmp.lt.s32.totalorder %s3551, 31
      %s3553 = scalar_select %p3552, %s3551, 31
      %s3554 = smul.addr %s3553, 7
      %s3555 = smul.addr %s3554, 8
      %s3556 = scalar_lea.vmem %s5, %s3555
      // Predicated region
      $region41: #{decoder_forward.1} parent=39 // pred_check
        %p3557 = pneg %p144
      $region42: #{decoder_forward.1} parent=39 // pred_check_branch
        %3559 = sbr.rel (%p3557) target = $region44
      $region43: #{decoder_forward.1} parent=39 // pred_region
        %s3560 = smul.u32 16, %s16
      $region44: #{decoder_forward.1} parent=39 // pred_fallthru
        _
    $region40: #{decoder_forward.1} parent=5 // pred_fallthru
      _
    %p3561 = scmp.le.s32.totalorder 2, %s11
    // Predicated region
    $region45: #{decoder_forward.1} parent=5 // pred_check
      %p3562 = pneg %p3561
    $region46: #{decoder_forward.1} parent=5 // pred_check_branch
      %3564 = sbr.rel (%p3562) target = $region48
    $region47: #{decoder_forward.1} parent=5 // pred_region
      %s3565 = ssub.s32 %s11, 2
      // Predicated region
      $region49: #{decoder_forward.1} parent=47 // pred_check
        %p3566 = pneg %p150
      $region50: #{decoder_forward.1} parent=47 // pred_check_branch
        %3568 = sbr.rel (%p3566) target = $region52
      $region51: #{decoder_forward.1} parent=47 // pred_region
        %s3569 = smul.u32 16, %s17
        %p3570 = scmp.lt.s32.totalorder %s3569, 31
        %s3571 = scalar_select %p3570, %s3569, 31
        %s3572 = smul.addr %s3571, 7
        %s3573 = smul.addr %s3572, 8
        %s3574 = scalar_lea.vmem %s5, %s3573
      $region52: #{decoder_forward.1} parent=47 // pred_fallthru
        _
    $region48: #{decoder_forward.1} parent=5 // pred_fallthru
      _
  $region6: #{decoder_forward.1} parent=0 // loop_footer
    %s15 = sadd.s32 1, %s11
  $region7: #{decoder_forward.1} parent=0 // loop_footer_branch
    %10 = sbr.rel target = $region3
  $region8: #{decoder_forward.1} parent=0 // loop_exit
    _

</llo_original>
